<compile_context>
chip_gen: v7x
topology: tpu7x:2x2x1
jax: 0.10.0
libtpu: 0.0.40
codegen_flags: <defaults>
</compile_context>

<pallas_src>
import functools
import math

import jax
import jax.numpy as jnp
from jax.experimental import pallas as pl
from jax.experimental.pallas import tpu as pltpu

NUM_CLASSES = 100
LAYER_DIMS = [600, 1024, 512, 256, 128, NUM_CLASSES]  # 4 tanh layers + linear classifier


def _round_up(n, m):
    return ((n + m - 1) // m) * m


def _cdiv(a, b):
    return -(-a // b)


D_PAD = _round_up(LAYER_DIMS[0], 128)   # 600 -> 640
C_PAD = _round_up(NUM_CLASSES, 128)     # 100 -> 128


# ----------------------------------------------------------------------------- kernel
def _mlp_kernel(x_ref,
                w1_ref, b1_ref,
                w2_ref, b2_ref,
                w3_ref, b3_ref,
                w4_ref, b4_ref,
                w5_ref, b5_ref,
                out_ref, *, bf16_act):
    act_dtype = jnp.bfloat16 if bf16_act else jnp.float32

    def dense(h, w_ref, b_ref):
        # MXU: bf16 x bf16 -> f32 accumulate; bias add in f32 on the VPU.
        return jnp.dot(h.astype(jnp.bfloat16), w_ref[...],
                       preferred_element_type=jnp.float32) + b_ref[...]

    h = x_ref[...]
    # Hidden layers: tanh in bf16 on v6e/v7x (EUP/VPU are bf16-capable there), so the
    # next layer's bf16 operand cast is a no-op and intermediates are half-size.
    h = jnp.tanh(dense(h, w1_ref, b1_ref).astype(act_dtype))
    h = jnp.tanh(dense(h, w2_ref, b2_ref).astype(act_dtype))
    h = jnp.tanh(dense(h, w3_ref, b3_ref).astype(act_dtype))
    h = jnp.tanh(dense(h, w4_ref, b4_ref).astype(act_dtype))
    out_ref[...] = dense(h, w5_ref, b5_ref)   # logits, f32


# --------------------------------------------------------------------------- helpers
def _pad_axis(a, axis, target):
    pad = target - a.shape[axis]
    if pad == 0:
        return a
    widths = [(0, 0)] * a.ndim
    widths[axis] = (0, pad)
    return jnp.pad(a, widths)


def _use_bf16_activations():
    """Static chip-capability check: bf16 tanh/activations only where the VPU/EUP
    support bf16 (v6e/v7x); keep f32 activations on v5e and older."""
    try:
        kind = jax.devices()[0].device_kind.lower()
    except Exception:
        return True
    for tag in ("v5 lite", "v5e", "v5lite", "v4", "v3", "v2"):
        if tag in kind:
            return False
    return True


_SINGLE_BUFFER_OK = None


def _single_buffer_weights_supported():
    """One-time static capability probe for pl.Buffered(1) on constant-index blocks.

    Done on a trivial kernel so the real forward never hides its own lowering errors
    behind a try/except (review concern), and the decision is deterministic per process.
    """
    global _SINGLE_BUFFER_OK
    if _SINGLE_BUFFER_OK is not None:
        return _SINGLE_BUFFER_OK

    def probe_kernel(a_ref, w_ref, o_ref):
        o_ref[...] = a_ref[...] + w_ref[...]

    try:
        a = jnp.zeros((32, 128), jnp.float32)
        w = jnp.ones((16, 128), jnp.float32)
        f = pl.pallas_call(
            probe_kernel,
            out_shape=jax.ShapeDtypeStruct((32, 128), jnp.float32),
            grid_spec=pltpu.PrefetchScalarGridSpec(
                num_scalar_prefetch=0,
                grid=(2,),
                in_specs=[
                    pl.BlockSpec((16, 128), lambda i: (i, 0)),
                    pl.BlockSpec((16, 128), lambda i: (0, 0),
                                 pipeline_mode=pl.Buffered(1)),
                ],
                out_specs=pl.BlockSpec((16, 128), lambda i: (i, 0)),
            ),
        )
        jax.block_until_ready(f(a, w))
        _SINGLE_BUFFER_OK = True
    except Exception:
        _SINGLE_BUFFER_OK = False
    return _SINGLE_BUFFER_OK


def _batch_tiling(B, batch_tile):
    """Rows padded/tiled in multiples of 16 (bf16 sublane packing). Batches > 256 rows
    always get >= 2 grid steps (feeds both TensorCores on v7x); tile capped at
    batch_tile and shrunk to minimize row padding."""
    b16 = _round_up(max(B, 1), 16)
    if b16 <= 256:
        return b16, b16                                  # single grid step
    tile = min(batch_tile, _round_up(_cdiv(b16, 2), 16))  # guarantees >= 2 steps
    n = _cdiv(b16, tile)
    tile = min(tile, _round_up(_cdiv(b16, n), 16))         # shrink tile, avoid a wasted step
    return tile, n * tile


# ---------------------------------------------------------------- parameter handling
def init_params(key):
    """Deterministic init mirroring nn.Linear's U(-1/sqrt(fan_in), 1/sqrt(fan_in))."""
    params = []
    for fan_in, fan_out in zip(LAYER_DIMS[:-1], LAYER_DIMS[1:]):
        key, kw, kb = jax.random.split(key, 3)
        bound = 1.0 / math.sqrt(fan_in)
        w = jax.random.uniform(kw, (fan_in, fan_out), jnp.float32, -bound, bound)
        b = jax.random.uniform(kb, (1, fan_out), jnp.float32, -bound, bound)
        params.append((w, b))
    return params


def prepare_params(params):
    """Hoisted out of the hot path: pad + cast weights to bf16 once (zeros in the
    padded K rows / class columns contribute nothing). Biases stay f32."""
    (w1, b1), (w2, b2), (w3, b3), (w4, b4), (w5, b5) = params
    w1p = _pad_axis(jnp.asarray(w1, jnp.float32), 0, D_PAD).astype(jnp.bfloat16)
    w2p = jnp.asarray(w2, jnp.bfloat16)
    w3p = jnp.asarray(w3, jnp.bfloat16)
    w4p = jnp.asarray(w4, jnp.bfloat16)
    w5p = _pad_axis(jnp.asarray(w5, jnp.float32), 1, C_PAD).astype(jnp.bfloat16)
    b1f = jnp.asarray(b1, jnp.float32).reshape(1, -1)
    b2f = jnp.asarray(b2, jnp.float32).reshape(1, -1)
    b3f = jnp.asarray(b3, jnp.float32).reshape(1, -1)
    b4f = jnp.asarray(b4, jnp.float32).reshape(1, -1)
    b5f = _pad_axis(jnp.asarray(b5, jnp.float32).reshape(1, -1), 1, C_PAD)
    return (w1p, b1f, w2p, b2f, w3p, b3f, w4p, b4f, w5p, b5f)


# ---------------------------------------------------------------------------- forward
def purchase_classifier_forward(x, prepared, *, batch_tile=1024, bf16_act=None):
    """x: (B, 600) float32. prepared: output of prepare_params()."""
    x = jnp.asarray(x, jnp.float32)
    B, D_in = x.shape
    assert D_in == LAYER_DIMS[0]
    assert batch_tile % 16 == 0 and batch_tile >= 16
    if bf16_act is None:
        bf16_act = _use_bf16_activations()

    tile, B_pad = _batch_tiling(B, batch_tile)
    n_steps = B_pad // tile

    x_pad = _pad_axis(_pad_axis(x, 1, D_PAD), 0, B_pad).astype(jnp.bfloat16)

    single = _single_buffer_weights_supported()

    def const_spec(shape):
        # Constant index_map => same block every step; single-buffer when supported
        # so the resident weights do not double their VMEM footprint.
        if single:
            return pl.BlockSpec(shape, lambda i: (0, 0), pipeline_mode=pl.Buffered(1))
        return pl.BlockSpec(shape, lambda i: (0, 0))

    in_specs = [pl.BlockSpec((tile, D_PAD), lambda i: (i, 0))]
    in_specs += [const_spec(p.shape) for p in prepared]
    out_specs = pl.BlockSpec((tile, C_PAD), lambda i: (i, 0))

    out = pl.pallas_call(
        functools.partial(_mlp_kernel, bf16_act=bf16_act),
        out_shape=jax.ShapeDtypeStruct((B_pad, C_PAD), jnp.float32),
        grid_spec=pltpu.PrefetchScalarGridSpec(
            num_scalar_prefetch=0,
            grid=(n_steps,),
            in_specs=in_specs,
            out_specs=out_specs,
        ),
        compiler_params=pltpu.CompilerParams(
            dimension_semantics=("parallel",),
            vmem_limit_bytes=32 << 20,
        ),
    )(x_pad, *prepared)

    return out[:B, :NUM_CLASSES]


def reference_forward(x, params, *, bf16_act=True):
    """Pure-JAX reference mirroring the kernel math (bf16 operands, f32 accumulate,
    bf16 or f32 tanh). Note: intentionally deviates from bit-exact f32 PyTorch."""
    act_dtype = jnp.bfloat16 if bf16_act else jnp.float32
    h = jnp.asarray(x, jnp.float32)
    for (w, b) in params[:-1]:
        z = jnp.dot(h.astype(jnp.bfloat16), w.astype(jnp.bfloat16),
                    preferred_element_type=jnp.float32) + b
        h = jnp.tanh(z.astype(act_dtype))
    w, b = params[-1]
    return jnp.dot(h.astype(jnp.bfloat16), w.astype(jnp.bfloat16),
                   preferred_element_type=jnp.float32) + b


if __name__ == "__main__":
    key = jax.random.PRNGKey(0)
    key, kx = jax.random.split(key)
    params = init_params(key)
    prepared = prepare_params(params)          # one-time pad + bf16 cast (hoisted)
    bf16_act = _use_bf16_activations()

    # Small deterministic check (single grid step path).
    B = 8
    x = jax.random.normal(kx, (B, LAYER_DIMS[0]), jnp.float32)
    out = jax.block_until_ready(
        purchase_classifier_forward(x, prepared, bf16_act=bf16_act))
    ref = reference_forward(x, params, bf16_act=bf16_act)
    assert out.shape == (B, NUM_CLASSES)
    assert jnp.allclose(out, ref, atol=1e-2, rtol=1e-2), "mismatch vs reference (B=8)"

    # Second check exercising row padding + the >=2-step tiled grid (v7x megacore path).
    B2 = 300
    x2 = jax.random.normal(jax.random.PRNGKey(1), (B2, LAYER_DIMS[0]), jnp.float32)
    out2 = jax.block_until_ready(
        purchase_classifier_forward(x2, prepared, bf16_act=bf16_act))
    ref2 = reference_forward(x2, params, bf16_act=bf16_act)
    assert out2.shape == (B2, NUM_CLASSES)
    assert jnp.allclose(out2, ref2, atol=1e-2, rtol=1e-2), "mismatch vs reference (B=300)"

    print("KERNEL_OK")
</pallas_src>

<mosaic_0001>
module attributes {stable_mosaic.version = 11 : i64} {
  func.func @probe_kernel(%arg0: i32, %arg1: memref<16x128xf32, #tpu.memory_space<vmem>>, %arg2: memref<16x128xf32, #tpu.memory_space<vmem>>, %arg3: memref<16x128xf32, #tpu.memory_space<vmem>>) attributes {dimension_semantics = [#tpu.dimension_semantics<arbitrary>], iteration_bounds = array<i64: 2>, scalar_prefetch = 0 : i64, scratch_operands = 0 : i64, tpu.core_type = #tpu.core_type<tc>, window_params = [{transform_indices = @transform_0, window_bounds = array<i64: 16, 128>}, {pipeline_mode = #tpu.pipeline_mode<synchronous>, transform_indices = @transform_1, window_bounds = array<i64: 16, 128>}, {transform_indices = @transform_2, window_bounds = array<i64: 16, 128>}]} {
    %c0 = arith.constant 0 : index
    %c0_0 = arith.constant 0 : index
    %0 = vector.load %arg1[%c0, %c0_0] : memref<16x128xf32, #tpu.memory_space<vmem>>, vector<16x128xf32>
    %c0_1 = arith.constant 0 : index
    %c0_2 = arith.constant 0 : index
    %1 = vector.load %arg2[%c0_1, %c0_2] : memref<16x128xf32, #tpu.memory_space<vmem>>, vector<16x128xf32>
    %2 = arith.addf %0, %1 : vector<16x128xf32>
    %c0_3 = arith.constant 0 : index
    %c0_4 = arith.constant 0 : index
    %3 = vector.load %arg3[%c0_3, %c0_4] : memref<16x128xf32, #tpu.memory_space<vmem>>, vector<16x128xf32>
    tpu.vector_store %arg3[%c0_3, %c0_4], %2 {strides = array<i32>} : memref<16x128xf32, #tpu.memory_space<vmem>>, vector<16x128xf32>,
    return
  }
  func.func @transform_0(%arg0: i32) -> (i32, i32) {
    %c0_i32 = arith.constant 0 : i32
    %c0_i32_0 = arith.constant 0 : i32
    return %arg0, %c0_i32 : i32, i32
  }
  func.func @transform_1(%arg0: i32) -> (i32, i32) {
    %c0_i32 = arith.constant 0 : i32
    %c0_i32_0 = arith.constant 0 : i32
    %c0_i32_1 = arith.constant 0 : i32
    return %c0_i32, %c0_i32_0 : i32, i32
  }
  func.func @transform_2(%arg0: i32) -> (i32, i32) {
    %c0_i32 = arith.constant 0 : i32
    %c0_i32_0 = arith.constant 0 : i32
    return %arg0, %c0_i32 : i32, i32
  }
}

module attributes {stable_mosaic.version = 11 : i64} {
  func.func @_mlp_kernel(%arg0: i32, %arg1: memref<16x640xbf16, #tpu.memory_space<vmem>>, %arg2: memref<640x1024xbf16, #tpu.memory_space<vmem>>, %arg3: memref<1x1024xf32, #tpu.memory_space<vmem>>, %arg4: memref<1024x512xbf16, #tpu.memory_space<vmem>>, %arg5: memref<1x512xf32, #tpu.memory_space<vmem>>, %arg6: memref<512x256xbf16, #tpu.memory_space<vmem>>, %arg7: memref<1x256xf32, #tpu.memory_space<vmem>>, %arg8: memref<256x128xbf16, #tpu.memory_space<vmem>>, %arg9: memref<1x128xf32, #tpu.memory_space<vmem>>, %arg10: memref<128x128xbf16, #tpu.memory_space<vmem>>, %arg11: memref<1x128xf32, #tpu.memory_space<vmem>>, %arg12: memref<16x128xf32, #tpu.memory_space<vmem>>) attributes {dimension_semantics = [#tpu.dimension_semantics<parallel>], iteration_bounds = array<i64: 1>, scalar_prefetch = 0 : i64, scratch_operands = 0 : i64, tpu.core_type = #tpu.core_type<tc>, window_params = [{transform_indices = @transform_0, window_bounds = array<i64: 16, 640>}, {pipeline_mode = #tpu.pipeline_mode<synchronous>, transform_indices = @transform_1, window_bounds = array<i64: 640, 1024>}, {pipeline_mode = #tpu.pipeline_mode<synchronous>, transform_indices = @transform_2, window_bounds = array<i64: 1, 1024>}, {pipeline_mode = #tpu.pipeline_mode<synchronous>, transform_indices = @transform_3, window_bounds = array<i64: 1024, 512>}, {pipeline_mode = #tpu.pipeline_mode<synchronous>, transform_indices = @transform_4, window_bounds = array<i64: 1, 512>}, {pipeline_mode = #tpu.pipeline_mode<synchronous>, transform_indices = @transform_5, window_bounds = array<i64: 512, 256>}, {pipeline_mode = #tpu.pipeline_mode<synchronous>, transform_indices = @transform_6, window_bounds = array<i64: 1, 256>}, {pipeline_mode = #tpu.pipeline_mode<synchronous>, transform_indices = @transform_7, window_bounds = array<i64: 256, 128>}, {pipeline_mode = #tpu.pipeline_mode<synchronous>, transform_indices = @transform_8, window_bounds = array<i64: 1, 128>}, {pipeline_mode = #tpu.pipeline_mode<synchronous>, transform_indices = @transform_9, window_bounds = array<i64: 128, 128>}, {pipeline_mode = #tpu.pipeline_mode<synchronous>, transform_indices = @transform_10, window_bounds = array<i64: 1, 128>}, {transform_indices = @transform_11, window_bounds = array<i64: 16, 128>}]} {
    %c0 = arith.constant 0 : index
    %c0_0 = arith.constant 0 : index
    %0 = vector.load %arg1[%c0, %c0_0] : memref<16x640xbf16, #tpu.memory_space<vmem>>, vector<16x640xbf16>
    %c0_1 = arith.constant 0 : index
    %c0_2 = arith.constant 0 : index
    %1 = vector.load %arg2[%c0_1, %c0_2] : memref<640x1024xbf16, #tpu.memory_space<vmem>>, vector<640x1024xbf16>
    %cst = arith.constant dense<0.000000e+00> : vector<16x1024xf32>
    %2 = tpu.matmul %0, %1, %cst {dimension_numbers = #tpu.dot_dimension_numbers<[1], [0], [0], [1], [0, 0, 1, 1], [], []>} : vector<16x640xbf16>, vector<640x1024xbf16>, vector<16x1024xf32> -> vector<16x1024xf32>
    %c0_3 = arith.constant 0 : index
    %c0_4 = arith.constant 0 : index
    %3 = vector.load %arg3[%c0_3, %c0_4] : memref<1x1024xf32, #tpu.memory_space<vmem>>, vector<1x1024xf32>
    %4 = vector.broadcast %3 : vector<1x1024xf32> to vector<16x1024xf32>
    %5 = arith.addf %2, %4 : vector<16x1024xf32>
    %6 = arith.truncf %5 : vector<16x1024xf32> to vector<16x1024xbf16>
    %7 = math.tanh %6 : vector<16x1024xbf16>
    %c0_5 = arith.constant 0 : index
    %c0_6 = arith.constant 0 : index
    %8 = vector.load %arg4[%c0_5, %c0_6] : memref<1024x512xbf16, #tpu.memory_space<vmem>>, vector<1024x512xbf16>
    %cst_7 = arith.constant dense<0.000000e+00> : vector<16x512xf32>
    %9 = tpu.matmul %7, %8, %cst_7 {dimension_numbers = #tpu.dot_dimension_numbers<[1], [0], [0], [1], [0, 0, 1, 1], [], []>} : vector<16x1024xbf16>, vector<1024x512xbf16>, vector<16x512xf32> -> vector<16x512xf32>
    %c0_8 = arith.constant 0 : index
    %c0_9 = arith.constant 0 : index
    %10 = vector.load %arg5[%c0_8, %c0_9] : memref<1x512xf32, #tpu.memory_space<vmem>>, vector<1x512xf32>
    %11 = vector.broadcast %10 : vector<1x512xf32> to vector<16x512xf32>
    %12 = arith.addf %9, %11 : vector<16x512xf32>
    %13 = arith.truncf %12 : vector<16x512xf32> to vector<16x512xbf16>
    %14 = math.tanh %13 : vector<16x512xbf16>
    %c0_10 = arith.constant 0 : index
    %c0_11 = arith.constant 0 : index
    %15 = vector.load %arg6[%c0_10, %c0_11] : memref<512x256xbf16, #tpu.memory_space<vmem>>, vector<512x256xbf16>
    %cst_12 = arith.constant dense<0.000000e+00> : vector<16x256xf32>
    %16 = tpu.matmul %14, %15, %cst_12 {dimension_numbers = #tpu.dot_dimension_numbers<[1], [0], [0], [1], [0, 0, 1, 1], [], []>} : vector<16x512xbf16>, vector<512x256xbf16>, vector<16x256xf32> -> vector<16x256xf32>
    %c0_13 = arith.constant 0 : index
    %c0_14 = arith.constant 0 : index
    %17 = vector.load %arg7[%c0_13, %c0_14] : memref<1x256xf32, #tpu.memory_space<vmem>>, vector<1x256xf32>
    %18 = vector.broadcast %17 : vector<1x256xf32> to vector<16x256xf32>
    %19 = arith.addf %16, %18 : vector<16x256xf32>
    %20 = arith.truncf %19 : vector<16x256xf32> to vector<16x256xbf16>
    %21 = math.tanh %20 : vector<16x256xbf16>
    %c0_15 = arith.constant 0 : index
    %c0_16 = arith.constant 0 : index
    %22 = vector.load %arg8[%c0_15, %c0_16] : memref<256x128xbf16, #tpu.memory_space<vmem>>, vector<256x128xbf16>
    %cst_17 = arith.constant dense<0.000000e+00> : vector<16x128xf32>
    %23 = tpu.matmul %21, %22, %cst_17 {dimension_numbers = #tpu.dot_dimension_numbers<[1], [0], [0], [1], [0, 0, 1, 1], [], []>} : vector<16x256xbf16>, vector<256x128xbf16>, vector<16x128xf32> -> vector<16x128xf32>
    %c0_18 = arith.constant 0 : index
    %c0_19 = arith.constant 0 : index
    %24 = vector.load %arg9[%c0_18, %c0_19] : memref<1x128xf32, #tpu.memory_space<vmem>>, vector<1x128xf32>
    %25 = vector.broadcast %24 : vector<1x128xf32> to vector<16x128xf32>
    %26 = arith.addf %23, %25 : vector<16x128xf32>
    %27 = arith.truncf %26 : vector<16x128xf32> to vector<16x128xbf16>
    %28 = math.tanh %27 : vector<16x128xbf16>
    %c0_20 = arith.constant 0 : index
    %c0_21 = arith.constant 0 : index
    %29 = vector.load %arg10[%c0_20, %c0_21] : memref<128x128xbf16, #tpu.memory_space<vmem>>, vector<128x128xbf16>
    %cst_22 = arith.constant dense<0.000000e+00> : vector<16x128xf32>
    %30 = tpu.matmul %28, %29, %cst_22 {dimension_numbers = #tpu.dot_dimension_numbers<[1], [0], [0], [1], [0, 0, 1, 1], [], []>} : vector<16x128xbf16>, vector<128x128xbf16>, vector<16x128xf32> -> vector<16x128xf32>
    %c0_23 = arith.constant 0 : index
    %c0_24 = arith.constant 0 : index
    %31 = vector.load %arg11[%c0_23, %c0_24] : memref<1x128xf32, #tpu.memory_space<vmem>>, vector<1x128xf32>
    %32 = vector.broadcast %31 : vector<1x128xf32> to vector<16x128xf32>
    %33 = arith.addf %30, %32 : vector<16x128xf32>
    %c0_25 = arith.constant 0 : index
    %c0_26 = arith.constant 0 : index
    %34 = vector.load %arg12[%c0_25, %c0_26] : memref<16x128xf32, #tpu.memory_space<vmem>>, vector<16x128xf32>
    tpu.vector_store %arg12[%c0_25, %c0_26], %33 {strides = array<i32>} : memref<16x128xf32, #tpu.memory_space<vmem>>, vector<16x128xf32>,
    return
  }
  func.func @transform_0(%arg0: i32) -> (i32, i32) {
    %c0_i32 = arith.constant 0 : i32
    %c0_i32_0 = arith.constant 0 : i32
    return %arg0, %c0_i32 : i32, i32
  }
  func.func @transform_1(%arg0: i32) -> (i32, i32) {
    %c0_i32 = arith.constant 0 : i32
    %c0_i32_0 = arith.constant 0 : i32
    %c0_i32_1 = arith.constant 0 : i32
    return %c0_i32, %c0_i32_0 : i32, i32
  }
  func.func @transform_2(%arg0: i32) -> (i32, i32) {
    %c0_i32 = arith.constant 0 : i32
    %c0_i32_0 = arith.constant 0 : i32
    %c0_i32_1 = arith.constant 0 : i32
    return %c0_i32, %c0_i32_0 : i32, i32
  }
  func.func @transform_3(%arg0: i32) -> (i32, i32) {
    %c0_i32 = arith.constant 0 : i32
    %c0_i32_0 = arith.constant 0 : i32
    %c0_i32_1 = arith.constant 0 : i32
    return %c0_i32, %c0_i32_0 : i32, i32
  }
  func.func @transform_4(%arg0: i32) -> (i32, i32) {
    %c0_i32 = arith.constant 0 : i32
    %c0_i32_0 = arith.constant 0 : i32
    %c0_i32_1 = arith.constant 0 : i32
    return %c0_i32, %c0_i32_0 : i32, i32
  }
  func.func @transform_5(%arg0: i32) -> (i32, i32) {
    %c0_i32 = arith.constant 0 : i32
    %c0_i32_0 = arith.constant 0 : i32
    %c0_i32_1 = arith.constant 0 : i32
    return %c0_i32, %c0_i32_0 : i32, i32
  }
  func.func @transform_6(%arg0: i32) -> (i32, i32) {
    %c0_i32 = arith.constant 0 : i32
    %c0_i32_0 = arith.constant 0 : i32
    %c0_i32_1 = arith.constant 0 : i32
    return %c0_i32, %c0_i32_0 : i32, i32
  }
  func.func @transform_7(%arg0: i32) -> (i32, i32) {
    %c0_i32 = arith.constant 0 : i32
    %c0_i32_0 = arith.constant 0 : i32
    %c0_i32_1 = arith.constant 0 : i32
    return %c0_i32, %c0_i32_0 : i32, i32
  }
  func.func @transform_8(%arg0: i32) -> (i32, i32) {
    %c0_i32 = arith.constant 0 : i32
    %c0_i32_0 = arith.constant 0 : i32
    %c0_i32_1 = arith.constant 0 : i32
    return %c0_i32, %c0_i32_0 : i32, i32
  }
  func.func @transform_9(%arg0: i32) -> (i32, i32) {
    %c0_i32 = arith.constant 0 : i32
    %c0_i32_0 = arith.constant 0 : i32
    %c0_i32_1 = arith.constant 0 : i32
    return %c0_i32, %c0_i32_0 : i32, i32
  }
  func.func @transform_10(%arg0: i32) -> (i32, i32) {
    %c0_i32 = arith.constant 0 : i32
    %c0_i32_0 = arith.constant 0 : i32
    %c0_i32_1 = arith.constant 0 : i32
    return %c0_i32, %c0_i32_0 : i32, i32
  }
  func.func @transform_11(%arg0: i32) -> (i32, i32) {
    %c0_i32 = arith.constant 0 : i32
    %c0_i32_0 = arith.constant 0 : i32
    return %arg0, %c0_i32 : i32, i32
  }
}

</mosaic_0001>

<llo_original>
// kernel: tpu_custom_call.1
$region0: #{tpu_custom_call.1}
  #allocation0 [shape = 'u32[]', space=smem, size = 0x4, offset = 0x4, fixed_abs, tag = 'smem constant byte address 0x4 - core index']
  #allocation1 [shape = 'u32[144,128]{1,0:T(1,128)}', space=vmem, size = 0x12000, scoped, tag = 'internal scratch']
  %s0 = inlined_call_operand.hbm [shape: f32[32,128], index: 0, kind: input, shape index: {}]
  %s1 = inlined_call_operand.hbm [shape: f32[16,128], index: 1, kind: input, shape index: {}]
  %s2 = inlined_call_operand.hbm [shape: f32[32,128], index: 2, kind: output, shape index: {}]
  %s3 = sld [smem:[#allocation0]]
  $region49: #{tpu_custom_call.1} parent=0
    _
  %s5 = ssub.s32 1, %s3
  %s6 = scalar_select 0, %s5, %s3
  $region1: #{tpu_custom_call.1} parent=0
    #allocation2 [shape = 'u8[16384]{0}', space=vmem, size = 0x4000, scoped, tag = 'input window, operand 0']
    #allocation3 [shape = 's32[2]{0}', space=sflag, size = 0x8, scoped, tag = 'scoped memory for tpu_custom_call.1']
    #allocation4 [shape = 's32[2]{0}', space=sflag, size = 0x8, scoped, tag = 'scoped memory for tpu_custom_call.1']
    #allocation5 [shape = 'u8[8192]{0}', space=vmem, size = 0x2000, scoped, tag = 'input window, operand 1, single buffered']
    #allocation6 [shape = 's32[1]{0}', space=sflag, size = 0x4, scoped, tag = 'scoped memory for tpu_custom_call.1']
    #allocation7 [shape = 'u8[16384]{0}', space=vmem, size = 0x4000, scoped, tag = 'output window, operand 0']
    %7 = vsyncpa [#allocation3], 0
    %s8 = scalar_lea.sflag [#allocation3], 1
    %9 = vsyncpa %s8, 0
    %10 = vsyncpa [#allocation6], 0
    %11 = vsyncpa [#allocation4], 0
    %s12 = scalar_lea.sflag [#allocation4], 1
    %13 = vsyncpa %s12, 0
    loop: start=0, step=1, limit=4
    $region2: #{tpu_custom_call.1} parent=1 // loop_pre_header
      _
    $region3: #{tpu_custom_call.1} parent=1 // loop_header
      %s15 = sphi 0, %s19
      %p16 = scmp.ge.s32.totalorder %s15, 4
      %s25 = sphi 0, %s27
      %s28 = sphi 0, %s25
      %s29 = sphi 0, %s28
      %s45 = sphi 0, %s29
      %s49 = sphi 0, %s49
      %s51 = sphi 0, %s49
      %s52 = sphi 0, %s51
      %s66 = sphi 0, %s52
      %s72 = sphi 0, %s74
      %s75 = sphi 0, %s72
      %s76 = sphi 0, %s75
      %s92 = sphi 0, %s76
    $region4: #{tpu_custom_call.1} parent=1 // loop_header_branch
      %18 = sbr.rel (%p16) target = $region8
    $region5: #{tpu_custom_call.1} parent=1 // loop_body
      %s20 = ssub.s32 %s15, 1
      %s21 = ssub.s32 %s15, 2
      %s22 = sadd.s32 %s15, 1
      %s23 = ssub.s32 %s15, %s22
      %p24 = scmp.eq.s32.totalorder %s23, 0
      %s26 = sadd.s32 %s25, 1
      %s27 = scalar_select %p24, %s25, %s26
      %p30 = pneg %p24
      %p31 = scmp.eq.s32.totalorder %s15, 1
      %p32 = por %p30, %p31
      %p33 = scmp.ne.s32.totalorder %s25, %s28
      %p34 = scmp.eq.s32.totalorder %s15, 0
      %p35 = por %p33, %p34
      %p36 = scmp.ne.s32.totalorder %s25, %s28
      %p37 = scmp.eq.s32.totalorder %s20, 1
      %p38 = por %p36, %p37
      %p39 = scmp.ne.s32.totalorder %s28, %s29
      %p40 = scmp.eq.s32.totalorder %s20, 0
      %p41 = por %p39, %p40
      %p42 = scmp.ne.s32.totalorder %s28, %s29
      %p43 = scmp.eq.s32.totalorder %s21, 1
      %p44 = por %p42, %p43
      %p46 = scmp.ne.s32.totalorder %s29, %s45
      %p47 = scmp.eq.s32.totalorder %s21, 0
      %p48 = por %p46, %p47
      %s50 = sadd.s32 %s49, 1
      %p53 = scmp.eq.s32.totalorder %s15, 1
      %p54 = scmp.ne.s32.totalorder %s49, %s51
      %p55 = scmp.eq.s32.totalorder %s15, 0
      %p56 = por %p54, %p55
      %p57 = scmp.ne.s32.totalorder %s49, %s51
      %p58 = scmp.eq.s32.totalorder %s20, 1
      %p59 = por %p57, %p58
      %p60 = scmp.ne.s32.totalorder %s51, %s52
      %p61 = scmp.eq.s32.totalorder %s20, 0
      %p62 = por %p60, %p61
      %p63 = scmp.ne.s32.totalorder %s51, %s52
      %p64 = scmp.eq.s32.totalorder %s21, 1
      %p65 = por %p63, %p64
      %p67 = scmp.ne.s32.totalorder %s52, %s66
      %p68 = scmp.eq.s32.totalorder %s21, 0
      %p69 = por %p67, %p68
      %s70 = ssub.s32 %s15, %s22
      %p71 = scmp.eq.s32.totalorder %s70, 0
      %s73 = sadd.s32 %s72, 1
      %s74 = scalar_select %p71, %s72, %s73
      %p77 = pneg %p71
      %p78 = scmp.eq.s32.totalorder %s15, 1
      %p79 = por %p77, %p78
      %p80 = scmp.ne.s32.totalorder %s72, %s75
      %p81 = scmp.eq.s32.totalorder %s15, 0
      %p82 = por %p80, %p81
      %p83 = scmp.ne.s32.totalorder %s72, %s75
      %p84 = scmp.eq.s32.totalorder %s20, 1
      %p85 = por %p83, %p84
      %p86 = scmp.ne.s32.totalorder %s75, %s76
      %p87 = scmp.eq.s32.totalorder %s20, 0
      %p88 = por %p86, %p87
      %p89 = scmp.ne.s32.totalorder %s75, %s76
      %p90 = scmp.eq.s32.totalorder %s21, 1
      %p91 = por %p89, %p90
      %p93 = scmp.ne.s32.totalorder %s76, %s92
      %p94 = scmp.eq.s32.totalorder %s21, 0
      %p95 = por %p93, %p94
      %p96 = scmp.le.s32.totalorder 1, %s15
      %p97 = scmp.lt.s32.totalorder %s15, 3
      %p98 = pnand %p96, %p97
      %p99 = pneg %p98
      // Predicated region
      $region9: #{tpu_custom_call.1} parent=5 // pred_check
        _
      $region10: #{tpu_custom_call.1} parent=5 // pred_check_branch
        %101 = sbr.rel (%p98) target = $region12
      $region11: #{tpu_custom_call.1} parent=5 // pred_region
        %s102 = ssub.s32 %s15, 1
        // Predicated region
        $region13: #{tpu_custom_call.1} parent=11 // pred_check
          %p103 = pneg %p62
        $region14: #{tpu_custom_call.1} parent=11 // pred_check_branch
          %105 = sbr.rel (%p103) target = $region16
        $region15: #{tpu_custom_call.1} parent=11 // pred_region
          %s107 = ssub.s32 256, 256
          %108 = vsyncadd [#allocation6], %s107
          %s109 = sshll.u32 [#allocation5], 4
          %s110 = int_to_ptr.vmem [resolvable:$true] %s109
          %115 = dma.hbm_to_vmem [thread:$0]  %s1, 256, %s110, [#allocation6], 128, 128, 8
        $region16: #{tpu_custom_call.1} parent=11 // pred_fallthru
          _
      $region12: #{tpu_custom_call.1} parent=5 // pred_fallthru
        _
      %p116 = scmp.lt.s32.totalorder %s15, 2
      // Predicated region
      $region17: #{tpu_custom_call.1} parent=5 // pred_check
        %p117 = pneg %p116
      $region18: #{tpu_custom_call.1} parent=5 // pred_check_branch
        %119 = sbr.rel (%p117) target = $region20
      $region19: #{tpu_custom_call.1} parent=5 // pred_region
        // Predicated region
        $region21: #{tpu_custom_call.1} parent=19 // pred_check
          %p120 = pneg %p35
        $region22: #{tpu_custom_call.1} parent=19 // pred_check_branch
          %122 = sbr.rel (%p120) target = $region24
        $region23: #{tpu_custom_call.1} parent=19 // pred_region
          %s123 = sand.u32 %s25, 1
          %s124 = scalar_lea.sflag [#allocation3], %s123
          %s125 = sand.u32 %s25, 1
          %s126 = smul.addr %s125, 16
          %s127 = scalar_lea.vmem [#allocation2], %s126
          %s128 = smul.u32 2, %s15
          %s130 = ssub.s32 256, 256
          %131 = vsyncadd %s124, %s130
          %s132 = smul.addr %s128, 128
          %s133 = scalar_lea.hbm %s0, %s132
          %s134 = sshll.u32 %s127, 4
          %s135 = int_to_ptr.vmem [resolvable:$true] %s134
          %140 = dma.hbm_to_vmem [thread:$0]  %s133, 256, %s135, %s124, 128, 128, 8
        $region24: #{tpu_custom_call.1} parent=19 // pred_fallthru
          _
      $region20: #{tpu_custom_call.1} parent=5 // pred_fallthru
        _
      %p141 = scmp.le.s32.totalorder 1, %s15
      %p142 = scmp.lt.s32.totalorder %s15, 3
      %p143 = pnand %p141, %p142
      %p144 = pneg %p143
      // Predicated region
      $region25: #{tpu_custom_call.1} parent=5 // pred_check
        _
      $region26: #{tpu_custom_call.1} parent=5 // pred_check_branch
        %146 = sbr.rel (%p143) target = $region28
      $region27: #{tpu_custom_call.1} parent=5 // pred_region
        %s147 = ssub.s32 %s15, 1
        %s148 = sand.u32 %s28, 1
        %s149 = scalar_lea.sflag [#allocation3], %s148
        %s150 = sand.u32 %s28, 1
        %s151 = smul.addr %s150, 16
        %s152 = scalar_lea.vmem [#allocation2], %s151
        // Predicated region
        $region29: #{tpu_custom_call.1} parent=27 // pred_check
          %p153 = pneg %p41
        $region30: #{tpu_custom_call.1} parent=27 // pred_check_branch
          %155 = sbr.rel (%p153) target = $region32
        $region31: #{tpu_custom_call.1} parent=27 // pred_region
          %156 = dma.done %s149, 256
        $region32: #{tpu_custom_call.1} parent=27 // pred_fallthru
          _
        // Predicated region
        $region33: #{tpu_custom_call.1} parent=27 // pred_check
          %p157 = pneg %p62
        $region34: #{tpu_custom_call.1} parent=27 // pred_check_branch
          %159 = sbr.rel (%p157) target = $region36
        $region35: #{tpu_custom_call.1} parent=27 // pred_region
          %160 = dma.done [#allocation6], 256
        $region36: #{tpu_custom_call.1} parent=27 // pred_fallthru
          _
        %s161 = sand.u32 %s28, 1
        %s162 = scalar_lea.sflag [#allocation3], %s161
        %s163 = sand.u32 %s28, 1
        %s164 = smul.addr %s163, 16
        %s165 = scalar_lea.vmem [#allocation2], %s164
        %p166 = pneg %p41
        %p167 = pneg %p38
        %p168 = pneg %p62
        %p169 = pneg %p59
        %p170 = pneg %p88
        %p171 = pneg %p85
        %s172 = sand.u32 %s75, 1
        %s173 = scalar_lea.sflag [#allocation4], %s172
        %s174 = sand.u32 %s75, 1
        %s175 = smul.addr %s174, 16
        %s176 = scalar_lea.vmem [#allocation7], %s175
        %s177 = smul.u32 2, %s20
        %s178 = smul.u32 2, %s20
        %v179 = vld [vmem:[%s152] sm:$0xff]
        %v180 = vld [vmem:[%s152 + $0x8] sm:$0xff]
        %v181 = vld [vmem:[#allocation5] sm:$0xff]
        %v182 = vld [vmem:[#allocation5 + $0x8] sm:$0xff]
        %v183 = vadd.f32 %v179, %v181
        %v184 = vadd.f32 %v180, %v182
        %185 = vst [vmem:[%s176] sm:$0xff] %v183
        %186 = vst [vmem:[%s176 + $0x8] sm:$0xff] %v184
        %s187 = sand.u32 %s75, 1
        %s188 = scalar_lea.sflag [#allocation4], %s187
        %s189 = sand.u32 %s75, 1
        %s190 = smul.addr %s189, 16
        %s191 = scalar_lea.vmem [#allocation7], %s190
        // Predicated region
        $region37: #{tpu_custom_call.1} parent=27 // pred_check
          %p192 = pneg %p85
        $region38: #{tpu_custom_call.1} parent=27 // pred_check_branch
          %194 = sbr.rel (%p192) target = $region40
        $region39: #{tpu_custom_call.1} parent=27 // pred_region
          %s195 = smul.u32 2, %s20
          %s197 = ssub.s32 256, 256
          %198 = vsyncadd %s188, %s197
          %s199 = smul.addr %s195, 128
          %s200 = scalar_lea.hbm %s2, %s199
          %s201 = sshll.u32 %s191, 4
          %s202 = int_to_ptr.vmem [resolvable:$true] %s201
          %207 = dma.vmem_to_hbm [thread:$0]  %s202, 256, %s200, %s188, 128, 128, 8
        $region40: #{tpu_custom_call.1} parent=27 // pred_fallthru
          _
      $region28: #{tpu_custom_call.1} parent=5 // pred_fallthru
        _
      %p208 = scmp.le.s32.totalorder 2, %s15
      // Predicated region
      $region41: #{tpu_custom_call.1} parent=5 // pred_check
        %p209 = pneg %p208
      $region42: #{tpu_custom_call.1} parent=5 // pred_check_branch
        %211 = sbr.rel (%p209) target = $region44
      $region43: #{tpu_custom_call.1} parent=5 // pred_region
        %s212 = ssub.s32 %s15, 2
        // Predicated region
        $region45: #{tpu_custom_call.1} parent=43 // pred_check
          %p213 = pneg %p91
        $region46: #{tpu_custom_call.1} parent=43 // pred_check_branch
          %215 = sbr.rel (%p213) target = $region48
        $region47: #{tpu_custom_call.1} parent=43 // pred_region
          %s216 = sand.u32 %s76, 1
          %s217 = scalar_lea.sflag [#allocation4], %s216
          %s218 = sand.u32 %s76, 1
          %s219 = smul.addr %s218, 16
          %s220 = scalar_lea.vmem [#allocation7], %s219
          %221 = dma.done %s217, 256
        $region48: #{tpu_custom_call.1} parent=43 // pred_fallthru
          _
      $region44: #{tpu_custom_call.1} parent=5 // pred_fallthru
        _
    $region6: #{tpu_custom_call.1} parent=1 // loop_footer
      %s19 = sadd.s32 1, %s15
    $region7: #{tpu_custom_call.1} parent=1 // loop_footer_branch
      %14 = sbr.rel target = $region3
    $region8: #{tpu_custom_call.1} parent=1 // loop_exit
      _
    %222 = vsyncpa [#allocation3], 1
    %s223 = scalar_lea.sflag [#allocation3], 1
    %224 = vsyncpa %s223, 1
    %225 = vsyncpa [#allocation6], 1
    %226 = vsyncpa [#allocation4], 1
    %s227 = scalar_lea.sflag [#allocation4], 1
    %228 = vsyncpa %s227, 1

// kernel: tpu_custom_call.1
$region0: #{tpu_custom_call.1}
  #allocation0 [shape = 'u32[]', space=smem, size = 0x4, offset = 0x4, fixed_abs, tag = 'smem constant byte address 0x4 - core index']
  #allocation1 [shape = 'u32[144,128]{1,0:T(1,128)}', space=vmem, size = 0x12000, scoped, tag = 'internal scratch']
  %s0 = inlined_call_operand.hbm [shape: bf16[16,640], index: 0, kind: input, shape index: {}]
  %s1 = inlined_call_operand.hbm [shape: bf16[640,1024], index: 1, kind: input, shape index: {}]
  %s2 = inlined_call_operand.hbm [shape: f32[1,1024], index: 2, kind: input, shape index: {}]
  %s3 = inlined_call_operand.hbm [shape: bf16[1024,512], index: 3, kind: input, shape index: {}]
  %s4 = inlined_call_operand.hbm [shape: f32[1,512], index: 4, kind: input, shape index: {}]
  %s5 = inlined_call_operand.hbm [shape: bf16[512,256], index: 5, kind: input, shape index: {}]
  %s6 = inlined_call_operand.hbm [shape: f32[1,256], index: 6, kind: input, shape index: {}]
  %s7 = inlined_call_operand.hbm [shape: bf16[256,128], index: 7, kind: input, shape index: {}]
  %s8 = inlined_call_operand.hbm [shape: f32[1,128], index: 8, kind: input, shape index: {}]
  %s9 = inlined_call_operand.hbm [shape: bf16[128,128], index: 9, kind: input, shape index: {}]
  %s10 = inlined_call_operand.hbm [shape: f32[1,128], index: 10, kind: input, shape index: {}]
  %s11 = inlined_call_operand.hbm [shape: f32[16,128], index: 11, kind: output, shape index: {}]
  %s12 = sld [smem:[#allocation0]]
  $region98: #{tpu_custom_call.1} parent=0
    _
  %s14 = ssub.s32 1, %s12
  %s15 = scalar_select 0, %s14, %s12
  $region1: #{tpu_custom_call.1} parent=0
    #allocation2 [shape = 'u8[20480]{0}', space=vmem, size = 0x5000, scoped, tag = 'input window, operand 0, single buffered']
    #allocation3 [shape = 's32[1]{0}', space=sflag, size = 0x4, scoped, tag = 'scoped memory for tpu_custom_call.1']
    #allocation4 [shape = 's32[1]{0}', space=sflag, size = 0x4, scoped, tag = 'scoped memory for tpu_custom_call.1']
    #allocation5 [shape = 'u8[1310720]{0}', space=vmem, size = 0x140000, scoped, tag = 'input window, operand 1, single buffered']
    #allocation6 [shape = 's32[1]{0}', space=sflag, size = 0x4, scoped, tag = 'scoped memory for tpu_custom_call.1']
    #allocation7 [shape = 'u8[4096]{0}', space=vmem, size = 0x1000, scoped, tag = 'input window, operand 2, single buffered']
    #allocation8 [shape = 'u8[1048576]{0}', space=vmem, size = 0x100000, scoped, tag = 'input window, operand 3, single buffered']
    #allocation9 [shape = 's32[1]{0}', space=sflag, size = 0x4, scoped, tag = 'scoped memory for tpu_custom_call.1']
    #allocation10 [shape = 'u8[2048]{0}', space=vmem, size = 0x800, scoped, tag = 'input window, operand 4, single buffered']
    #allocation11 [shape = 'u8[262144]{0}', space=vmem, size = 0x40000, scoped, tag = 'input window, operand 5, single buffered']
    #allocation12 [shape = 's32[1]{0}', space=sflag, size = 0x4, scoped, tag = 'scoped memory for tpu_custom_call.1']
    #allocation13 [shape = 'u8[1024]{0}', space=vmem, size = 0x400, scoped, tag = 'input window, operand 6, single buffered']
    #allocation14 [shape = 'u8[65536]{0}', space=vmem, size = 0x10000, scoped, tag = 'input window, operand 7, single buffered']
    #allocation15 [shape = 's32[1]{0}', space=sflag, size = 0x4, scoped, tag = 'scoped memory for tpu_custom_call.1']
    #allocation16 [shape = 'u8[512]{0}', space=vmem, size = 0x400, scoped, tag = 'input window, operand 8, single buffered']
    #allocation17 [shape = 'u8[32768]{0}', space=vmem, size = 0x8000, scoped, tag = 'input window, operand 9, single buffered']
    #allocation18 [shape = 's32[1]{0}', space=sflag, size = 0x4, scoped, tag = 'scoped memory for tpu_custom_call.1']
    #allocation19 [shape = 'u8[512]{0}', space=vmem, size = 0x400, scoped, tag = 'input window, operand 10, single buffered']
    #allocation20 [shape = 'u8[8192]{0}', space=vmem, size = 0x2000, scoped, tag = 'output window, operand 0, single buffered']
    %16 = vsyncpa [#allocation3], 0
    %17 = vsyncpa [#allocation6], 0
    %18 = vsyncpa [#allocation9], 0
    %19 = vsyncpa [#allocation12], 0
    %20 = vsyncpa [#allocation15], 0
    %21 = vsyncpa [#allocation18], 0
    %22 = vsyncpa [#allocation4], 0
    // Predicated region
    $region2: #{tpu_custom_call.1} parent=1 // pred_check
      _
    $region3: #{tpu_custom_call.1} parent=1 // pred_check_branch
      %24 = sbr.rel (0) target = $region5
    $region4: #{tpu_custom_call.1} parent=1 // pred_region
      %s26 = ssub.s32 640, 640
      %27 = vsyncadd [#allocation3], %s26
      %s28 = sshll.u32 [#allocation2], 4
      %s29 = int_to_ptr.vmem [resolvable:$true] %s28
      %34 = dma.hbm_to_vmem [thread:$0]  %s0, 640, %s29, [#allocation3], 320, 320, 20
    $region5: #{tpu_custom_call.1} parent=1 // pred_fallthru
      _
    // Predicated region
    $region6: #{tpu_custom_call.1} parent=1 // pred_check
      _
    $region7: #{tpu_custom_call.1} parent=1 // pred_check_branch
      %36 = sbr.rel (0) target = $region9
    $region8: #{tpu_custom_call.1} parent=1 // pred_region
      %s38 = ssub.s32 40960, 40960
      %39 = vsyncadd [#allocation6], %s38
      %s40 = sshll.u32 [#allocation5], 4
      %s41 = int_to_ptr.vmem [resolvable:$true] %s40
      %46 = dma.hbm_to_vmem [thread:$0]  %s1, 40960, %s41, [#allocation6], 512, 512, 32
    $region9: #{tpu_custom_call.1} parent=1 // pred_fallthru
      _
    // Predicated region
    $region10: #{tpu_custom_call.1} parent=1 // pred_check
      _
    $region11: #{tpu_custom_call.1} parent=1 // pred_check_branch
      %48 = sbr.rel (0) target = $region13
    $region12: #{tpu_custom_call.1} parent=1 // pred_region
      %s50 = ssub.s32 128, 128
      %51 = vsyncadd [#allocation6], %s50
      %s53 = sshll.u32 [#allocation7], 4
      %s54 = int_to_ptr.vmem [resolvable:$true] %s53
      %56 = dma.hbm_to_vmem [thread:$0]  %s2, 128, %s54, [#allocation6]
    $region13: #{tpu_custom_call.1} parent=1 // pred_fallthru
      _
    // Predicated region
    $region14: #{tpu_custom_call.1} parent=1 // pred_check
      _
    $region15: #{tpu_custom_call.1} parent=1 // pred_check_branch
      %58 = sbr.rel (0) target = $region17
    $region16: #{tpu_custom_call.1} parent=1 // pred_region
      %s60 = ssub.s32 32768, 32768
      %61 = vsyncadd [#allocation9], %s60
      %s62 = sshll.u32 [#allocation8], 4
      %s63 = int_to_ptr.vmem [resolvable:$true] %s62
      %68 = dma.hbm_to_vmem [thread:$0]  %s3, 32768, %s63, [#allocation9], 256, 256, 16
    $region17: #{tpu_custom_call.1} parent=1 // pred_fallthru
      _
    // Predicated region
    $region18: #{tpu_custom_call.1} parent=1 // pred_check
      _
    $region19: #{tpu_custom_call.1} parent=1 // pred_check_branch
      %70 = sbr.rel (0) target = $region21
    $region20: #{tpu_custom_call.1} parent=1 // pred_region
      %s72 = ssub.s32 64, 64
      %73 = vsyncadd [#allocation9], %s72
      %s75 = sshll.u32 [#allocation10], 4
      %s76 = int_to_ptr.vmem [resolvable:$true] %s75
      %78 = dma.hbm_to_vmem [thread:$0]  %s4, 64, %s76, [#allocation9]
    $region21: #{tpu_custom_call.1} parent=1 // pred_fallthru
      _
    // Predicated region
    $region22: #{tpu_custom_call.1} parent=1 // pred_check
      _
    $region23: #{tpu_custom_call.1} parent=1 // pred_check_branch
      %80 = sbr.rel (0) target = $region25
    $region24: #{tpu_custom_call.1} parent=1 // pred_region
      %s82 = ssub.s32 8192, 8192
      %83 = vsyncadd [#allocation12], %s82
      %s84 = sshll.u32 [#allocation11], 4
      %s85 = int_to_ptr.vmem [resolvable:$true] %s84
      %90 = dma.hbm_to_vmem [thread:$0]  %s5, 8192, %s85, [#allocation12], 128, 128, 8
    $region25: #{tpu_custom_call.1} parent=1 // pred_fallthru
      _
    // Predicated region
    $region26: #{tpu_custom_call.1} parent=1 // pred_check
      _
    $region27: #{tpu_custom_call.1} parent=1 // pred_check_branch
      %92 = sbr.rel (0) target = $region29
    $region28: #{tpu_custom_call.1} parent=1 // pred_region
      %s94 = ssub.s32 32, 32
      %95 = vsyncadd [#allocation12], %s94
      %s97 = sshll.u32 [#allocation13], 4
      %s98 = int_to_ptr.vmem [resolvable:$true] %s97
      %100 = dma.hbm_to_vmem [thread:$0]  %s6, 32, %s98, [#allocation12]
    $region29: #{tpu_custom_call.1} parent=1 // pred_fallthru
      _
    // Predicated region
    $region30: #{tpu_custom_call.1} parent=1 // pred_check
      _
    $region31: #{tpu_custom_call.1} parent=1 // pred_check_branch
      %102 = sbr.rel (0) target = $region33
    $region32: #{tpu_custom_call.1} parent=1 // pred_region
      %s104 = ssub.s32 2048, 2048
      %105 = vsyncadd [#allocation15], %s104
      %s106 = sshll.u32 [#allocation14], 4
      %s107 = int_to_ptr.vmem [resolvable:$true] %s106
      %112 = dma.hbm_to_vmem [thread:$0]  %s7, 2048, %s107, [#allocation15], 64, 64, 4
    $region33: #{tpu_custom_call.1} parent=1 // pred_fallthru
      _
    // Predicated region
    $region34: #{tpu_custom_call.1} parent=1 // pred_check
      _
    $region35: #{tpu_custom_call.1} parent=1 // pred_check_branch
      %114 = sbr.rel (0) target = $region37
    $region36: #{tpu_custom_call.1} parent=1 // pred_region
      %s116 = ssub.s32 16, 16
      %117 = vsyncadd [#allocation15], %s116
      %s119 = sshll.u32 [#allocation16], 4
      %s120 = int_to_ptr.vmem [resolvable:$true] %s119
      %122 = dma.hbm_to_vmem [thread:$0]  %s8, 16, %s120, [#allocation15]
    $region37: #{tpu_custom_call.1} parent=1 // pred_fallthru
      _
    // Predicated region
    $region38: #{tpu_custom_call.1} parent=1 // pred_check
      _
    $region39: #{tpu_custom_call.1} parent=1 // pred_check_branch
      %124 = sbr.rel (0) target = $region41
    $region40: #{tpu_custom_call.1} parent=1 // pred_region
      %s126 = ssub.s32 1024, 1024
      %127 = vsyncadd [#allocation18], %s126
      %s128 = sshll.u32 [#allocation17], 4
      %s129 = int_to_ptr.vmem [resolvable:$true] %s128
      %134 = dma.hbm_to_vmem [thread:$0]  %s9, 1024, %s129, [#allocation18], 64, 64, 4
    $region41: #{tpu_custom_call.1} parent=1 // pred_fallthru
      _
    // Predicated region
    $region42: #{tpu_custom_call.1} parent=1 // pred_check
      _
    $region43: #{tpu_custom_call.1} parent=1 // pred_check_branch
      %136 = sbr.rel (0) target = $region45
    $region44: #{tpu_custom_call.1} parent=1 // pred_region
      %s138 = ssub.s32 16, 16
      %139 = vsyncadd [#allocation18], %s138
      %s141 = sshll.u32 [#allocation19], 4
      %s142 = int_to_ptr.vmem [resolvable:$true] %s141
      %144 = dma.hbm_to_vmem [thread:$0]  %s10, 16, %s142, [#allocation18]
    $region45: #{tpu_custom_call.1} parent=1 // pred_fallthru
      _
    // Predicated region
    $region46: #{tpu_custom_call.1} parent=1 // pred_check
      _
    $region47: #{tpu_custom_call.1} parent=1 // pred_check_branch
      %146 = sbr.rel (0) target = $region49
    $region48: #{tpu_custom_call.1} parent=1 // pred_region
      %147 = dma.done [#allocation3], 640
    $region49: #{tpu_custom_call.1} parent=1 // pred_fallthru
      _
    // Predicated region
    $region50: #{tpu_custom_call.1} parent=1 // pred_check
      _
    $region51: #{tpu_custom_call.1} parent=1 // pred_check_branch
      %149 = sbr.rel (0) target = $region53
    $region52: #{tpu_custom_call.1} parent=1 // pred_region
      %150 = dma.done [#allocation6], 40960
    $region53: #{tpu_custom_call.1} parent=1 // pred_fallthru
      _
    // Predicated region
    $region54: #{tpu_custom_call.1} parent=1 // pred_check
      _
    $region55: #{tpu_custom_call.1} parent=1 // pred_check_branch
      %152 = sbr.rel (0) target = $region57
    $region56: #{tpu_custom_call.1} parent=1 // pred_region
      %153 = dma.done [#allocation6], 128
    $region57: #{tpu_custom_call.1} parent=1 // pred_fallthru
      _
    // Predicated region
    $region58: #{tpu_custom_call.1} parent=1 // pred_check
      _
    $region59: #{tpu_custom_call.1} parent=1 // pred_check_branch
      %155 = sbr.rel (0) target = $region61
    $region60: #{tpu_custom_call.1} parent=1 // pred_region
      %156 = dma.done [#allocation9], 32768
    $region61: #{tpu_custom_call.1} parent=1 // pred_fallthru
      _
    // Predicated region
    $region62: #{tpu_custom_call.1} parent=1 // pred_check
      _
    $region63: #{tpu_custom_call.1} parent=1 // pred_check_branch
      %158 = sbr.rel (0) target = $region65
    $region64: #{tpu_custom_call.1} parent=1 // pred_region
      %159 = dma.done [#allocation9], 64
    $region65: #{tpu_custom_call.1} parent=1 // pred_fallthru
      _
    // Predicated region
    $region66: #{tpu_custom_call.1} parent=1 // pred_check
      _
    $region67: #{tpu_custom_call.1} parent=1 // pred_check_branch
      %161 = sbr.rel (0) target = $region69
    $region68: #{tpu_custom_call.1} parent=1 // pred_region
      %162 = dma.done [#allocation12], 8192
    $region69: #{tpu_custom_call.1} parent=1 // pred_fallthru
      _
    // Predicated region
    $region70: #{tpu_custom_call.1} parent=1 // pred_check
      _
    $region71: #{tpu_custom_call.1} parent=1 // pred_check_branch
      %164 = sbr.rel (0) target = $region73
    $region72: #{tpu_custom_call.1} parent=1 // pred_region
      %165 = dma.done [#allocation12], 32
    $region73: #{tpu_custom_call.1} parent=1 // pred_fallthru
      _
    // Predicated region
    $region74: #{tpu_custom_call.1} parent=1 // pred_check
      _
    $region75: #{tpu_custom_call.1} parent=1 // pred_check_branch
      %167 = sbr.rel (0) target = $region77
    $region76: #{tpu_custom_call.1} parent=1 // pred_region
      %168 = dma.done [#allocation15], 2048
    $region77: #{tpu_custom_call.1} parent=1 // pred_fallthru
      _
    // Predicated region
    $region78: #{tpu_custom_call.1} parent=1 // pred_check
      _
    $region79: #{tpu_custom_call.1} parent=1 // pred_check_branch
      %170 = sbr.rel (0) target = $region81
    $region80: #{tpu_custom_call.1} parent=1 // pred_region
      %171 = dma.done [#allocation15], 16
    $region81: #{tpu_custom_call.1} parent=1 // pred_fallthru
      _
    // Predicated region
    $region82: #{tpu_custom_call.1} parent=1 // pred_check
      _
    $region83: #{tpu_custom_call.1} parent=1 // pred_check_branch
      %173 = sbr.rel (0) target = $region85
    $region84: #{tpu_custom_call.1} parent=1 // pred_region
      %174 = dma.done [#allocation18], 1024
    $region85: #{tpu_custom_call.1} parent=1 // pred_fallthru
      _
    // Predicated region
    $region86: #{tpu_custom_call.1} parent=1 // pred_check
      _
    $region87: #{tpu_custom_call.1} parent=1 // pred_check_branch
      %176 = sbr.rel (0) target = $region89
    $region88: #{tpu_custom_call.1} parent=1 // pred_region
      %177 = dma.done [#allocation18], 16
    $region89: #{tpu_custom_call.1} parent=1 // pred_fallthru
      _
    %v179 = vld [vmem:[#allocation2] sm:$0xff]
    %v180 = vld [vmem:[#allocation2 + $0x8] sm:$0xff]
    %v181 = vld [vmem:[#allocation2 + $0x10] sm:$0xf]
    %v182 = vld [vmem:[#allocation2 + $0x14] sm:$0xff]
    %v183 = vld [vmem:[#allocation2 + $0x1c] sm:$0xff]
    %v184 = vld [vmem:[#allocation2 + $0x24] sm:$0xf]
    %v185 = vld [vmem:[#allocation5] sm:$0xff]
    %v186 = vld [vmem:[#allocation5 + $0x8] sm:$0xff]
    %v187 = vld [vmem:[#allocation5 + $0x10] sm:$0xff]
    %v188 = vld [vmem:[#allocation5 + $0x18] sm:$0xff]
    %v189 = vld [vmem:[#allocation5 + $0x20] sm:$0xff]
    %v190 = vld [vmem:[#allocation5 + $0x28] sm:$0xff]
    %v191 = vld [vmem:[#allocation5 + $0x30] sm:$0xff]
    %v192 = vld [vmem:[#allocation5 + $0x38] sm:$0xff]
    %v193 = vld [vmem:[#allocation5 + $0x40] sm:$0xff]
    %v194 = vld [vmem:[#allocation5 + $0x48] sm:$0xff]
    %v195 = vld [vmem:[#allocation5 + $0x50] sm:$0xff]
    %v196 = vld [vmem:[#allocation5 + $0x58] sm:$0xff]
    %v197 = vld [vmem:[#allocation5 + $0x60] sm:$0xff]
    %v198 = vld [vmem:[#allocation5 + $0x68] sm:$0xff]
    %v199 = vld [vmem:[#allocation5 + $0x70] sm:$0xff]
    %v200 = vld [vmem:[#allocation5 + $0x78] sm:$0xff]
    %v201 = vld [vmem:[#allocation5 + $0x80] sm:$0xff]
    %v202 = vld [vmem:[#allocation5 + $0x88] sm:$0xff]
    %v203 = vld [vmem:[#allocation5 + $0x90] sm:$0xff]
    %v204 = vld [vmem:[#allocation5 + $0x98] sm:$0xff]
    %v205 = vld [vmem:[#allocation5 + $0xa0] sm:$0xff]
    %v206 = vld [vmem:[#allocation5 + $0xa8] sm:$0xff]
    %v207 = vld [vmem:[#allocation5 + $0xb0] sm:$0xff]
    %v208 = vld [vmem:[#allocation5 + $0xb8] sm:$0xff]
    %v209 = vld [vmem:[#allocation5 + $0xc0] sm:$0xff]
    %v210 = vld [vmem:[#allocation5 + $0xc8] sm:$0xff]
    %v211 = vld [vmem:[#allocation5 + $0xd0] sm:$0xff]
    %v212 = vld [vmem:[#allocation5 + $0xd8] sm:$0xff]
    %v213 = vld [vmem:[#allocation5 + $0xe0] sm:$0xff]
    %v214 = vld [vmem:[#allocation5 + $0xe8] sm:$0xff]
    %v215 = vld [vmem:[#allocation5 + $0xf0] sm:$0xff]
    %v216 = vld [vmem:[#allocation5 + $0xf8] sm:$0xff]
    %v217 = vld [vmem:[#allocation5 + $0x100] sm:$0xff]
    %v218 = vld [vmem:[#allocation5 + $0x108] sm:$0xff]
    %v219 = vld [vmem:[#allocation5 + $0x110] sm:$0xff]
    %v220 = vld [vmem:[#allocation5 + $0x118] sm:$0xff]
    %v221 = vld [vmem:[#allocation5 + $0x120] sm:$0xff]
    %v222 = vld [vmem:[#allocation5 + $0x128] sm:$0xff]
    %v223 = vld [vmem:[#allocation5 + $0x130] sm:$0xff]
    %v224 = vld [vmem:[#allocation5 + $0x138] sm:$0xff]
    %v225 = vld [vmem:[#allocation5 + $0x140] sm:$0xff]
    %v226 = vld [vmem:[#allocation5 + $0x148] sm:$0xff]
    %v227 = vld [vmem:[#allocation5 + $0x150] sm:$0xff]
    %v228 = vld [vmem:[#allocation5 + $0x158] sm:$0xff]
    %v229 = vld [vmem:[#allocation5 + $0x160] sm:$0xff]
    %v230 = vld [vmem:[#allocation5 + $0x168] sm:$0xff]
    %v231 = vld [vmem:[#allocation5 + $0x170] sm:$0xff]
    %v232 = vld [vmem:[#allocation5 + $0x178] sm:$0xff]
    %v233 = vld [vmem:[#allocation5 + $0x180] sm:$0xff]
    %v234 = vld [vmem:[#allocation5 + $0x188] sm:$0xff]
    %v235 = vld [vmem:[#allocation5 + $0x190] sm:$0xff]
    %v236 = vld [vmem:[#allocation5 + $0x198] sm:$0xff]
    %v237 = vld [vmem:[#allocation5 + $0x1a0] sm:$0xff]
    %v238 = vld [vmem:[#allocation5 + $0x1a8] sm:$0xff]
    %v239 = vld [vmem:[#allocation5 + $0x1b0] sm:$0xff]
    %v240 = vld [vmem:[#allocation5 + $0x1b8] sm:$0xff]
    %v241 = vld [vmem:[#allocation5 + $0x1c0] sm:$0xff]
    %v242 = vld [vmem:[#allocation5 + $0x1c8] sm:$0xff]
    %v243 = vld [vmem:[#allocation5 + $0x1d0] sm:$0xff]
    %v244 = vld [vmem:[#allocation5 + $0x1d8] sm:$0xff]
    %v245 = vld [vmem:[#allocation5 + $0x1e0] sm:$0xff]
    %v246 = vld [vmem:[#allocation5 + $0x1e8] sm:$0xff]
    %v247 = vld [vmem:[#allocation5 + $0x1f0] sm:$0xff]
    %v248 = vld [vmem:[#allocation5 + $0x1f8] sm:$0xff]
    %v249 = vld [vmem:[#allocation5 + $0x200] sm:$0xff]
    %v250 = vld [vmem:[#allocation5 + $0x208] sm:$0xff]
    %v251 = vld [vmem:[#allocation5 + $0x210] sm:$0xff]
    %v252 = vld [vmem:[#allocation5 + $0x218] sm:$0xff]
    %v253 = vld [vmem:[#allocation5 + $0x220] sm:$0xff]
    %v254 = vld [vmem:[#allocation5 + $0x228] sm:$0xff]
    %v255 = vld [vmem:[#allocation5 + $0x230] sm:$0xff]
    %v256 = vld [vmem:[#allocation5 + $0x238] sm:$0xff]
    %v257 = vld [vmem:[#allocation5 + $0x240] sm:$0xff]
    %v258 = vld [vmem:[#allocation5 + $0x248] sm:$0xff]
    %v259 = vld [vmem:[#allocation5 + $0x250] sm:$0xff]
    %v260 = vld [vmem:[#allocation5 + $0x258] sm:$0xff]
    %v261 = vld [vmem:[#allocation5 + $0x260] sm:$0xff]
    %v262 = vld [vmem:[#allocation5 + $0x268] sm:$0xff]
    %v263 = vld [vmem:[#allocation5 + $0x270] sm:$0xff]
    %v264 = vld [vmem:[#allocation5 + $0x278] sm:$0xff]
    %v265 = vld [vmem:[#allocation5 + $0x280] sm:$0xff]
    %v266 = vld [vmem:[#allocation5 + $0x288] sm:$0xff]
    %v267 = vld [vmem:[#allocation5 + $0x290] sm:$0xff]
    %v268 = vld [vmem:[#allocation5 + $0x298] sm:$0xff]
    %v269 = vld [vmem:[#allocation5 + $0x2a0] sm:$0xff]
    %v270 = vld [vmem:[#allocation5 + $0x2a8] sm:$0xff]
    %v271 = vld [vmem:[#allocation5 + $0x2b0] sm:$0xff]
    %v272 = vld [vmem:[#allocation5 + $0x2b8] sm:$0xff]
    %v273 = vld [vmem:[#allocation5 + $0x2c0] sm:$0xff]
    %v274 = vld [vmem:[#allocation5 + $0x2c8] sm:$0xff]
    %v275 = vld [vmem:[#allocation5 + $0x2d0] sm:$0xff]
    %v276 = vld [vmem:[#allocation5 + $0x2d8] sm:$0xff]
    %v277 = vld [vmem:[#allocation5 + $0x2e0] sm:$0xff]
    %v278 = vld [vmem:[#allocation5 + $0x2e8] sm:$0xff]
    %v279 = vld [vmem:[#allocation5 + $0x2f0] sm:$0xff]
    %v280 = vld [vmem:[#allocation5 + $0x2f8] sm:$0xff]
    %v281 = vld [vmem:[#allocation5 + $0x300] sm:$0xff]
    %v282 = vld [vmem:[#allocation5 + $0x308] sm:$0xff]
    %v283 = vld [vmem:[#allocation5 + $0x310] sm:$0xff]
    %v284 = vld [vmem:[#allocation5 + $0x318] sm:$0xff]
    %v285 = vld [vmem:[#allocation5 + $0x320] sm:$0xff]
    %v286 = vld [vmem:[#allocation5 + $0x328] sm:$0xff]
    %v287 = vld [vmem:[#allocation5 + $0x330] sm:$0xff]
    %v288 = vld [vmem:[#allocation5 + $0x338] sm:$0xff]
    %v289 = vld [vmem:[#allocation5 + $0x340] sm:$0xff]
    %v290 = vld [vmem:[#allocation5 + $0x348] sm:$0xff]
    %v291 = vld [vmem:[#allocation5 + $0x350] sm:$0xff]
    %v292 = vld [vmem:[#allocation5 + $0x358] sm:$0xff]
    %v293 = vld [vmem:[#allocation5 + $0x360] sm:$0xff]
    %v294 = vld [vmem:[#allocation5 + $0x368] sm:$0xff]
    %v295 = vld [vmem:[#allocation5 + $0x370] sm:$0xff]
    %v296 = vld [vmem:[#allocation5 + $0x378] sm:$0xff]
    %v297 = vld [vmem:[#allocation5 + $0x380] sm:$0xff]
    %v298 = vld [vmem:[#allocation5 + $0x388] sm:$0xff]
    %v299 = vld [vmem:[#allocation5 + $0x390] sm:$0xff]
    %v300 = vld [vmem:[#allocation5 + $0x398] sm:$0xff]
    %v301 = vld [vmem:[#allocation5 + $0x3a0] sm:$0xff]
    %v302 = vld [vmem:[#allocation5 + $0x3a8] sm:$0xff]
    %v303 = vld [vmem:[#allocation5 + $0x3b0] sm:$0xff]
    %v304 = vld [vmem:[#allocation5 + $0x3b8] sm:$0xff]
    %v305 = vld [vmem:[#allocation5 + $0x3c0] sm:$0xff]
    %v306 = vld [vmem:[#allocation5 + $0x3c8] sm:$0xff]
    %v307 = vld [vmem:[#allocation5 + $0x3d0] sm:$0xff]
    %v308 = vld [vmem:[#allocation5 + $0x3d8] sm:$0xff]
    %v309 = vld [vmem:[#allocation5 + $0x3e0] sm:$0xff]
    %v310 = vld [vmem:[#allocation5 + $0x3e8] sm:$0xff]
    %v311 = vld [vmem:[#allocation5 + $0x3f0] sm:$0xff]
    %v312 = vld [vmem:[#allocation5 + $0x3f8] sm:$0xff]
    %v313 = vld [vmem:[#allocation5 + $0x400] sm:$0xff]
    %v314 = vld [vmem:[#allocation5 + $0x408] sm:$0xff]
    %v315 = vld [vmem:[#allocation5 + $0x410] sm:$0xff]
    %v316 = vld [vmem:[#allocation5 + $0x418] sm:$0xff]
    %v317 = vld [vmem:[#allocation5 + $0x420] sm:$0xff]
    %v318 = vld [vmem:[#allocation5 + $0x428] sm:$0xff]
    %v319 = vld [vmem:[#allocation5 + $0x430] sm:$0xff]
    %v320 = vld [vmem:[#allocation5 + $0x438] sm:$0xff]
    %v321 = vld [vmem:[#allocation5 + $0x440] sm:$0xff]
    %v322 = vld [vmem:[#allocation5 + $0x448] sm:$0xff]
    %v323 = vld [vmem:[#allocation5 + $0x450] sm:$0xff]
    %v324 = vld [vmem:[#allocation5 + $0x458] sm:$0xff]
    %v325 = vld [vmem:[#allocation5 + $0x460] sm:$0xff]
    %v326 = vld [vmem:[#allocation5 + $0x468] sm:$0xff]
    %v327 = vld [vmem:[#allocation5 + $0x470] sm:$0xff]
    %v328 = vld [vmem:[#allocation5 + $0x478] sm:$0xff]
    %v329 = vld [vmem:[#allocation5 + $0x480] sm:$0xff]
    %v330 = vld [vmem:[#allocation5 + $0x488] sm:$0xff]
    %v331 = vld [vmem:[#allocation5 + $0x490] sm:$0xff]
    %v332 = vld [vmem:[#allocation5 + $0x498] sm:$0xff]
    %v333 = vld [vmem:[#allocation5 + $0x4a0] sm:$0xff]
    %v334 = vld [vmem:[#allocation5 + $0x4a8] sm:$0xff]
    %v335 = vld [vmem:[#allocation5 + $0x4b0] sm:$0xff]
    %v336 = vld [vmem:[#allocation5 + $0x4b8] sm:$0xff]
    %v337 = vld [vmem:[#allocation5 + $0x4c0] sm:$0xff]
    %v338 = vld [vmem:[#allocation5 + $0x4c8] sm:$0xff]
    %v339 = vld [vmem:[#allocation5 + $0x4d0] sm:$0xff]
    %v340 = vld [vmem:[#allocation5 + $0x4d8] sm:$0xff]
    %v341 = vld [vmem:[#allocation5 + $0x4e0] sm:$0xff]
    %v342 = vld [vmem:[#allocation5 + $0x4e8] sm:$0xff]
    %v343 = vld [vmem:[#allocation5 + $0x4f0] sm:$0xff]
    %v344 = vld [vmem:[#allocation5 + $0x4f8] sm:$0xff]
    %v345 = vld [vmem:[#allocation5 + $0x500] sm:$0xff]
    %v346 = vld [vmem:[#allocation5 + $0x508] sm:$0xff]
    %v347 = vld [vmem:[#allocation5 + $0x510] sm:$0xff]
    %v348 = vld [vmem:[#allocation5 + $0x518] sm:$0xff]
    %v349 = vld [vmem:[#allocation5 + $0x520] sm:$0xff]
    %v350 = vld [vmem:[#allocation5 + $0x528] sm:$0xff]
    %v351 = vld [vmem:[#allocation5 + $0x530] sm:$0xff]
    %v352 = vld [vmem:[#allocation5 + $0x538] sm:$0xff]
    %v353 = vld [vmem:[#allocation5 + $0x540] sm:$0xff]
    %v354 = vld [vmem:[#allocation5 + $0x548] sm:$0xff]
    %v355 = vld [vmem:[#allocation5 + $0x550] sm:$0xff]
    %v356 = vld [vmem:[#allocation5 + $0x558] sm:$0xff]
    %v357 = vld [vmem:[#allocation5 + $0x560] sm:$0xff]
    %v358 = vld [vmem:[#allocation5 + $0x568] sm:$0xff]
    %v359 = vld [vmem:[#allocation5 + $0x570] sm:$0xff]
    %v360 = vld [vmem:[#allocation5 + $0x578] sm:$0xff]
    %v361 = vld [vmem:[#allocation5 + $0x580] sm:$0xff]
    %v362 = vld [vmem:[#allocation5 + $0x588] sm:$0xff]
    %v363 = vld [vmem:[#allocation5 + $0x590] sm:$0xff]
    %v364 = vld [vmem:[#allocation5 + $0x598] sm:$0xff]
    %v365 = vld [vmem:[#allocation5 + $0x5a0] sm:$0xff]
    %v366 = vld [vmem:[#allocation5 + $0x5a8] sm:$0xff]
    %v367 = vld [vmem:[#allocation5 + $0x5b0] sm:$0xff]
    %v368 = vld [vmem:[#allocation5 + $0x5b8] sm:$0xff]
    %v369 = vld [vmem:[#allocation5 + $0x5c0] sm:$0xff]
    %v370 = vld [vmem:[#allocation5 + $0x5c8] sm:$0xff]
    %v371 = vld [vmem:[#allocation5 + $0x5d0] sm:$0xff]
    %v372 = vld [vmem:[#allocation5 + $0x5d8] sm:$0xff]
    %v373 = vld [vmem:[#allocation5 + $0x5e0] sm:$0xff]
    %v374 = vld [vmem:[#allocation5 + $0x5e8] sm:$0xff]
    %v375 = vld [vmem:[#allocation5 + $0x5f0] sm:$0xff]
    %v376 = vld [vmem:[#allocation5 + $0x5f8] sm:$0xff]
    %v377 = vld [vmem:[#allocation5 + $0x600] sm:$0xff]
    %v378 = vld [vmem:[#allocation5 + $0x608] sm:$0xff]
    %v379 = vld [vmem:[#allocation5 + $0x610] sm:$0xff]
    %v380 = vld [vmem:[#allocation5 + $0x618] sm:$0xff]
    %v381 = vld [vmem:[#allocation5 + $0x620] sm:$0xff]
    %v382 = vld [vmem:[#allocation5 + $0x628] sm:$0xff]
    %v383 = vld [vmem:[#allocation5 + $0x630] sm:$0xff]
    %v384 = vld [vmem:[#allocation5 + $0x638] sm:$0xff]
    %v385 = vld [vmem:[#allocation5 + $0x640] sm:$0xff]
    %v386 = vld [vmem:[#allocation5 + $0x648] sm:$0xff]
    %v387 = vld [vmem:[#allocation5 + $0x650] sm:$0xff]
    %v388 = vld [vmem:[#allocation5 + $0x658] sm:$0xff]
    %v389 = vld [vmem:[#allocation5 + $0x660] sm:$0xff]
    %v390 = vld [vmem:[#allocation5 + $0x668] sm:$0xff]
    %v391 = vld [vmem:[#allocation5 + $0x670] sm:$0xff]
    %v392 = vld [vmem:[#allocation5 + $0x678] sm:$0xff]
    %v393 = vld [vmem:[#allocation5 + $0x680] sm:$0xff]
    %v394 = vld [vmem:[#allocation5 + $0x688] sm:$0xff]
    %v395 = vld [vmem:[#allocation5 + $0x690] sm:$0xff]
    %v396 = vld [vmem:[#allocation5 + $0x698] sm:$0xff]
    %v397 = vld [vmem:[#allocation5 + $0x6a0] sm:$0xff]
    %v398 = vld [vmem:[#allocation5 + $0x6a8] sm:$0xff]
    %v399 = vld [vmem:[#allocation5 + $0x6b0] sm:$0xff]
    %v400 = vld [vmem:[#allocation5 + $0x6b8] sm:$0xff]
    %v401 = vld [vmem:[#allocation5 + $0x6c0] sm:$0xff]
    %v402 = vld [vmem:[#allocation5 + $0x6c8] sm:$0xff]
    %v403 = vld [vmem:[#allocation5 + $0x6d0] sm:$0xff]
    %v404 = vld [vmem:[#allocation5 + $0x6d8] sm:$0xff]
    %v405 = vld [vmem:[#allocation5 + $0x6e0] sm:$0xff]
    %v406 = vld [vmem:[#allocation5 + $0x6e8] sm:$0xff]
    %v407 = vld [vmem:[#allocation5 + $0x6f0] sm:$0xff]
    %v408 = vld [vmem:[#allocation5 + $0x6f8] sm:$0xff]
    %v409 = vld [vmem:[#allocation5 + $0x700] sm:$0xff]
    %v410 = vld [vmem:[#allocation5 + $0x708] sm:$0xff]
    %v411 = vld [vmem:[#allocation5 + $0x710] sm:$0xff]
    %v412 = vld [vmem:[#allocation5 + $0x718] sm:$0xff]
    %v413 = vld [vmem:[#allocation5 + $0x720] sm:$0xff]
    %v414 = vld [vmem:[#allocation5 + $0x728] sm:$0xff]
    %v415 = vld [vmem:[#allocation5 + $0x730] sm:$0xff]
    %v416 = vld [vmem:[#allocation5 + $0x738] sm:$0xff]
    %v417 = vld [vmem:[#allocation5 + $0x740] sm:$0xff]
    %v418 = vld [vmem:[#allocation5 + $0x748] sm:$0xff]
    %v419 = vld [vmem:[#allocation5 + $0x750] sm:$0xff]
    %v420 = vld [vmem:[#allocation5 + $0x758] sm:$0xff]
    %v421 = vld [vmem:[#allocation5 + $0x760] sm:$0xff]
    %v422 = vld [vmem:[#allocation5 + $0x768] sm:$0xff]
    %v423 = vld [vmem:[#allocation5 + $0x770] sm:$0xff]
    %v424 = vld [vmem:[#allocation5 + $0x778] sm:$0xff]
    %v425 = vld [vmem:[#allocation5 + $0x780] sm:$0xff]
    %v426 = vld [vmem:[#allocation5 + $0x788] sm:$0xff]
    %v427 = vld [vmem:[#allocation5 + $0x790] sm:$0xff]
    %v428 = vld [vmem:[#allocation5 + $0x798] sm:$0xff]
    %v429 = vld [vmem:[#allocation5 + $0x7a0] sm:$0xff]
    %v430 = vld [vmem:[#allocation5 + $0x7a8] sm:$0xff]
    %v431 = vld [vmem:[#allocation5 + $0x7b0] sm:$0xff]
    %v432 = vld [vmem:[#allocation5 + $0x7b8] sm:$0xff]
    %v433 = vld [vmem:[#allocation5 + $0x7c0] sm:$0xff]
    %v434 = vld [vmem:[#allocation5 + $0x7c8] sm:$0xff]
    %v435 = vld [vmem:[#allocation5 + $0x7d0] sm:$0xff]
    %v436 = vld [vmem:[#allocation5 + $0x7d8] sm:$0xff]
    %v437 = vld [vmem:[#allocation5 + $0x7e0] sm:$0xff]
    %v438 = vld [vmem:[#allocation5 + $0x7e8] sm:$0xff]
    %v439 = vld [vmem:[#allocation5 + $0x7f0] sm:$0xff]
    %v440 = vld [vmem:[#allocation5 + $0x7f8] sm:$0xff]
    %v441 = vld [vmem:[#allocation5 + $0x800] sm:$0xff]
    %v442 = vld [vmem:[#allocation5 + $0x808] sm:$0xff]
    %v443 = vld [vmem:[#allocation5 + $0x810] sm:$0xff]
    %v444 = vld [vmem:[#allocation5 + $0x818] sm:$0xff]
    %v445 = vld [vmem:[#allocation5 + $0x820] sm:$0xff]
    %v446 = vld [vmem:[#allocation5 + $0x828] sm:$0xff]
    %v447 = vld [vmem:[#allocation5 + $0x830] sm:$0xff]
    %v448 = vld [vmem:[#allocation5 + $0x838] sm:$0xff]
    %v449 = vld [vmem:[#allocation5 + $0x840] sm:$0xff]
    %v450 = vld [vmem:[#allocation5 + $0x848] sm:$0xff]
    %v451 = vld [vmem:[#allocation5 + $0x850] sm:$0xff]
    %v452 = vld [vmem:[#allocation5 + $0x858] sm:$0xff]
    %v453 = vld [vmem:[#allocation5 + $0x860] sm:$0xff]
    %v454 = vld [vmem:[#allocation5 + $0x868] sm:$0xff]
    %v455 = vld [vmem:[#allocation5 + $0x870] sm:$0xff]
    %v456 = vld [vmem:[#allocation5 + $0x878] sm:$0xff]
    %v457 = vld [vmem:[#allocation5 + $0x880] sm:$0xff]
    %v458 = vld [vmem:[#allocation5 + $0x888] sm:$0xff]
    %v459 = vld [vmem:[#allocation5 + $0x890] sm:$0xff]
    %v460 = vld [vmem:[#allocation5 + $0x898] sm:$0xff]
    %v461 = vld [vmem:[#allocation5 + $0x8a0] sm:$0xff]
    %v462 = vld [vmem:[#allocation5 + $0x8a8] sm:$0xff]
    %v463 = vld [vmem:[#allocation5 + $0x8b0] sm:$0xff]
    %v464 = vld [vmem:[#allocation5 + $0x8b8] sm:$0xff]
    %v465 = vld [vmem:[#allocation5 + $0x8c0] sm:$0xff]
    %v466 = vld [vmem:[#allocation5 + $0x8c8] sm:$0xff]
    %v467 = vld [vmem:[#allocation5 + $0x8d0] sm:$0xff]
    %v468 = vld [vmem:[#allocation5 + $0x8d8] sm:$0xff]
    %v469 = vld [vmem:[#allocation5 + $0x8e0] sm:$0xff]
    %v470 = vld [vmem:[#allocation5 + $0x8e8] sm:$0xff]
    %v471 = vld [vmem:[#allocation5 + $0x8f0] sm:$0xff]
    %v472 = vld [vmem:[#allocation5 + $0x8f8] sm:$0xff]
    %v473 = vld [vmem:[#allocation5 + $0x900] sm:$0xff]
    %v474 = vld [vmem:[#allocation5 + $0x908] sm:$0xff]
    %v475 = vld [vmem:[#allocation5 + $0x910] sm:$0xff]
    %v476 = vld [vmem:[#allocation5 + $0x918] sm:$0xff]
    %v477 = vld [vmem:[#allocation5 + $0x920] sm:$0xff]
    %v478 = vld [vmem:[#allocation5 + $0x928] sm:$0xff]
    %v479 = vld [vmem:[#allocation5 + $0x930] sm:$0xff]
    %v480 = vld [vmem:[#allocation5 + $0x938] sm:$0xff]
    %v481 = vld [vmem:[#allocation5 + $0x940] sm:$0xff]
    %v482 = vld [vmem:[#allocation5 + $0x948] sm:$0xff]
    %v483 = vld [vmem:[#allocation5 + $0x950] sm:$0xff]
    %v484 = vld [vmem:[#allocation5 + $0x958] sm:$0xff]
    %v485 = vld [vmem:[#allocation5 + $0x960] sm:$0xff]
    %v486 = vld [vmem:[#allocation5 + $0x968] sm:$0xff]
    %v487 = vld [vmem:[#allocation5 + $0x970] sm:$0xff]
    %v488 = vld [vmem:[#allocation5 + $0x978] sm:$0xff]
    %v489 = vld [vmem:[#allocation5 + $0x980] sm:$0xff]
    %v490 = vld [vmem:[#allocation5 + $0x988] sm:$0xff]
    %v491 = vld [vmem:[#allocation5 + $0x990] sm:$0xff]
    %v492 = vld [vmem:[#allocation5 + $0x998] sm:$0xff]
    %v493 = vld [vmem:[#allocation5 + $0x9a0] sm:$0xff]
    %v494 = vld [vmem:[#allocation5 + $0x9a8] sm:$0xff]
    %v495 = vld [vmem:[#allocation5 + $0x9b0] sm:$0xff]
    %v496 = vld [vmem:[#allocation5 + $0x9b8] sm:$0xff]
    %v497 = vld [vmem:[#allocation5 + $0x9c0] sm:$0xff]
    %v498 = vld [vmem:[#allocation5 + $0x9c8] sm:$0xff]
    %v499 = vld [vmem:[#allocation5 + $0x9d0] sm:$0xff]
    %v500 = vld [vmem:[#allocation5 + $0x9d8] sm:$0xff]
    %v501 = vld [vmem:[#allocation5 + $0x9e0] sm:$0xff]
    %v502 = vld [vmem:[#allocation5 + $0x9e8] sm:$0xff]
    %v503 = vld [vmem:[#allocation5 + $0x9f0] sm:$0xff]
    %v504 = vld [vmem:[#allocation5 + $0x9f8] sm:$0xff]
    %v505 = vld [vmem:[#allocation7] sm:$0xff]
    %v507 = vlaneseq
    %v508 = vshrl.u32 %v507, 7
    %v509 = vsub.s32 0, %v508
    %v510 = vrot.slane %v505, %v509
    %v511 = vlaneseq
    %v512 = vshrl.u32 %v511, 7
    %v513 = vsub.s32 1, %v512
    %v514 = vrot.slane %v505, %v513
    %v515 = vlaneseq
    %v516 = vshrl.u32 %v515, 7
    %v517 = vsub.s32 2, %v516
    %v518 = vrot.slane %v505, %v517
    %v519 = vlaneseq
    %v520 = vshrl.u32 %v519, 7
    %v521 = vsub.s32 3, %v520
    %v522 = vrot.slane %v505, %v521
    %v523 = vlaneseq
    %v524 = vshrl.u32 %v523, 7
    %v525 = vsub.s32 4, %v524
    %v526 = vrot.slane %v505, %v525
    %v527 = vlaneseq
    %v528 = vshrl.u32 %v527, 7
    %v529 = vsub.s32 5, %v528
    %v530 = vrot.slane %v505, %v529
    %v531 = vlaneseq
    %v532 = vshrl.u32 %v531, 7
    %v533 = vsub.s32 6, %v532
    %v534 = vrot.slane %v505, %v533
    %v535 = vlaneseq
    %v536 = vshrl.u32 %v535, 7
    %v537 = vsub.s32 7, %v536
    %v538 = vrot.slane %v505, %v537
    %v553 = vunpack.c.l.b16 %v179
    %v554 = vunpack.c.h.b16 %v179
    %v555 = vunpack.c.l.b16 %v180
    %v556 = vunpack.c.h.b16 %v180
    %v557 = vunpack.c.l.b16 %v181
    %v558 = vunpack.c.l.b16 %v182
    %v559 = vunpack.c.h.b16 %v182
    %v560 = vunpack.c.l.b16 %v183
    %v561 = vunpack.c.h.b16 %v183
    %v562 = vunpack.c.l.b16 %v184
    %v563 = vpack.c.b16 %v558, %v553
    %v564 = vpack.c.b16 %v559, %v554
    %v565 = vpack.c.b16 %v560, %v555
    %v566 = vpack.c.b16 %v561, %v556
    %v567 = vpack.c.b16 %v562, %v557
    %v893 = vunpack.c.l.b16 %v185
    %v894 = vunpack.c.h.b16 %v185
    %v895 = vunpack.c.l.b16 %v186
    %v896 = vunpack.c.h.b16 %v186
    %v897 = vunpack.c.l.b16 %v187
    %v898 = vunpack.c.h.b16 %v187
    %v899 = vunpack.c.l.b16 %v188
    %v900 = vunpack.c.h.b16 %v188
    %v901 = vunpack.c.l.b16 %v189
    %v902 = vunpack.c.h.b16 %v189
    %v903 = vunpack.c.l.b16 %v190
    %v904 = vunpack.c.h.b16 %v190
    %v905 = vunpack.c.l.b16 %v191
    %v906 = vunpack.c.h.b16 %v191
    %v907 = vunpack.c.l.b16 %v192
    %v908 = vunpack.c.h.b16 %v192
    %v909 = vunpack.c.l.b16 %v193
    %v910 = vunpack.c.h.b16 %v193
    %v911 = vunpack.c.l.b16 %v194
    %v912 = vunpack.c.h.b16 %v194
    %v913 = vunpack.c.l.b16 %v195
    %v914 = vunpack.c.h.b16 %v195
    %v915 = vunpack.c.l.b16 %v196
    %v916 = vunpack.c.h.b16 %v196
    %v917 = vunpack.c.l.b16 %v197
    %v918 = vunpack.c.h.b16 %v197
    %v919 = vunpack.c.l.b16 %v198
    %v920 = vunpack.c.h.b16 %v198
    %v921 = vunpack.c.l.b16 %v199
    %v922 = vunpack.c.h.b16 %v199
    %v923 = vunpack.c.l.b16 %v200
    %v924 = vunpack.c.h.b16 %v200
    %v925 = vunpack.c.l.b16 %v201
    %v926 = vunpack.c.h.b16 %v201
    %v927 = vunpack.c.l.b16 %v202
    %v928 = vunpack.c.h.b16 %v202
    %v929 = vunpack.c.l.b16 %v203
    %v930 = vunpack.c.h.b16 %v203
    %v931 = vunpack.c.l.b16 %v204
    %v932 = vunpack.c.h.b16 %v204
    %v933 = vunpack.c.l.b16 %v205
    %v934 = vunpack.c.h.b16 %v205
    %v935 = vunpack.c.l.b16 %v206
    %v936 = vunpack.c.h.b16 %v206
    %v937 = vunpack.c.l.b16 %v207
    %v938 = vunpack.c.h.b16 %v207
    %v939 = vunpack.c.l.b16 %v208
    %v940 = vunpack.c.h.b16 %v208
    %v941 = vunpack.c.l.b16 %v209
    %v942 = vunpack.c.h.b16 %v209
    %v943 = vunpack.c.l.b16 %v210
    %v944 = vunpack.c.h.b16 %v210
    %v945 = vunpack.c.l.b16 %v211
    %v946 = vunpack.c.h.b16 %v211
    %v947 = vunpack.c.l.b16 %v212
    %v948 = vunpack.c.h.b16 %v212
    %v949 = vunpack.c.l.b16 %v213
    %v950 = vunpack.c.h.b16 %v213
    %v951 = vunpack.c.l.b16 %v214
    %v952 = vunpack.c.h.b16 %v214
    %v953 = vunpack.c.l.b16 %v215
    %v954 = vunpack.c.h.b16 %v215
    %v955 = vunpack.c.l.b16 %v216
    %v956 = vunpack.c.h.b16 %v216
    %v957 = vunpack.c.l.b16 %v217
    %v958 = vunpack.c.h.b16 %v217
    %v959 = vunpack.c.l.b16 %v218
    %v960 = vunpack.c.h.b16 %v218
    %v961 = vunpack.c.l.b16 %v219
    %v962 = vunpack.c.h.b16 %v219
    %v963 = vunpack.c.l.b16 %v220
    %v964 = vunpack.c.h.b16 %v220
    %v965 = vunpack.c.l.b16 %v221
    %v966 = vunpack.c.h.b16 %v221
    %v967 = vunpack.c.l.b16 %v222
    %v968 = vunpack.c.h.b16 %v222
    %v969 = vunpack.c.l.b16 %v223
    %v970 = vunpack.c.h.b16 %v223
    %v971 = vunpack.c.l.b16 %v224
    %v972 = vunpack.c.h.b16 %v224
    %v973 = vunpack.c.l.b16 %v225
    %v974 = vunpack.c.h.b16 %v225
    %v975 = vunpack.c.l.b16 %v226
    %v976 = vunpack.c.h.b16 %v226
    %v977 = vunpack.c.l.b16 %v227
    %v978 = vunpack.c.h.b16 %v227
    %v979 = vunpack.c.l.b16 %v228
    %v980 = vunpack.c.h.b16 %v228
    %v981 = vunpack.c.l.b16 %v229
    %v982 = vunpack.c.h.b16 %v229
    %v983 = vunpack.c.l.b16 %v230
    %v984 = vunpack.c.h.b16 %v230
    %v985 = vunpack.c.l.b16 %v231
    %v986 = vunpack.c.h.b16 %v231
    %v987 = vunpack.c.l.b16 %v232
    %v988 = vunpack.c.h.b16 %v232
    %v989 = vunpack.c.l.b16 %v233
    %v990 = vunpack.c.h.b16 %v233
    %v991 = vunpack.c.l.b16 %v234
    %v992 = vunpack.c.h.b16 %v234
    %v993 = vunpack.c.l.b16 %v235
    %v994 = vunpack.c.h.b16 %v235
    %v995 = vunpack.c.l.b16 %v236
    %v996 = vunpack.c.h.b16 %v236
    %v997 = vunpack.c.l.b16 %v237
    %v998 = vunpack.c.h.b16 %v237
    %v999 = vunpack.c.l.b16 %v238
    %v1000 = vunpack.c.h.b16 %v238
    %v1001 = vunpack.c.l.b16 %v239
    %v1002 = vunpack.c.h.b16 %v239
    %v1003 = vunpack.c.l.b16 %v240
    %v1004 = vunpack.c.h.b16 %v240
    %v1005 = vunpack.c.l.b16 %v241
    %v1006 = vunpack.c.h.b16 %v241
    %v1007 = vunpack.c.l.b16 %v242
    %v1008 = vunpack.c.h.b16 %v242
    %v1009 = vunpack.c.l.b16 %v243
    %v1010 = vunpack.c.h.b16 %v243
    %v1011 = vunpack.c.l.b16 %v244
    %v1012 = vunpack.c.h.b16 %v244
    %v1013 = vunpack.c.l.b16 %v245
    %v1014 = vunpack.c.h.b16 %v245
    %v1015 = vunpack.c.l.b16 %v246
    %v1016 = vunpack.c.h.b16 %v246
    %v1017 = vunpack.c.l.b16 %v247
    %v1018 = vunpack.c.h.b16 %v247
    %v1019 = vunpack.c.l.b16 %v248
    %v1020 = vunpack.c.h.b16 %v248
    %v1021 = vunpack.c.l.b16 %v249
    %v1022 = vunpack.c.h.b16 %v249
    %v1023 = vunpack.c.l.b16 %v250
    %v1024 = vunpack.c.h.b16 %v250
    %v1025 = vunpack.c.l.b16 %v251
    %v1026 = vunpack.c.h.b16 %v251
    %v1027 = vunpack.c.l.b16 %v252
    %v1028 = vunpack.c.h.b16 %v252
    %v1029 = vunpack.c.l.b16 %v253
    %v1030 = vunpack.c.h.b16 %v253
    %v1031 = vunpack.c.l.b16 %v254
    %v1032 = vunpack.c.h.b16 %v254
    %v1033 = vunpack.c.l.b16 %v255
    %v1034 = vunpack.c.h.b16 %v255
    %v1035 = vunpack.c.l.b16 %v256
    %v1036 = vunpack.c.h.b16 %v256
    %v1037 = vunpack.c.l.b16 %v257
    %v1038 = vunpack.c.h.b16 %v257
    %v1039 = vunpack.c.l.b16 %v258
    %v1040 = vunpack.c.h.b16 %v258
    %v1041 = vunpack.c.l.b16 %v259
    %v1042 = vunpack.c.h.b16 %v259
    %v1043 = vunpack.c.l.b16 %v260
    %v1044 = vunpack.c.h.b16 %v260
    %v1045 = vunpack.c.l.b16 %v261
    %v1046 = vunpack.c.h.b16 %v261
    %v1047 = vunpack.c.l.b16 %v262
    %v1048 = vunpack.c.h.b16 %v262
    %v1049 = vunpack.c.l.b16 %v263
    %v1050 = vunpack.c.h.b16 %v263
    %v1051 = vunpack.c.l.b16 %v264
    %v1052 = vunpack.c.h.b16 %v264
    %v1053 = vunpack.c.l.b16 %v265
    %v1054 = vunpack.c.h.b16 %v265
    %v1055 = vunpack.c.l.b16 %v266
    %v1056 = vunpack.c.h.b16 %v266
    %v1057 = vunpack.c.l.b16 %v267
    %v1058 = vunpack.c.h.b16 %v267
    %v1059 = vunpack.c.l.b16 %v268
    %v1060 = vunpack.c.h.b16 %v268
    %v1061 = vunpack.c.l.b16 %v269
    %v1062 = vunpack.c.h.b16 %v269
    %v1063 = vunpack.c.l.b16 %v270
    %v1064 = vunpack.c.h.b16 %v270
    %v1065 = vunpack.c.l.b16 %v271
    %v1066 = vunpack.c.h.b16 %v271
    %v1067 = vunpack.c.l.b16 %v272
    %v1068 = vunpack.c.h.b16 %v272
    %v1069 = vunpack.c.l.b16 %v273
    %v1070 = vunpack.c.h.b16 %v273
    %v1071 = vunpack.c.l.b16 %v274
    %v1072 = vunpack.c.h.b16 %v274
    %v1073 = vunpack.c.l.b16 %v275
    %v1074 = vunpack.c.h.b16 %v275
    %v1075 = vunpack.c.l.b16 %v276
    %v1076 = vunpack.c.h.b16 %v276
    %v1077 = vunpack.c.l.b16 %v277
    %v1078 = vunpack.c.h.b16 %v277
    %v1079 = vunpack.c.l.b16 %v278
    %v1080 = vunpack.c.h.b16 %v278
    %v1081 = vunpack.c.l.b16 %v279
    %v1082 = vunpack.c.h.b16 %v279
    %v1083 = vunpack.c.l.b16 %v280
    %v1084 = vunpack.c.h.b16 %v280
    %v1085 = vunpack.c.l.b16 %v281
    %v1086 = vunpack.c.h.b16 %v281
    %v1087 = vunpack.c.l.b16 %v282
    %v1088 = vunpack.c.h.b16 %v282
    %v1089 = vunpack.c.l.b16 %v283
    %v1090 = vunpack.c.h.b16 %v283
    %v1091 = vunpack.c.l.b16 %v284
    %v1092 = vunpack.c.h.b16 %v284
    %v1093 = vunpack.c.l.b16 %v285
    %v1094 = vunpack.c.h.b16 %v285
    %v1095 = vunpack.c.l.b16 %v286
    %v1096 = vunpack.c.h.b16 %v286
    %v1097 = vunpack.c.l.b16 %v287
    %v1098 = vunpack.c.h.b16 %v287
    %v1099 = vunpack.c.l.b16 %v288
    %v1100 = vunpack.c.h.b16 %v288
    %v1101 = vunpack.c.l.b16 %v289
    %v1102 = vunpack.c.h.b16 %v289
    %v1103 = vunpack.c.l.b16 %v290
    %v1104 = vunpack.c.h.b16 %v290
    %v1105 = vunpack.c.l.b16 %v291
    %v1106 = vunpack.c.h.b16 %v291
    %v1107 = vunpack.c.l.b16 %v292
    %v1108 = vunpack.c.h.b16 %v292
    %v1109 = vunpack.c.l.b16 %v293
    %v1110 = vunpack.c.h.b16 %v293
    %v1111 = vunpack.c.l.b16 %v294
    %v1112 = vunpack.c.h.b16 %v294
    %v1113 = vunpack.c.l.b16 %v295
    %v1114 = vunpack.c.h.b16 %v295
    %v1115 = vunpack.c.l.b16 %v296
    %v1116 = vunpack.c.h.b16 %v296
    %v1117 = vunpack.c.l.b16 %v297
    %v1118 = vunpack.c.h.b16 %v297
    %v1119 = vunpack.c.l.b16 %v298
    %v1120 = vunpack.c.h.b16 %v298
    %v1121 = vunpack.c.l.b16 %v299
    %v1122 = vunpack.c.h.b16 %v299
    %v1123 = vunpack.c.l.b16 %v300
    %v1124 = vunpack.c.h.b16 %v300
    %v1125 = vunpack.c.l.b16 %v301
    %v1126 = vunpack.c.h.b16 %v301
    %v1127 = vunpack.c.l.b16 %v302
    %v1128 = vunpack.c.h.b16 %v302
    %v1129 = vunpack.c.l.b16 %v303
    %v1130 = vunpack.c.h.b16 %v303
    %v1131 = vunpack.c.l.b16 %v304
    %v1132 = vunpack.c.h.b16 %v304
    %v1133 = vunpack.c.l.b16 %v305
    %v1134 = vunpack.c.h.b16 %v305
    %v1135 = vunpack.c.l.b16 %v306
    %v1136 = vunpack.c.h.b16 %v306
    %v1137 = vunpack.c.l.b16 %v307
    %v1138 = vunpack.c.h.b16 %v307
    %v1139 = vunpack.c.l.b16 %v308
    %v1140 = vunpack.c.h.b16 %v308
    %v1141 = vunpack.c.l.b16 %v309
    %v1142 = vunpack.c.h.b16 %v309
    %v1143 = vunpack.c.l.b16 %v310
    %v1144 = vunpack.c.h.b16 %v310
    %v1145 = vunpack.c.l.b16 %v311
    %v1146 = vunpack.c.h.b16 %v311
    %v1147 = vunpack.c.l.b16 %v312
    %v1148 = vunpack.c.h.b16 %v312
    %v1149 = vunpack.c.l.b16 %v313
    %v1150 = vunpack.c.h.b16 %v313
    %v1151 = vunpack.c.l.b16 %v314
    %v1152 = vunpack.c.h.b16 %v314
    %v1153 = vunpack.c.l.b16 %v315
    %v1154 = vunpack.c.h.b16 %v315
    %v1155 = vunpack.c.l.b16 %v316
    %v1156 = vunpack.c.h.b16 %v316
    %v1157 = vunpack.c.l.b16 %v317
    %v1158 = vunpack.c.h.b16 %v317
    %v1159 = vunpack.c.l.b16 %v318
    %v1160 = vunpack.c.h.b16 %v318
    %v1161 = vunpack.c.l.b16 %v319
    %v1162 = vunpack.c.h.b16 %v319
    %v1163 = vunpack.c.l.b16 %v320
    %v1164 = vunpack.c.h.b16 %v320
    %v1165 = vunpack.c.l.b16 %v321
    %v1166 = vunpack.c.h.b16 %v321
    %v1167 = vunpack.c.l.b16 %v322
    %v1168 = vunpack.c.h.b16 %v322
    %v1169 = vunpack.c.l.b16 %v323
    %v1170 = vunpack.c.h.b16 %v323
    %v1171 = vunpack.c.l.b16 %v324
    %v1172 = vunpack.c.h.b16 %v324
    %v1173 = vunpack.c.l.b16 %v325
    %v1174 = vunpack.c.h.b16 %v325
    %v1175 = vunpack.c.l.b16 %v326
    %v1176 = vunpack.c.h.b16 %v326
    %v1177 = vunpack.c.l.b16 %v327
    %v1178 = vunpack.c.h.b16 %v327
    %v1179 = vunpack.c.l.b16 %v328
    %v1180 = vunpack.c.h.b16 %v328
    %v1181 = vunpack.c.l.b16 %v329
    %v1182 = vunpack.c.h.b16 %v329
    %v1183 = vunpack.c.l.b16 %v330
    %v1184 = vunpack.c.h.b16 %v330
    %v1185 = vunpack.c.l.b16 %v331
    %v1186 = vunpack.c.h.b16 %v331
    %v1187 = vunpack.c.l.b16 %v332
    %v1188 = vunpack.c.h.b16 %v332
    %v1189 = vunpack.c.l.b16 %v333
    %v1190 = vunpack.c.h.b16 %v333
    %v1191 = vunpack.c.l.b16 %v334
    %v1192 = vunpack.c.h.b16 %v334
    %v1193 = vunpack.c.l.b16 %v335
    %v1194 = vunpack.c.h.b16 %v335
    %v1195 = vunpack.c.l.b16 %v336
    %v1196 = vunpack.c.h.b16 %v336
    %v1197 = vunpack.c.l.b16 %v337
    %v1198 = vunpack.c.h.b16 %v337
    %v1199 = vunpack.c.l.b16 %v338
    %v1200 = vunpack.c.h.b16 %v338
    %v1201 = vunpack.c.l.b16 %v339
    %v1202 = vunpack.c.h.b16 %v339
    %v1203 = vunpack.c.l.b16 %v340
    %v1204 = vunpack.c.h.b16 %v340
    %v1205 = vunpack.c.l.b16 %v341
    %v1206 = vunpack.c.h.b16 %v341
    %v1207 = vunpack.c.l.b16 %v342
    %v1208 = vunpack.c.h.b16 %v342
    %v1209 = vunpack.c.l.b16 %v343
    %v1210 = vunpack.c.h.b16 %v343
    %v1211 = vunpack.c.l.b16 %v344
    %v1212 = vunpack.c.h.b16 %v344
    %v1213 = vunpack.c.l.b16 %v345
    %v1214 = vunpack.c.h.b16 %v345
    %v1215 = vunpack.c.l.b16 %v346
    %v1216 = vunpack.c.h.b16 %v346
    %v1217 = vunpack.c.l.b16 %v347
    %v1218 = vunpack.c.h.b16 %v347
    %v1219 = vunpack.c.l.b16 %v348
    %v1220 = vunpack.c.h.b16 %v348
    %v1221 = vunpack.c.l.b16 %v349
    %v1222 = vunpack.c.h.b16 %v349
    %v1223 = vunpack.c.l.b16 %v350
    %v1224 = vunpack.c.h.b16 %v350
    %v1225 = vunpack.c.l.b16 %v351
    %v1226 = vunpack.c.h.b16 %v351
    %v1227 = vunpack.c.l.b16 %v352
    %v1228 = vunpack.c.h.b16 %v352
    %v1229 = vunpack.c.l.b16 %v353
    %v1230 = vunpack.c.h.b16 %v353
    %v1231 = vunpack.c.l.b16 %v354
    %v1232 = vunpack.c.h.b16 %v354
    %v1233 = vunpack.c.l.b16 %v355
    %v1234 = vunpack.c.h.b16 %v355
    %v1235 = vunpack.c.l.b16 %v356
    %v1236 = vunpack.c.h.b16 %v356
    %v1237 = vunpack.c.l.b16 %v357
    %v1238 = vunpack.c.h.b16 %v357
    %v1239 = vunpack.c.l.b16 %v358
    %v1240 = vunpack.c.h.b16 %v358
    %v1241 = vunpack.c.l.b16 %v359
    %v1242 = vunpack.c.h.b16 %v359
    %v1243 = vunpack.c.l.b16 %v360
    %v1244 = vunpack.c.h.b16 %v360
    %v1245 = vunpack.c.l.b16 %v361
    %v1246 = vunpack.c.h.b16 %v361
    %v1247 = vunpack.c.l.b16 %v362
    %v1248 = vunpack.c.h.b16 %v362
    %v1249 = vunpack.c.l.b16 %v363
    %v1250 = vunpack.c.h.b16 %v363
    %v1251 = vunpack.c.l.b16 %v364
    %v1252 = vunpack.c.h.b16 %v364
    %v1253 = vunpack.c.l.b16 %v365
    %v1254 = vunpack.c.h.b16 %v365
    %v1255 = vunpack.c.l.b16 %v366
    %v1256 = vunpack.c.h.b16 %v366
    %v1257 = vunpack.c.l.b16 %v367
    %v1258 = vunpack.c.h.b16 %v367
    %v1259 = vunpack.c.l.b16 %v368
    %v1260 = vunpack.c.h.b16 %v368
    %v1261 = vunpack.c.l.b16 %v369
    %v1262 = vunpack.c.h.b16 %v369
    %v1263 = vunpack.c.l.b16 %v370
    %v1264 = vunpack.c.h.b16 %v370
    %v1265 = vunpack.c.l.b16 %v371
    %v1266 = vunpack.c.h.b16 %v371
    %v1267 = vunpack.c.l.b16 %v372
    %v1268 = vunpack.c.h.b16 %v372
    %v1269 = vunpack.c.l.b16 %v373
    %v1270 = vunpack.c.h.b16 %v373
    %v1271 = vunpack.c.l.b16 %v374
    %v1272 = vunpack.c.h.b16 %v374
    %v1273 = vunpack.c.l.b16 %v375
    %v1274 = vunpack.c.h.b16 %v375
    %v1275 = vunpack.c.l.b16 %v376
    %v1276 = vunpack.c.h.b16 %v376
    %v1277 = vunpack.c.l.b16 %v377
    %v1278 = vunpack.c.h.b16 %v377
    %v1279 = vunpack.c.l.b16 %v378
    %v1280 = vunpack.c.h.b16 %v378
    %v1281 = vunpack.c.l.b16 %v379
    %v1282 = vunpack.c.h.b16 %v379
    %v1283 = vunpack.c.l.b16 %v380
    %v1284 = vunpack.c.h.b16 %v380
    %v1285 = vunpack.c.l.b16 %v381
    %v1286 = vunpack.c.h.b16 %v381
    %v1287 = vunpack.c.l.b16 %v382
    %v1288 = vunpack.c.h.b16 %v382
    %v1289 = vunpack.c.l.b16 %v383
    %v1290 = vunpack.c.h.b16 %v383
    %v1291 = vunpack.c.l.b16 %v384
    %v1292 = vunpack.c.h.b16 %v384
    %v1293 = vunpack.c.l.b16 %v385
    %v1294 = vunpack.c.h.b16 %v385
    %v1295 = vunpack.c.l.b16 %v386
    %v1296 = vunpack.c.h.b16 %v386
    %v1297 = vunpack.c.l.b16 %v387
    %v1298 = vunpack.c.h.b16 %v387
    %v1299 = vunpack.c.l.b16 %v388
    %v1300 = vunpack.c.h.b16 %v388
    %v1301 = vunpack.c.l.b16 %v389
    %v1302 = vunpack.c.h.b16 %v389
    %v1303 = vunpack.c.l.b16 %v390
    %v1304 = vunpack.c.h.b16 %v390
    %v1305 = vunpack.c.l.b16 %v391
    %v1306 = vunpack.c.h.b16 %v391
    %v1307 = vunpack.c.l.b16 %v392
    %v1308 = vunpack.c.h.b16 %v392
    %v1309 = vunpack.c.l.b16 %v393
    %v1310 = vunpack.c.h.b16 %v393
    %v1311 = vunpack.c.l.b16 %v394
    %v1312 = vunpack.c.h.b16 %v394
    %v1313 = vunpack.c.l.b16 %v395
    %v1314 = vunpack.c.h.b16 %v395
    %v1315 = vunpack.c.l.b16 %v396
    %v1316 = vunpack.c.h.b16 %v396
    %v1317 = vunpack.c.l.b16 %v397
    %v1318 = vunpack.c.h.b16 %v397
    %v1319 = vunpack.c.l.b16 %v398
    %v1320 = vunpack.c.h.b16 %v398
    %v1321 = vunpack.c.l.b16 %v399
    %v1322 = vunpack.c.h.b16 %v399
    %v1323 = vunpack.c.l.b16 %v400
    %v1324 = vunpack.c.h.b16 %v400
    %v1325 = vunpack.c.l.b16 %v401
    %v1326 = vunpack.c.h.b16 %v401
    %v1327 = vunpack.c.l.b16 %v402
    %v1328 = vunpack.c.h.b16 %v402
    %v1329 = vunpack.c.l.b16 %v403
    %v1330 = vunpack.c.h.b16 %v403
    %v1331 = vunpack.c.l.b16 %v404
    %v1332 = vunpack.c.h.b16 %v404
    %v1333 = vunpack.c.l.b16 %v405
    %v1334 = vunpack.c.h.b16 %v405
    %v1335 = vunpack.c.l.b16 %v406
    %v1336 = vunpack.c.h.b16 %v406
    %v1337 = vunpack.c.l.b16 %v407
    %v1338 = vunpack.c.h.b16 %v407
    %v1339 = vunpack.c.l.b16 %v408
    %v1340 = vunpack.c.h.b16 %v408
    %v1341 = vunpack.c.l.b16 %v409
    %v1342 = vunpack.c.h.b16 %v409
    %v1343 = vunpack.c.l.b16 %v410
    %v1344 = vunpack.c.h.b16 %v410
    %v1345 = vunpack.c.l.b16 %v411
    %v1346 = vunpack.c.h.b16 %v411
    %v1347 = vunpack.c.l.b16 %v412
    %v1348 = vunpack.c.h.b16 %v412
    %v1349 = vunpack.c.l.b16 %v413
    %v1350 = vunpack.c.h.b16 %v413
    %v1351 = vunpack.c.l.b16 %v414
    %v1352 = vunpack.c.h.b16 %v414
    %v1353 = vunpack.c.l.b16 %v415
    %v1354 = vunpack.c.h.b16 %v415
    %v1355 = vunpack.c.l.b16 %v416
    %v1356 = vunpack.c.h.b16 %v416
    %v1357 = vunpack.c.l.b16 %v417
    %v1358 = vunpack.c.h.b16 %v417
    %v1359 = vunpack.c.l.b16 %v418
    %v1360 = vunpack.c.h.b16 %v418
    %v1361 = vunpack.c.l.b16 %v419
    %v1362 = vunpack.c.h.b16 %v419
    %v1363 = vunpack.c.l.b16 %v420
    %v1364 = vunpack.c.h.b16 %v420
    %v1365 = vunpack.c.l.b16 %v421
    %v1366 = vunpack.c.h.b16 %v421
    %v1367 = vunpack.c.l.b16 %v422
    %v1368 = vunpack.c.h.b16 %v422
    %v1369 = vunpack.c.l.b16 %v423
    %v1370 = vunpack.c.h.b16 %v423
    %v1371 = vunpack.c.l.b16 %v424
    %v1372 = vunpack.c.h.b16 %v424
    %v1373 = vunpack.c.l.b16 %v425
    %v1374 = vunpack.c.h.b16 %v425
    %v1375 = vunpack.c.l.b16 %v426
    %v1376 = vunpack.c.h.b16 %v426
    %v1377 = vunpack.c.l.b16 %v427
    %v1378 = vunpack.c.h.b16 %v427
    %v1379 = vunpack.c.l.b16 %v428
    %v1380 = vunpack.c.h.b16 %v428
    %v1381 = vunpack.c.l.b16 %v429
    %v1382 = vunpack.c.h.b16 %v429
    %v1383 = vunpack.c.l.b16 %v430
    %v1384 = vunpack.c.h.b16 %v430
    %v1385 = vunpack.c.l.b16 %v431
    %v1386 = vunpack.c.h.b16 %v431
    %v1387 = vunpack.c.l.b16 %v432
    %v1388 = vunpack.c.h.b16 %v432
    %v1389 = vunpack.c.l.b16 %v433
    %v1390 = vunpack.c.h.b16 %v433
    %v1391 = vunpack.c.l.b16 %v434
    %v1392 = vunpack.c.h.b16 %v434
    %v1393 = vunpack.c.l.b16 %v435
    %v1394 = vunpack.c.h.b16 %v435
    %v1395 = vunpack.c.l.b16 %v436
    %v1396 = vunpack.c.h.b16 %v436
    %v1397 = vunpack.c.l.b16 %v437
    %v1398 = vunpack.c.h.b16 %v437
    %v1399 = vunpack.c.l.b16 %v438
    %v1400 = vunpack.c.h.b16 %v438
    %v1401 = vunpack.c.l.b16 %v439
    %v1402 = vunpack.c.h.b16 %v439
    %v1403 = vunpack.c.l.b16 %v440
    %v1404 = vunpack.c.h.b16 %v440
    %v1405 = vunpack.c.l.b16 %v441
    %v1406 = vunpack.c.h.b16 %v441
    %v1407 = vunpack.c.l.b16 %v442
    %v1408 = vunpack.c.h.b16 %v442
    %v1409 = vunpack.c.l.b16 %v443
    %v1410 = vunpack.c.h.b16 %v443
    %v1411 = vunpack.c.l.b16 %v444
    %v1412 = vunpack.c.h.b16 %v444
    %v1413 = vunpack.c.l.b16 %v445
    %v1414 = vunpack.c.h.b16 %v445
    %v1415 = vunpack.c.l.b16 %v446
    %v1416 = vunpack.c.h.b16 %v446
    %v1417 = vunpack.c.l.b16 %v447
    %v1418 = vunpack.c.h.b16 %v447
    %v1419 = vunpack.c.l.b16 %v448
    %v1420 = vunpack.c.h.b16 %v448
    %v1421 = vunpack.c.l.b16 %v449
    %v1422 = vunpack.c.h.b16 %v449
    %v1423 = vunpack.c.l.b16 %v450
    %v1424 = vunpack.c.h.b16 %v450
    %v1425 = vunpack.c.l.b16 %v451
    %v1426 = vunpack.c.h.b16 %v451
    %v1427 = vunpack.c.l.b16 %v452
    %v1428 = vunpack.c.h.b16 %v452
    %v1429 = vunpack.c.l.b16 %v453
    %v1430 = vunpack.c.h.b16 %v453
    %v1431 = vunpack.c.l.b16 %v454
    %v1432 = vunpack.c.h.b16 %v454
    %v1433 = vunpack.c.l.b16 %v455
    %v1434 = vunpack.c.h.b16 %v455
    %v1435 = vunpack.c.l.b16 %v456
    %v1436 = vunpack.c.h.b16 %v456
    %v1437 = vunpack.c.l.b16 %v457
    %v1438 = vunpack.c.h.b16 %v457
    %v1439 = vunpack.c.l.b16 %v458
    %v1440 = vunpack.c.h.b16 %v458
    %v1441 = vunpack.c.l.b16 %v459
    %v1442 = vunpack.c.h.b16 %v459
    %v1443 = vunpack.c.l.b16 %v460
    %v1444 = vunpack.c.h.b16 %v460
    %v1445 = vunpack.c.l.b16 %v461
    %v1446 = vunpack.c.h.b16 %v461
    %v1447 = vunpack.c.l.b16 %v462
    %v1448 = vunpack.c.h.b16 %v462
    %v1449 = vunpack.c.l.b16 %v463
    %v1450 = vunpack.c.h.b16 %v463
    %v1451 = vunpack.c.l.b16 %v464
    %v1452 = vunpack.c.h.b16 %v464
    %v1453 = vunpack.c.l.b16 %v465
    %v1454 = vunpack.c.h.b16 %v465
    %v1455 = vunpack.c.l.b16 %v466
    %v1456 = vunpack.c.h.b16 %v466
    %v1457 = vunpack.c.l.b16 %v467
    %v1458 = vunpack.c.h.b16 %v467
    %v1459 = vunpack.c.l.b16 %v468
    %v1460 = vunpack.c.h.b16 %v468
    %v1461 = vunpack.c.l.b16 %v469
    %v1462 = vunpack.c.h.b16 %v469
    %v1463 = vunpack.c.l.b16 %v470
    %v1464 = vunpack.c.h.b16 %v470
    %v1465 = vunpack.c.l.b16 %v471
    %v1466 = vunpack.c.h.b16 %v471
    %v1467 = vunpack.c.l.b16 %v472
    %v1468 = vunpack.c.h.b16 %v472
    %v1469 = vunpack.c.l.b16 %v473
    %v1470 = vunpack.c.h.b16 %v473
    %v1471 = vunpack.c.l.b16 %v474
    %v1472 = vunpack.c.h.b16 %v474
    %v1473 = vunpack.c.l.b16 %v475
    %v1474 = vunpack.c.h.b16 %v475
    %v1475 = vunpack.c.l.b16 %v476
    %v1476 = vunpack.c.h.b16 %v476
    %v1477 = vunpack.c.l.b16 %v477
    %v1478 = vunpack.c.h.b16 %v477
    %v1479 = vunpack.c.l.b16 %v478
    %v1480 = vunpack.c.h.b16 %v478
    %v1481 = vunpack.c.l.b16 %v479
    %v1482 = vunpack.c.h.b16 %v479
    %v1483 = vunpack.c.l.b16 %v480
    %v1484 = vunpack.c.h.b16 %v480
    %v1485 = vunpack.c.l.b16 %v481
    %v1486 = vunpack.c.h.b16 %v481
    %v1487 = vunpack.c.l.b16 %v482
    %v1488 = vunpack.c.h.b16 %v482
    %v1489 = vunpack.c.l.b16 %v483
    %v1490 = vunpack.c.h.b16 %v483
    %v1491 = vunpack.c.l.b16 %v484
    %v1492 = vunpack.c.h.b16 %v484
    %v1493 = vunpack.c.l.b16 %v485
    %v1494 = vunpack.c.h.b16 %v485
    %v1495 = vunpack.c.l.b16 %v486
    %v1496 = vunpack.c.h.b16 %v486
    %v1497 = vunpack.c.l.b16 %v487
    %v1498 = vunpack.c.h.b16 %v487
    %v1499 = vunpack.c.l.b16 %v488
    %v1500 = vunpack.c.h.b16 %v488
    %v1501 = vunpack.c.l.b16 %v489
    %v1502 = vunpack.c.h.b16 %v489
    %v1503 = vunpack.c.l.b16 %v490
    %v1504 = vunpack.c.h.b16 %v490
    %v1505 = vunpack.c.l.b16 %v491
    %v1506 = vunpack.c.h.b16 %v491
    %v1507 = vunpack.c.l.b16 %v492
    %v1508 = vunpack.c.h.b16 %v492
    %v1509 = vunpack.c.l.b16 %v493
    %v1510 = vunpack.c.h.b16 %v493
    %v1511 = vunpack.c.l.b16 %v494
    %v1512 = vunpack.c.h.b16 %v494
    %v1513 = vunpack.c.l.b16 %v495
    %v1514 = vunpack.c.h.b16 %v495
    %v1515 = vunpack.c.l.b16 %v496
    %v1516 = vunpack.c.h.b16 %v496
    %v1517 = vunpack.c.l.b16 %v497
    %v1518 = vunpack.c.h.b16 %v497
    %v1519 = vunpack.c.l.b16 %v498
    %v1520 = vunpack.c.h.b16 %v498
    %v1521 = vunpack.c.l.b16 %v499
    %v1522 = vunpack.c.h.b16 %v499
    %v1523 = vunpack.c.l.b16 %v500
    %v1524 = vunpack.c.h.b16 %v500
    %v1525 = vunpack.c.l.b16 %v501
    %v1526 = vunpack.c.h.b16 %v501
    %v1527 = vunpack.c.l.b16 %v502
    %v1528 = vunpack.c.h.b16 %v502
    %v1529 = vunpack.c.l.b16 %v503
    %v1530 = vunpack.c.h.b16 %v503
    %v1531 = vunpack.c.l.b16 %v504
    %v1532 = vunpack.c.h.b16 %v504
    %v1533 = vpack.c.b16 %v901, %v893
    %v1534 = vpack.c.b16 %v902, %v894
    %v1535 = vpack.c.b16 %v903, %v895
    %v1536 = vpack.c.b16 %v904, %v896
    %v1537 = vpack.c.b16 %v905, %v897
    %v1538 = vpack.c.b16 %v906, %v898
    %v1539 = vpack.c.b16 %v907, %v899
    %v1540 = vpack.c.b16 %v908, %v900
    %v1541 = vpack.c.b16 %v917, %v909
    %v1542 = vpack.c.b16 %v918, %v910
    %v1543 = vpack.c.b16 %v919, %v911
    %v1544 = vpack.c.b16 %v920, %v912
    %v1545 = vpack.c.b16 %v921, %v913
    %v1546 = vpack.c.b16 %v922, %v914
    %v1547 = vpack.c.b16 %v923, %v915
    %v1548 = vpack.c.b16 %v924, %v916
    %v1549 = vpack.c.b16 %v933, %v925
    %v1550 = vpack.c.b16 %v934, %v926
    %v1551 = vpack.c.b16 %v935, %v927
    %v1552 = vpack.c.b16 %v936, %v928
    %v1553 = vpack.c.b16 %v937, %v929
    %v1554 = vpack.c.b16 %v938, %v930
    %v1555 = vpack.c.b16 %v939, %v931
    %v1556 = vpack.c.b16 %v940, %v932
    %v1557 = vpack.c.b16 %v949, %v941
    %v1558 = vpack.c.b16 %v950, %v942
    %v1559 = vpack.c.b16 %v951, %v943
    %v1560 = vpack.c.b16 %v952, %v944
    %v1561 = vpack.c.b16 %v953, %v945
    %v1562 = vpack.c.b16 %v954, %v946
    %v1563 = vpack.c.b16 %v955, %v947
    %v1564 = vpack.c.b16 %v956, %v948
    %v1565 = vpack.c.b16 %v965, %v957
    %v1566 = vpack.c.b16 %v966, %v958
    %v1567 = vpack.c.b16 %v967, %v959
    %v1568 = vpack.c.b16 %v968, %v960
    %v1569 = vpack.c.b16 %v969, %v961
    %v1570 = vpack.c.b16 %v970, %v962
    %v1571 = vpack.c.b16 %v971, %v963
    %v1572 = vpack.c.b16 %v972, %v964
    %v1573 = vpack.c.b16 %v981, %v973
    %v1574 = vpack.c.b16 %v982, %v974
    %v1575 = vpack.c.b16 %v983, %v975
    %v1576 = vpack.c.b16 %v984, %v976
    %v1577 = vpack.c.b16 %v985, %v977
    %v1578 = vpack.c.b16 %v986, %v978
    %v1579 = vpack.c.b16 %v987, %v979
    %v1580 = vpack.c.b16 %v988, %v980
    %v1581 = vpack.c.b16 %v997, %v989
    %v1582 = vpack.c.b16 %v998, %v990
    %v1583 = vpack.c.b16 %v999, %v991
    %v1584 = vpack.c.b16 %v1000, %v992
    %v1585 = vpack.c.b16 %v1001, %v993
    %v1586 = vpack.c.b16 %v1002, %v994
    %v1587 = vpack.c.b16 %v1003, %v995
    %v1588 = vpack.c.b16 %v1004, %v996
    %v1589 = vpack.c.b16 %v1013, %v1005
    %v1590 = vpack.c.b16 %v1014, %v1006
    %v1591 = vpack.c.b16 %v1015, %v1007
    %v1592 = vpack.c.b16 %v1016, %v1008
    %v1593 = vpack.c.b16 %v1017, %v1009
    %v1594 = vpack.c.b16 %v1018, %v1010
    %v1595 = vpack.c.b16 %v1019, %v1011
    %v1596 = vpack.c.b16 %v1020, %v1012
    %v1597 = vpack.c.b16 %v1029, %v1021
    %v1598 = vpack.c.b16 %v1030, %v1022
    %v1599 = vpack.c.b16 %v1031, %v1023
    %v1600 = vpack.c.b16 %v1032, %v1024
    %v1601 = vpack.c.b16 %v1033, %v1025
    %v1602 = vpack.c.b16 %v1034, %v1026
    %v1603 = vpack.c.b16 %v1035, %v1027
    %v1604 = vpack.c.b16 %v1036, %v1028
    %v1605 = vpack.c.b16 %v1045, %v1037
    %v1606 = vpack.c.b16 %v1046, %v1038
    %v1607 = vpack.c.b16 %v1047, %v1039
    %v1608 = vpack.c.b16 %v1048, %v1040
    %v1609 = vpack.c.b16 %v1049, %v1041
    %v1610 = vpack.c.b16 %v1050, %v1042
    %v1611 = vpack.c.b16 %v1051, %v1043
    %v1612 = vpack.c.b16 %v1052, %v1044
    %v1613 = vpack.c.b16 %v1061, %v1053
    %v1614 = vpack.c.b16 %v1062, %v1054
    %v1615 = vpack.c.b16 %v1063, %v1055
    %v1616 = vpack.c.b16 %v1064, %v1056
    %v1617 = vpack.c.b16 %v1065, %v1057
    %v1618 = vpack.c.b16 %v1066, %v1058
    %v1619 = vpack.c.b16 %v1067, %v1059
    %v1620 = vpack.c.b16 %v1068, %v1060
    %v1621 = vpack.c.b16 %v1077, %v1069
    %v1622 = vpack.c.b16 %v1078, %v1070
    %v1623 = vpack.c.b16 %v1079, %v1071
    %v1624 = vpack.c.b16 %v1080, %v1072
    %v1625 = vpack.c.b16 %v1081, %v1073
    %v1626 = vpack.c.b16 %v1082, %v1074
    %v1627 = vpack.c.b16 %v1083, %v1075
    %v1628 = vpack.c.b16 %v1084, %v1076
    %v1629 = vpack.c.b16 %v1093, %v1085
    %v1630 = vpack.c.b16 %v1094, %v1086
    %v1631 = vpack.c.b16 %v1095, %v1087
    %v1632 = vpack.c.b16 %v1096, %v1088
    %v1633 = vpack.c.b16 %v1097, %v1089
    %v1634 = vpack.c.b16 %v1098, %v1090
    %v1635 = vpack.c.b16 %v1099, %v1091
    %v1636 = vpack.c.b16 %v1100, %v1092
    %v1637 = vpack.c.b16 %v1109, %v1101
    %v1638 = vpack.c.b16 %v1110, %v1102
    %v1639 = vpack.c.b16 %v1111, %v1103
    %v1640 = vpack.c.b16 %v1112, %v1104
    %v1641 = vpack.c.b16 %v1113, %v1105
    %v1642 = vpack.c.b16 %v1114, %v1106
    %v1643 = vpack.c.b16 %v1115, %v1107
    %v1644 = vpack.c.b16 %v1116, %v1108
    %v1645 = vpack.c.b16 %v1125, %v1117
    %v1646 = vpack.c.b16 %v1126, %v1118
    %v1647 = vpack.c.b16 %v1127, %v1119
    %v1648 = vpack.c.b16 %v1128, %v1120
    %v1649 = vpack.c.b16 %v1129, %v1121
    %v1650 = vpack.c.b16 %v1130, %v1122
    %v1651 = vpack.c.b16 %v1131, %v1123
    %v1652 = vpack.c.b16 %v1132, %v1124
    %v1653 = vpack.c.b16 %v1141, %v1133
    %v1654 = vpack.c.b16 %v1142, %v1134
    %v1655 = vpack.c.b16 %v1143, %v1135
    %v1656 = vpack.c.b16 %v1144, %v1136
    %v1657 = vpack.c.b16 %v1145, %v1137
    %v1658 = vpack.c.b16 %v1146, %v1138
    %v1659 = vpack.c.b16 %v1147, %v1139
    %v1660 = vpack.c.b16 %v1148, %v1140
    %v1661 = vpack.c.b16 %v1157, %v1149
    %v1662 = vpack.c.b16 %v1158, %v1150
    %v1663 = vpack.c.b16 %v1159, %v1151
    %v1664 = vpack.c.b16 %v1160, %v1152
    %v1665 = vpack.c.b16 %v1161, %v1153
    %v1666 = vpack.c.b16 %v1162, %v1154
    %v1667 = vpack.c.b16 %v1163, %v1155
    %v1668 = vpack.c.b16 %v1164, %v1156
    %v1669 = vpack.c.b16 %v1173, %v1165
    %v1670 = vpack.c.b16 %v1174, %v1166
    %v1671 = vpack.c.b16 %v1175, %v1167
    %v1672 = vpack.c.b16 %v1176, %v1168
    %v1673 = vpack.c.b16 %v1177, %v1169
    %v1674 = vpack.c.b16 %v1178, %v1170
    %v1675 = vpack.c.b16 %v1179, %v1171
    %v1676 = vpack.c.b16 %v1180, %v1172
    %v1677 = vpack.c.b16 %v1189, %v1181
    %v1678 = vpack.c.b16 %v1190, %v1182
    %v1679 = vpack.c.b16 %v1191, %v1183
    %v1680 = vpack.c.b16 %v1192, %v1184
    %v1681 = vpack.c.b16 %v1193, %v1185
    %v1682 = vpack.c.b16 %v1194, %v1186
    %v1683 = vpack.c.b16 %v1195, %v1187
    %v1684 = vpack.c.b16 %v1196, %v1188
    %v1685 = vpack.c.b16 %v1205, %v1197
    %v1686 = vpack.c.b16 %v1206, %v1198
    %v1687 = vpack.c.b16 %v1207, %v1199
    %v1688 = vpack.c.b16 %v1208, %v1200
    %v1689 = vpack.c.b16 %v1209, %v1201
    %v1690 = vpack.c.b16 %v1210, %v1202
    %v1691 = vpack.c.b16 %v1211, %v1203
    %v1692 = vpack.c.b16 %v1212, %v1204
    %v1693 = vpack.c.b16 %v1221, %v1213
    %v1694 = vpack.c.b16 %v1222, %v1214
    %v1695 = vpack.c.b16 %v1223, %v1215
    %v1696 = vpack.c.b16 %v1224, %v1216
    %v1697 = vpack.c.b16 %v1225, %v1217
    %v1698 = vpack.c.b16 %v1226, %v1218
    %v1699 = vpack.c.b16 %v1227, %v1219
    %v1700 = vpack.c.b16 %v1228, %v1220
    %v1701 = vpack.c.b16 %v1237, %v1229
    %v1702 = vpack.c.b16 %v1238, %v1230
    %v1703 = vpack.c.b16 %v1239, %v1231
    %v1704 = vpack.c.b16 %v1240, %v1232
    %v1705 = vpack.c.b16 %v1241, %v1233
    %v1706 = vpack.c.b16 %v1242, %v1234
    %v1707 = vpack.c.b16 %v1243, %v1235
    %v1708 = vpack.c.b16 %v1244, %v1236
    %v1709 = vpack.c.b16 %v1253, %v1245
    %v1710 = vpack.c.b16 %v1254, %v1246
    %v1711 = vpack.c.b16 %v1255, %v1247
    %v1712 = vpack.c.b16 %v1256, %v1248
    %v1713 = vpack.c.b16 %v1257, %v1249
    %v1714 = vpack.c.b16 %v1258, %v1250
    %v1715 = vpack.c.b16 %v1259, %v1251
    %v1716 = vpack.c.b16 %v1260, %v1252
    %v1717 = vpack.c.b16 %v1269, %v1261
    %v1718 = vpack.c.b16 %v1270, %v1262
    %v1719 = vpack.c.b16 %v1271, %v1263
    %v1720 = vpack.c.b16 %v1272, %v1264
    %v1721 = vpack.c.b16 %v1273, %v1265
    %v1722 = vpack.c.b16 %v1274, %v1266
    %v1723 = vpack.c.b16 %v1275, %v1267
    %v1724 = vpack.c.b16 %v1276, %v1268
    %v1725 = vpack.c.b16 %v1285, %v1277
    %v1726 = vpack.c.b16 %v1286, %v1278
    %v1727 = vpack.c.b16 %v1287, %v1279
    %v1728 = vpack.c.b16 %v1288, %v1280
    %v1729 = vpack.c.b16 %v1289, %v1281
    %v1730 = vpack.c.b16 %v1290, %v1282
    %v1731 = vpack.c.b16 %v1291, %v1283
    %v1732 = vpack.c.b16 %v1292, %v1284
    %v1733 = vpack.c.b16 %v1301, %v1293
    %v1734 = vpack.c.b16 %v1302, %v1294
    %v1735 = vpack.c.b16 %v1303, %v1295
    %v1736 = vpack.c.b16 %v1304, %v1296
    %v1737 = vpack.c.b16 %v1305, %v1297
    %v1738 = vpack.c.b16 %v1306, %v1298
    %v1739 = vpack.c.b16 %v1307, %v1299
    %v1740 = vpack.c.b16 %v1308, %v1300
    %v1741 = vpack.c.b16 %v1317, %v1309
    %v1742 = vpack.c.b16 %v1318, %v1310
    %v1743 = vpack.c.b16 %v1319, %v1311
    %v1744 = vpack.c.b16 %v1320, %v1312
    %v1745 = vpack.c.b16 %v1321, %v1313
    %v1746 = vpack.c.b16 %v1322, %v1314
    %v1747 = vpack.c.b16 %v1323, %v1315
    %v1748 = vpack.c.b16 %v1324, %v1316
    %v1749 = vpack.c.b16 %v1333, %v1325
    %v1750 = vpack.c.b16 %v1334, %v1326
    %v1751 = vpack.c.b16 %v1335, %v1327
    %v1752 = vpack.c.b16 %v1336, %v1328
    %v1753 = vpack.c.b16 %v1337, %v1329
    %v1754 = vpack.c.b16 %v1338, %v1330
    %v1755 = vpack.c.b16 %v1339, %v1331
    %v1756 = vpack.c.b16 %v1340, %v1332
    %v1757 = vpack.c.b16 %v1349, %v1341
    %v1758 = vpack.c.b16 %v1350, %v1342
    %v1759 = vpack.c.b16 %v1351, %v1343
    %v1760 = vpack.c.b16 %v1352, %v1344
    %v1761 = vpack.c.b16 %v1353, %v1345
    %v1762 = vpack.c.b16 %v1354, %v1346
    %v1763 = vpack.c.b16 %v1355, %v1347
    %v1764 = vpack.c.b16 %v1356, %v1348
    %v1765 = vpack.c.b16 %v1365, %v1357
    %v1766 = vpack.c.b16 %v1366, %v1358
    %v1767 = vpack.c.b16 %v1367, %v1359
    %v1768 = vpack.c.b16 %v1368, %v1360
    %v1769 = vpack.c.b16 %v1369, %v1361
    %v1770 = vpack.c.b16 %v1370, %v1362
    %v1771 = vpack.c.b16 %v1371, %v1363
    %v1772 = vpack.c.b16 %v1372, %v1364
    %v1773 = vpack.c.b16 %v1381, %v1373
    %v1774 = vpack.c.b16 %v1382, %v1374
    %v1775 = vpack.c.b16 %v1383, %v1375
    %v1776 = vpack.c.b16 %v1384, %v1376
    %v1777 = vpack.c.b16 %v1385, %v1377
    %v1778 = vpack.c.b16 %v1386, %v1378
    %v1779 = vpack.c.b16 %v1387, %v1379
    %v1780 = vpack.c.b16 %v1388, %v1380
    %v1781 = vpack.c.b16 %v1397, %v1389
    %v1782 = vpack.c.b16 %v1398, %v1390
    %v1783 = vpack.c.b16 %v1399, %v1391
    %v1784 = vpack.c.b16 %v1400, %v1392
    %v1785 = vpack.c.b16 %v1401, %v1393
    %v1786 = vpack.c.b16 %v1402, %v1394
    %v1787 = vpack.c.b16 %v1403, %v1395
    %v1788 = vpack.c.b16 %v1404, %v1396
    %v1789 = vpack.c.b16 %v1413, %v1405
    %v1790 = vpack.c.b16 %v1414, %v1406
    %v1791 = vpack.c.b16 %v1415, %v1407
    %v1792 = vpack.c.b16 %v1416, %v1408
    %v1793 = vpack.c.b16 %v1417, %v1409
    %v1794 = vpack.c.b16 %v1418, %v1410
    %v1795 = vpack.c.b16 %v1419, %v1411
    %v1796 = vpack.c.b16 %v1420, %v1412
    %v1797 = vpack.c.b16 %v1429, %v1421
    %v1798 = vpack.c.b16 %v1430, %v1422
    %v1799 = vpack.c.b16 %v1431, %v1423
    %v1800 = vpack.c.b16 %v1432, %v1424
    %v1801 = vpack.c.b16 %v1433, %v1425
    %v1802 = vpack.c.b16 %v1434, %v1426
    %v1803 = vpack.c.b16 %v1435, %v1427
    %v1804 = vpack.c.b16 %v1436, %v1428
    %v1805 = vpack.c.b16 %v1445, %v1437
    %v1806 = vpack.c.b16 %v1446, %v1438
    %v1807 = vpack.c.b16 %v1447, %v1439
    %v1808 = vpack.c.b16 %v1448, %v1440
    %v1809 = vpack.c.b16 %v1449, %v1441
    %v1810 = vpack.c.b16 %v1450, %v1442
    %v1811 = vpack.c.b16 %v1451, %v1443
    %v1812 = vpack.c.b16 %v1452, %v1444
    %v1813 = vpack.c.b16 %v1461, %v1453
    %v1814 = vpack.c.b16 %v1462, %v1454
    %v1815 = vpack.c.b16 %v1463, %v1455
    %v1816 = vpack.c.b16 %v1464, %v1456
    %v1817 = vpack.c.b16 %v1465, %v1457
    %v1818 = vpack.c.b16 %v1466, %v1458
    %v1819 = vpack.c.b16 %v1467, %v1459
    %v1820 = vpack.c.b16 %v1468, %v1460
    %v1821 = vpack.c.b16 %v1477, %v1469
    %v1822 = vpack.c.b16 %v1478, %v1470
    %v1823 = vpack.c.b16 %v1479, %v1471
    %v1824 = vpack.c.b16 %v1480, %v1472
    %v1825 = vpack.c.b16 %v1481, %v1473
    %v1826 = vpack.c.b16 %v1482, %v1474
    %v1827 = vpack.c.b16 %v1483, %v1475
    %v1828 = vpack.c.b16 %v1484, %v1476
    %v1829 = vpack.c.b16 %v1493, %v1485
    %v1830 = vpack.c.b16 %v1494, %v1486
    %v1831 = vpack.c.b16 %v1495, %v1487
    %v1832 = vpack.c.b16 %v1496, %v1488
    %v1833 = vpack.c.b16 %v1497, %v1489
    %v1834 = vpack.c.b16 %v1498, %v1490
    %v1835 = vpack.c.b16 %v1499, %v1491
    %v1836 = vpack.c.b16 %v1500, %v1492
    %v1837 = vpack.c.b16 %v1509, %v1501
    %v1838 = vpack.c.b16 %v1510, %v1502
    %v1839 = vpack.c.b16 %v1511, %v1503
    %v1840 = vpack.c.b16 %v1512, %v1504
    %v1841 = vpack.c.b16 %v1513, %v1505
    %v1842 = vpack.c.b16 %v1514, %v1506
    %v1843 = vpack.c.b16 %v1515, %v1507
    %v1844 = vpack.c.b16 %v1516, %v1508
    %v1845 = vpack.c.b16 %v1525, %v1517
    %v1846 = vpack.c.b16 %v1526, %v1518
    %v1847 = vpack.c.b16 %v1527, %v1519
    %v1848 = vpack.c.b16 %v1528, %v1520
    %v1849 = vpack.c.b16 %v1529, %v1521
    %v1850 = vpack.c.b16 %v1530, %v1522
    %v1851 = vpack.c.b16 %v1531, %v1523
    %v1852 = vpack.c.b16 %v1532, %v1524
    %2173 = vmatprep.subr.bf16.mxu0 %v1534
    %2174 = vmatpush1.bf16.msra.mxu0 %v1533
    %2175 = vmatprep.subr.bf16.mxu0 %v1542
    %2176 = vmatpush1.bf16.msra.mxu0 %v1541
    %2177 = vmatprep.subr.bf16.mxu0 %v1550
    %2178 = vmatpush1.bf16.msra.mxu0 %v1549
    %2179 = vmatprep.subr.bf16.mxu0 %v1558
    %2180 = vmatpush1.bf16.msra.mxu0 %v1557
    %2181 = vmatprep.subr.bf16.mxu0 %v1566
    %2182 = vmatpush1.bf16.msra.mxu0 %v1565
    %2183 = vmatprep.subr.bf16.mxu0 %v1574
    %2184 = vmatpush1.bf16.msra.mxu0 %v1573
    %2185 = vmatprep.subr.bf16.mxu0 %v1582
    %2186 = vmatpush1.bf16.msra.mxu0 %v1581
    %2187 = vmatprep.subr.bf16.mxu0 %v1590
    %2188 = vmatpush1.bf16.msra.mxu0 %v1589
    %2189 = vmatprep.subr.bf16.mxu0 %v1598
    %2190 = vmatpush1.bf16.msra.mxu0 %v1597
    %2191 = vmatprep.subr.bf16.mxu0 %v1606
    %2192 = vmatpush1.bf16.msra.mxu0 %v1605
    %2193 = vmatprep.subr.bf16.mxu0 %v1614
    %2194 = vmatpush1.bf16.msra.mxu0 %v1613
    %2195 = vmatprep.subr.bf16.mxu0 %v1622
    %2196 = vmatpush1.bf16.msra.mxu0 %v1621
    %2197 = vmatprep.subr.bf16.mxu0 %v1630
    %2198 = vmatpush1.bf16.msra.mxu0 %v1629
    %2199 = vmatprep.subr.bf16.mxu0 %v1638
    %2200 = vmatpush1.bf16.msra.mxu0 %v1637
    %2201 = vmatprep.subr.bf16.mxu0 %v1646
    %2202 = vmatpush1.bf16.msra.mxu0 %v1645
    %2203 = vmatprep.subr.bf16.mxu0 %v1654
    %2204 = vmatpush1.bf16.msra.mxu0 %v1653
    %2205 = vmatprep.mubr.bf16.mxu0 %v564
    %2206 = vmatmul.mubr.bf16.gmra.mrb[0].mxu0 %v563
    %v2207 = vpop.f32.mrb[0].mxu0
    %v2208 = vadd.f32 %v510, %v2207
    %v2209 = vpop.f32.mrb[0].mxu0
    %v2210 = vadd.f32 %v514, %v2209
    %v2211 = vpop.f32.mrb[0].mxu0
    %v2212 = vadd.f32 %v510, %v2211
    %v2213 = vpop.f32.mrb[0].mxu0
    %v2214 = vadd.f32 %v514, %v2213
    %2215 = vdwg.mxu0
    %2216 = vmatprep.subr.bf16.mxu0 %v1662
    %2217 = vmatpush1.bf16.msra.mxu0 %v1661
    %2218 = vmatprep.subr.bf16.mxu0 %v1670
    %2219 = vmatpush1.bf16.msra.mxu0 %v1669
    %2220 = vmatprep.subr.bf16.mxu0 %v1678
    %2221 = vmatpush1.bf16.msra.mxu0 %v1677
    %2222 = vmatprep.subr.bf16.mxu0 %v1686
    %2223 = vmatpush1.bf16.msra.mxu0 %v1685
    %2224 = vmatprep.subr.bf16.mxu0 %v1694
    %2225 = vmatpush1.bf16.msra.mxu0 %v1693
    %2226 = vmatprep.subr.bf16.mxu0 %v1702
    %2227 = vmatpush1.bf16.msra.mxu0 %v1701
    %2228 = vmatprep.subr.bf16.mxu0 %v1710
    %2229 = vmatpush1.bf16.msra.mxu0 %v1709
    %2230 = vmatprep.subr.bf16.mxu0 %v1718
    %2231 = vmatpush1.bf16.msra.mxu0 %v1717
    %2232 = vmatprep.subr.bf16.mxu0 %v1726
    %2233 = vmatpush1.bf16.msra.mxu0 %v1725
    %2234 = vmatprep.subr.bf16.mxu0 %v1734
    %2235 = vmatpush1.bf16.msra.mxu0 %v1733
    %2236 = vmatprep.subr.bf16.mxu0 %v1742
    %2237 = vmatpush1.bf16.msra.mxu0 %v1741
    %2238 = vmatprep.subr.bf16.mxu0 %v1750
    %2239 = vmatpush1.bf16.msra.mxu0 %v1749
    %2240 = vmatprep.subr.bf16.mxu0 %v1758
    %2241 = vmatpush1.bf16.msra.mxu0 %v1757
    %2242 = vmatprep.subr.bf16.mxu0 %v1766
    %2243 = vmatpush1.bf16.msra.mxu0 %v1765
    %2244 = vmatprep.subr.bf16.mxu0 %v1774
    %2245 = vmatpush1.bf16.msra.mxu0 %v1773
    %2246 = vmatprep.subr.bf16.mxu0 %v1782
    %2247 = vmatpush1.bf16.msra.mxu0 %v1781
    %2248 = vmatprep.mubr.bf16.mxu0 %v566
    %2249 = vmatmul.mubr.bf16.gmra.mrb[0].mxu0 %v565
    %v2250 = vpop.f32.mrb[0].mxu0
    %v2251 = vadd.f32 %v2208, %v2250
    %v2252 = vpop.f32.mrb[0].mxu0
    %v2253 = vadd.f32 %v2210, %v2252
    %v2254 = vpop.f32.mrb[0].mxu0
    %v2255 = vadd.f32 %v2212, %v2254
    %v2256 = vpop.f32.mrb[0].mxu0
    %v2257 = vadd.f32 %v2214, %v2256
    %2258 = vdwg.mxu0
    %2259 = vmatprep.subr.bf16.mxu0 %v1790
    %2260 = vmatpush1.bf16.msra.mxu0 %v1789
    %2261 = vmatprep.subr.bf16.mxu0 %v1798
    %2262 = vmatpush1.bf16.msra.mxu0 %v1797
    %2263 = vmatprep.subr.bf16.mxu0 %v1806
    %2264 = vmatpush1.bf16.msra.mxu0 %v1805
    %2265 = vmatprep.subr.bf16.mxu0 %v1814
    %2266 = vmatpush1.bf16.msra.mxu0 %v1813
    %2267 = vmatprep.subr.bf16.mxu0 %v1822
    %2268 = vmatpush1.bf16.msra.mxu0 %v1821
    %2269 = vmatprep.subr.bf16.mxu0 %v1830
    %2270 = vmatpush1.bf16.msra.mxu0 %v1829
    %2271 = vmatprep.subr.bf16.mxu0 %v1838
    %2272 = vmatpush1.bf16.msra.mxu0 %v1837
    %2273 = vmatprep.subr.bf16.mxu0 %v1846
    %2274 = vmatpush1.bf16.msra.mxu0 %v1845
    %2275 = vmatprep.subr.bf16.mxu0 0
    %2276 = vmatpush1.bf16.msra.mxu0 0
    %2277 = vmatprep.subr.bf16.mxu0 0
    %2278 = vmatpush1.bf16.msra.mxu0 0
    %2279 = vmatprep.subr.bf16.mxu0 0
    %2280 = vmatpush1.bf16.msra.mxu0 0
    %2281 = vmatprep.subr.bf16.mxu0 0
    %2282 = vmatpush1.bf16.msra.mxu0 0
    %2283 = vmatprep.subr.bf16.mxu0 0
    %2284 = vmatpush1.bf16.msra.mxu0 0
    %2285 = vmatprep.subr.bf16.mxu0 0
    %2286 = vmatpush1.bf16.msra.mxu0 0
    %2287 = vmatprep.subr.bf16.mxu0 0
    %2288 = vmatpush1.bf16.msra.mxu0 0
    %2289 = vmatprep.subr.bf16.mxu0 0
    %2290 = vmatpush1.bf16.msra.mxu0 0
    %2291 = vmatprep.mubr.bf16.mxu0 0
    %2292 = vmatmul.mubr.bf16.gmra.mrb[0].mxu0 %v567
    %v2293 = vpop.f32.mrb[0].mxu0
    %v2294 = vadd.f32 %v2251, %v2293
    %v2295 = vpop.f32.mrb[0].mxu0
    %v2296 = vadd.f32 %v2253, %v2295
    %v2297 = vpop.f32.mrb[0].mxu0
    %v2298 = vadd.f32 %v2255, %v2297
    %v2299 = vpop.f32.mrb[0].mxu0
    %v2300 = vadd.f32 %v2257, %v2299
    %2301 = vdwg.mxu0
    %2302 = vmatprep.subr.bf16.mxu0 %v1536
    %2303 = vmatpush1.bf16.msra.mxu0 %v1535
    %2304 = vmatprep.subr.bf16.mxu0 %v1544
    %2305 = vmatpush1.bf16.msra.mxu0 %v1543
    %2306 = vmatprep.subr.bf16.mxu0 %v1552
    %2307 = vmatpush1.bf16.msra.mxu0 %v1551
    %2308 = vmatprep.subr.bf16.mxu0 %v1560
    %2309 = vmatpush1.bf16.msra.mxu0 %v1559
    %2310 = vmatprep.subr.bf16.mxu0 %v1568
    %2311 = vmatpush1.bf16.msra.mxu0 %v1567
    %2312 = vmatprep.subr.bf16.mxu0 %v1576
    %2313 = vmatpush1.bf16.msra.mxu0 %v1575
    %2314 = vmatprep.subr.bf16.mxu0 %v1584
    %2315 = vmatpush1.bf16.msra.mxu0 %v1583
    %2316 = vmatprep.subr.bf16.mxu0 %v1592
    %2317 = vmatpush1.bf16.msra.mxu0 %v1591
    %2318 = vmatprep.subr.bf16.mxu0 %v1600
    %2319 = vmatpush1.bf16.msra.mxu0 %v1599
    %2320 = vmatprep.subr.bf16.mxu0 %v1608
    %2321 = vmatpush1.bf16.msra.mxu0 %v1607
    %2322 = vmatprep.subr.bf16.mxu0 %v1616
    %2323 = vmatpush1.bf16.msra.mxu0 %v1615
    %2324 = vmatprep.subr.bf16.mxu0 %v1624
    %2325 = vmatpush1.bf16.msra.mxu0 %v1623
    %2326 = vmatprep.subr.bf16.mxu0 %v1632
    %2327 = vmatpush1.bf16.msra.mxu0 %v1631
    %2328 = vmatprep.subr.bf16.mxu0 %v1640
    %2329 = vmatpush1.bf16.msra.mxu0 %v1639
    %2330 = vmatprep.subr.bf16.mxu0 %v1648
    %2331 = vmatpush1.bf16.msra.mxu0 %v1647
    %2332 = vmatprep.subr.bf16.mxu0 %v1656
    %2333 = vmatpush1.bf16.msra.mxu0 %v1655
    %2334 = vmatprep.mubr.bf16.mxu0 %v564
    %2335 = vmatmul.mubr.bf16.gmra.mrb[0].mxu0 %v563
    %v2336 = vpop.f32.mrb[0].mxu0
    %v2337 = vadd.f32 %v518, %v2336
    %v2338 = vpop.f32.mrb[0].mxu0
    %v2339 = vadd.f32 %v522, %v2338
    %v2340 = vpop.f32.mrb[0].mxu0
    %v2341 = vadd.f32 %v518, %v2340
    %v2342 = vpop.f32.mrb[0].mxu0
    %v2343 = vadd.f32 %v522, %v2342
    %2344 = vdwg.mxu0
    %2345 = vmatprep.subr.bf16.mxu0 %v1664
    %2346 = vmatpush1.bf16.msra.mxu0 %v1663
    %2347 = vmatprep.subr.bf16.mxu0 %v1672
    %2348 = vmatpush1.bf16.msra.mxu0 %v1671
    %2349 = vmatprep.subr.bf16.mxu0 %v1680
    %2350 = vmatpush1.bf16.msra.mxu0 %v1679
    %2351 = vmatprep.subr.bf16.mxu0 %v1688
    %2352 = vmatpush1.bf16.msra.mxu0 %v1687
    %2353 = vmatprep.subr.bf16.mxu0 %v1696
    %2354 = vmatpush1.bf16.msra.mxu0 %v1695
    %2355 = vmatprep.subr.bf16.mxu0 %v1704
    %2356 = vmatpush1.bf16.msra.mxu0 %v1703
    %2357 = vmatprep.subr.bf16.mxu0 %v1712
    %2358 = vmatpush1.bf16.msra.mxu0 %v1711
    %2359 = vmatprep.subr.bf16.mxu0 %v1720
    %2360 = vmatpush1.bf16.msra.mxu0 %v1719
    %2361 = vmatprep.subr.bf16.mxu0 %v1728
    %2362 = vmatpush1.bf16.msra.mxu0 %v1727
    %2363 = vmatprep.subr.bf16.mxu0 %v1736
    %2364 = vmatpush1.bf16.msra.mxu0 %v1735
    %2365 = vmatprep.subr.bf16.mxu0 %v1744
    %2366 = vmatpush1.bf16.msra.mxu0 %v1743
    %2367 = vmatprep.subr.bf16.mxu0 %v1752
    %2368 = vmatpush1.bf16.msra.mxu0 %v1751
    %2369 = vmatprep.subr.bf16.mxu0 %v1760
    %2370 = vmatpush1.bf16.msra.mxu0 %v1759
    %2371 = vmatprep.subr.bf16.mxu0 %v1768
    %2372 = vmatpush1.bf16.msra.mxu0 %v1767
    %2373 = vmatprep.subr.bf16.mxu0 %v1776
    %2374 = vmatpush1.bf16.msra.mxu0 %v1775
    %2375 = vmatprep.subr.bf16.mxu0 %v1784
    %2376 = vmatpush1.bf16.msra.mxu0 %v1783
    %2377 = vmatprep.mubr.bf16.mxu0 %v566
    %2378 = vmatmul.mubr.bf16.gmra.mrb[0].mxu0 %v565
    %v2379 = vpop.f32.mrb[0].mxu0
    %v2380 = vadd.f32 %v2337, %v2379
    %v2381 = vpop.f32.mrb[0].mxu0
    %v2382 = vadd.f32 %v2339, %v2381
    %v2383 = vpop.f32.mrb[0].mxu0
    %v2384 = vadd.f32 %v2341, %v2383
    %v2385 = vpop.f32.mrb[0].mxu0
    %v2386 = vadd.f32 %v2343, %v2385
    %2387 = vdwg.mxu0
    %2388 = vmatprep.subr.bf16.mxu0 %v1792
    %2389 = vmatpush1.bf16.msra.mxu0 %v1791
    %2390 = vmatprep.subr.bf16.mxu0 %v1800
    %2391 = vmatpush1.bf16.msra.mxu0 %v1799
    %2392 = vmatprep.subr.bf16.mxu0 %v1808
    %2393 = vmatpush1.bf16.msra.mxu0 %v1807
    %2394 = vmatprep.subr.bf16.mxu0 %v1816
    %2395 = vmatpush1.bf16.msra.mxu0 %v1815
    %2396 = vmatprep.subr.bf16.mxu0 %v1824
    %2397 = vmatpush1.bf16.msra.mxu0 %v1823
    %2398 = vmatprep.subr.bf16.mxu0 %v1832
    %2399 = vmatpush1.bf16.msra.mxu0 %v1831
    %2400 = vmatprep.subr.bf16.mxu0 %v1840
    %2401 = vmatpush1.bf16.msra.mxu0 %v1839
    %2402 = vmatprep.subr.bf16.mxu0 %v1848
    %2403 = vmatpush1.bf16.msra.mxu0 %v1847
    %2404 = vmatprep.subr.bf16.mxu0 0
    %2405 = vmatpush1.bf16.msra.mxu0 0
    %2406 = vmatprep.subr.bf16.mxu0 0
    %2407 = vmatpush1.bf16.msra.mxu0 0
    %2408 = vmatprep.subr.bf16.mxu0 0
    %2409 = vmatpush1.bf16.msra.mxu0 0
    %2410 = vmatprep.subr.bf16.mxu0 0
    %2411 = vmatpush1.bf16.msra.mxu0 0
    %2412 = vmatprep.subr.bf16.mxu0 0
    %2413 = vmatpush1.bf16.msra.mxu0 0
    %2414 = vmatprep.subr.bf16.mxu0 0
    %2415 = vmatpush1.bf16.msra.mxu0 0
    %2416 = vmatprep.subr.bf16.mxu0 0
    %2417 = vmatpush1.bf16.msra.mxu0 0
    %2418 = vmatprep.subr.bf16.mxu0 0
    %2419 = vmatpush1.bf16.msra.mxu0 0
    %2420 = vmatprep.mubr.bf16.mxu0 0
    %2421 = vmatmul.mubr.bf16.gmra.mrb[0].mxu0 %v567
    %v2422 = vpop.f32.mrb[0].mxu0
    %v2423 = vadd.f32 %v2380, %v2422
    %v2424 = vpop.f32.mrb[0].mxu0
    %v2425 = vadd.f32 %v2382, %v2424
    %v2426 = vpop.f32.mrb[0].mxu0
    %v2427 = vadd.f32 %v2384, %v2426
    %v2428 = vpop.f32.mrb[0].mxu0
    %v2429 = vadd.f32 %v2386, %v2428
    %2430 = vdwg.mxu0
    %2431 = vmatprep.subr.bf16.mxu0 %v1538
    %2432 = vmatpush1.bf16.msra.mxu0 %v1537
    %2433 = vmatprep.subr.bf16.mxu0 %v1546
    %2434 = vmatpush1.bf16.msra.mxu0 %v1545
    %2435 = vmatprep.subr.bf16.mxu0 %v1554
    %2436 = vmatpush1.bf16.msra.mxu0 %v1553
    %2437 = vmatprep.subr.bf16.mxu0 %v1562
    %2438 = vmatpush1.bf16.msra.mxu0 %v1561
    %2439 = vmatprep.subr.bf16.mxu0 %v1570
    %2440 = vmatpush1.bf16.msra.mxu0 %v1569
    %2441 = vmatprep.subr.bf16.mxu0 %v1578
    %2442 = vmatpush1.bf16.msra.mxu0 %v1577
    %2443 = vmatprep.subr.bf16.mxu0 %v1586
    %2444 = vmatpush1.bf16.msra.mxu0 %v1585
    %2445 = vmatprep.subr.bf16.mxu0 %v1594
    %2446 = vmatpush1.bf16.msra.mxu0 %v1593
    %2447 = vmatprep.subr.bf16.mxu0 %v1602
    %2448 = vmatpush1.bf16.msra.mxu0 %v1601
    %2449 = vmatprep.subr.bf16.mxu0 %v1610
    %2450 = vmatpush1.bf16.msra.mxu0 %v1609
    %2451 = vmatprep.subr.bf16.mxu0 %v1618
    %2452 = vmatpush1.bf16.msra.mxu0 %v1617
    %2453 = vmatprep.subr.bf16.mxu0 %v1626
    %2454 = vmatpush1.bf16.msra.mxu0 %v1625
    %2455 = vmatprep.subr.bf16.mxu0 %v1634
    %2456 = vmatpush1.bf16.msra.mxu0 %v1633
    %2457 = vmatprep.subr.bf16.mxu0 %v1642
    %2458 = vmatpush1.bf16.msra.mxu0 %v1641
    %2459 = vmatprep.subr.bf16.mxu0 %v1650
    %2460 = vmatpush1.bf16.msra.mxu0 %v1649
    %2461 = vmatprep.subr.bf16.mxu0 %v1658
    %2462 = vmatpush1.bf16.msra.mxu0 %v1657
    %2463 = vmatprep.mubr.bf16.mxu0 %v564
    %2464 = vmatmul.mubr.bf16.gmra.mrb[0].mxu0 %v563
    %v2465 = vpop.f32.mrb[0].mxu0
    %v2466 = vadd.f32 %v526, %v2465
    %v2467 = vpop.f32.mrb[0].mxu0
    %v2468 = vadd.f32 %v530, %v2467
    %v2469 = vpop.f32.mrb[0].mxu0
    %v2470 = vadd.f32 %v526, %v2469
    %v2471 = vpop.f32.mrb[0].mxu0
    %v2472 = vadd.f32 %v530, %v2471
    %2473 = vdwg.mxu0
    %2474 = vmatprep.subr.bf16.mxu0 %v1666
    %2475 = vmatpush1.bf16.msra.mxu0 %v1665
    %2476 = vmatprep.subr.bf16.mxu0 %v1674
    %2477 = vmatpush1.bf16.msra.mxu0 %v1673
    %2478 = vmatprep.subr.bf16.mxu0 %v1682
    %2479 = vmatpush1.bf16.msra.mxu0 %v1681
    %2480 = vmatprep.subr.bf16.mxu0 %v1690
    %2481 = vmatpush1.bf16.msra.mxu0 %v1689
    %2482 = vmatprep.subr.bf16.mxu0 %v1698
    %2483 = vmatpush1.bf16.msra.mxu0 %v1697
    %2484 = vmatprep.subr.bf16.mxu0 %v1706
    %2485 = vmatpush1.bf16.msra.mxu0 %v1705
    %2486 = vmatprep.subr.bf16.mxu0 %v1714
    %2487 = vmatpush1.bf16.msra.mxu0 %v1713
    %2488 = vmatprep.subr.bf16.mxu0 %v1722
    %2489 = vmatpush1.bf16.msra.mxu0 %v1721
    %2490 = vmatprep.subr.bf16.mxu0 %v1730
    %2491 = vmatpush1.bf16.msra.mxu0 %v1729
    %2492 = vmatprep.subr.bf16.mxu0 %v1738
    %2493 = vmatpush1.bf16.msra.mxu0 %v1737
    %2494 = vmatprep.subr.bf16.mxu0 %v1746
    %2495 = vmatpush1.bf16.msra.mxu0 %v1745
    %2496 = vmatprep.subr.bf16.mxu0 %v1754
    %2497 = vmatpush1.bf16.msra.mxu0 %v1753
    %2498 = vmatprep.subr.bf16.mxu0 %v1762
    %2499 = vmatpush1.bf16.msra.mxu0 %v1761
    %2500 = vmatprep.subr.bf16.mxu0 %v1770
    %2501 = vmatpush1.bf16.msra.mxu0 %v1769
    %2502 = vmatprep.subr.bf16.mxu0 %v1778
    %2503 = vmatpush1.bf16.msra.mxu0 %v1777
    %2504 = vmatprep.subr.bf16.mxu0 %v1786
    %2505 = vmatpush1.bf16.msra.mxu0 %v1785
    %2506 = vmatprep.mubr.bf16.mxu0 %v566
    %2507 = vmatmul.mubr.bf16.gmra.mrb[0].mxu0 %v565
    %v2508 = vpop.f32.mrb[0].mxu0
    %v2509 = vadd.f32 %v2466, %v2508
    %v2510 = vpop.f32.mrb[0].mxu0
    %v2511 = vadd.f32 %v2468, %v2510
    %v2512 = vpop.f32.mrb[0].mxu0
    %v2513 = vadd.f32 %v2470, %v2512
    %v2514 = vpop.f32.mrb[0].mxu0
    %v2515 = vadd.f32 %v2472, %v2514
    %2516 = vdwg.mxu0
    %2517 = vmatprep.subr.bf16.mxu0 %v1794
    %2518 = vmatpush1.bf16.msra.mxu0 %v1793
    %2519 = vmatprep.subr.bf16.mxu0 %v1802
    %2520 = vmatpush1.bf16.msra.mxu0 %v1801
    %2521 = vmatprep.subr.bf16.mxu0 %v1810
    %2522 = vmatpush1.bf16.msra.mxu0 %v1809
    %2523 = vmatprep.subr.bf16.mxu0 %v1818
    %2524 = vmatpush1.bf16.msra.mxu0 %v1817
    %2525 = vmatprep.subr.bf16.mxu0 %v1826
    %2526 = vmatpush1.bf16.msra.mxu0 %v1825
    %2527 = vmatprep.subr.bf16.mxu0 %v1834
    %2528 = vmatpush1.bf16.msra.mxu0 %v1833
    %2529 = vmatprep.subr.bf16.mxu0 %v1842
    %2530 = vmatpush1.bf16.msra.mxu0 %v1841
    %2531 = vmatprep.subr.bf16.mxu0 %v1850
    %2532 = vmatpush1.bf16.msra.mxu0 %v1849
    %2533 = vmatprep.subr.bf16.mxu0 0
    %2534 = vmatpush1.bf16.msra.mxu0 0
    %2535 = vmatprep.subr.bf16.mxu0 0
    %2536 = vmatpush1.bf16.msra.mxu0 0
    %2537 = vmatprep.subr.bf16.mxu0 0
    %2538 = vmatpush1.bf16.msra.mxu0 0
    %2539 = vmatprep.subr.bf16.mxu0 0
    %2540 = vmatpush1.bf16.msra.mxu0 0
    %2541 = vmatprep.subr.bf16.mxu0 0
    %2542 = vmatpush1.bf16.msra.mxu0 0
    %2543 = vmatprep.subr.bf16.mxu0 0
    %2544 = vmatpush1.bf16.msra.mxu0 0
    %2545 = vmatprep.subr.bf16.mxu0 0
    %2546 = vmatpush1.bf16.msra.mxu0 0
    %2547 = vmatprep.subr.bf16.mxu0 0
    %2548 = vmatpush1.bf16.msra.mxu0 0
    %2549 = vmatprep.mubr.bf16.mxu0 0
    %2550 = vmatmul.mubr.bf16.gmra.mrb[0].mxu0 %v567
    %v2551 = vpop.f32.mrb[0].mxu0
    %v2552 = vadd.f32 %v2509, %v2551
    %v2553 = vpop.f32.mrb[0].mxu0
    %v2554 = vadd.f32 %v2511, %v2553
    %v2555 = vpop.f32.mrb[0].mxu0
    %v2556 = vadd.f32 %v2513, %v2555
    %v2557 = vpop.f32.mrb[0].mxu0
    %v2558 = vadd.f32 %v2515, %v2557
    %2559 = vdwg.mxu0
    %2560 = vmatprep.subr.bf16.mxu0 %v1540
    %2561 = vmatpush1.bf16.msra.mxu0 %v1539
    %2562 = vmatprep.subr.bf16.mxu0 %v1548
    %2563 = vmatpush1.bf16.msra.mxu0 %v1547
    %2564 = vmatprep.subr.bf16.mxu0 %v1556
    %2565 = vmatpush1.bf16.msra.mxu0 %v1555
    %2566 = vmatprep.subr.bf16.mxu0 %v1564
    %2567 = vmatpush1.bf16.msra.mxu0 %v1563
    %2568 = vmatprep.subr.bf16.mxu0 %v1572
    %2569 = vmatpush1.bf16.msra.mxu0 %v1571
    %2570 = vmatprep.subr.bf16.mxu0 %v1580
    %2571 = vmatpush1.bf16.msra.mxu0 %v1579
    %2572 = vmatprep.subr.bf16.mxu0 %v1588
    %2573 = vmatpush1.bf16.msra.mxu0 %v1587
    %2574 = vmatprep.subr.bf16.mxu0 %v1596
    %2575 = vmatpush1.bf16.msra.mxu0 %v1595
    %2576 = vmatprep.subr.bf16.mxu0 %v1604
    %2577 = vmatpush1.bf16.msra.mxu0 %v1603
    %2578 = vmatprep.subr.bf16.mxu0 %v1612
    %2579 = vmatpush1.bf16.msra.mxu0 %v1611
    %2580 = vmatprep.subr.bf16.mxu0 %v1620
    %2581 = vmatpush1.bf16.msra.mxu0 %v1619
    %2582 = vmatprep.subr.bf16.mxu0 %v1628
    %2583 = vmatpush1.bf16.msra.mxu0 %v1627
    %2584 = vmatprep.subr.bf16.mxu0 %v1636
    %2585 = vmatpush1.bf16.msra.mxu0 %v1635
    %2586 = vmatprep.subr.bf16.mxu0 %v1644
    %2587 = vmatpush1.bf16.msra.mxu0 %v1643
    %2588 = vmatprep.subr.bf16.mxu0 %v1652
    %2589 = vmatpush1.bf16.msra.mxu0 %v1651
    %2590 = vmatprep.subr.bf16.mxu0 %v1660
    %2591 = vmatpush1.bf16.msra.mxu0 %v1659
    %2592 = vmatprep.mubr.bf16.mxu0 %v564
    %2593 = vmatmul.mubr.bf16.gmra.mrb[0].mxu0 %v563
    %v2594 = vpop.f32.mrb[0].mxu0
    %v2595 = vadd.f32 %v534, %v2594
    %v2596 = vpop.f32.mrb[0].mxu0
    %v2597 = vadd.f32 %v538, %v2596
    %v2598 = vpop.f32.mrb[0].mxu0
    %v2599 = vadd.f32 %v534, %v2598
    %v2600 = vpop.f32.mrb[0].mxu0
    %v2601 = vadd.f32 %v538, %v2600
    %2602 = vdwg.mxu0
    %2603 = vmatprep.subr.bf16.mxu0 %v1668
    %2604 = vmatpush1.bf16.msra.mxu0 %v1667
    %2605 = vmatprep.subr.bf16.mxu0 %v1676
    %2606 = vmatpush1.bf16.msra.mxu0 %v1675
    %2607 = vmatprep.subr.bf16.mxu0 %v1684
    %2608 = vmatpush1.bf16.msra.mxu0 %v1683
    %2609 = vmatprep.subr.bf16.mxu0 %v1692
    %2610 = vmatpush1.bf16.msra.mxu0 %v1691
    %2611 = vmatprep.subr.bf16.mxu0 %v1700
    %2612 = vmatpush1.bf16.msra.mxu0 %v1699
    %2613 = vmatprep.subr.bf16.mxu0 %v1708
    %2614 = vmatpush1.bf16.msra.mxu0 %v1707
    %2615 = vmatprep.subr.bf16.mxu0 %v1716
    %2616 = vmatpush1.bf16.msra.mxu0 %v1715
    %2617 = vmatprep.subr.bf16.mxu0 %v1724
    %2618 = vmatpush1.bf16.msra.mxu0 %v1723
    %2619 = vmatprep.subr.bf16.mxu0 %v1732
    %2620 = vmatpush1.bf16.msra.mxu0 %v1731
    %2621 = vmatprep.subr.bf16.mxu0 %v1740
    %2622 = vmatpush1.bf16.msra.mxu0 %v1739
    %2623 = vmatprep.subr.bf16.mxu0 %v1748
    %2624 = vmatpush1.bf16.msra.mxu0 %v1747
    %2625 = vmatprep.subr.bf16.mxu0 %v1756
    %2626 = vmatpush1.bf16.msra.mxu0 %v1755
    %2627 = vmatprep.subr.bf16.mxu0 %v1764
    %2628 = vmatpush1.bf16.msra.mxu0 %v1763
    %2629 = vmatprep.subr.bf16.mxu0 %v1772
    %2630 = vmatpush1.bf16.msra.mxu0 %v1771
    %2631 = vmatprep.subr.bf16.mxu0 %v1780
    %2632 = vmatpush1.bf16.msra.mxu0 %v1779
    %2633 = vmatprep.subr.bf16.mxu0 %v1788
    %2634 = vmatpush1.bf16.msra.mxu0 %v1787
    %2635 = vmatprep.mubr.bf16.mxu0 %v566
    %2636 = vmatmul.mubr.bf16.gmra.mrb[0].mxu0 %v565
    %v2637 = vpop.f32.mrb[0].mxu0
    %v2638 = vadd.f32 %v2595, %v2637
    %v2639 = vpop.f32.mrb[0].mxu0
    %v2640 = vadd.f32 %v2597, %v2639
    %v2641 = vpop.f32.mrb[0].mxu0
    %v2642 = vadd.f32 %v2599, %v2641
    %v2643 = vpop.f32.mrb[0].mxu0
    %v2644 = vadd.f32 %v2601, %v2643
    %2645 = vdwg.mxu0
    %2646 = vmatprep.subr.bf16.mxu0 %v1796
    %2647 = vmatpush1.bf16.msra.mxu0 %v1795
    %2648 = vmatprep.subr.bf16.mxu0 %v1804
    %2649 = vmatpush1.bf16.msra.mxu0 %v1803
    %2650 = vmatprep.subr.bf16.mxu0 %v1812
    %2651 = vmatpush1.bf16.msra.mxu0 %v1811
    %2652 = vmatprep.subr.bf16.mxu0 %v1820
    %2653 = vmatpush1.bf16.msra.mxu0 %v1819
    %2654 = vmatprep.subr.bf16.mxu0 %v1828
    %2655 = vmatpush1.bf16.msra.mxu0 %v1827
    %2656 = vmatprep.subr.bf16.mxu0 %v1836
    %2657 = vmatpush1.bf16.msra.mxu0 %v1835
    %2658 = vmatprep.subr.bf16.mxu0 %v1844
    %2659 = vmatpush1.bf16.msra.mxu0 %v1843
    %2660 = vmatprep.subr.bf16.mxu0 %v1852
    %2661 = vmatpush1.bf16.msra.mxu0 %v1851
    %2662 = vmatprep.subr.bf16.mxu0 0
    %2663 = vmatpush1.bf16.msra.mxu0 0
    %2664 = vmatprep.subr.bf16.mxu0 0
    %2665 = vmatpush1.bf16.msra.mxu0 0
    %2666 = vmatprep.subr.bf16.mxu0 0
    %2667 = vmatpush1.bf16.msra.mxu0 0
    %2668 = vmatprep.subr.bf16.mxu0 0
    %2669 = vmatpush1.bf16.msra.mxu0 0
    %2670 = vmatprep.subr.bf16.mxu0 0
    %2671 = vmatpush1.bf16.msra.mxu0 0
    %2672 = vmatprep.subr.bf16.mxu0 0
    %2673 = vmatpush1.bf16.msra.mxu0 0
    %2674 = vmatprep.subr.bf16.mxu0 0
    %2675 = vmatpush1.bf16.msra.mxu0 0
    %2676 = vmatprep.subr.bf16.mxu0 0
    %2677 = vmatpush1.bf16.msra.mxu0 0
    %2678 = vmatprep.mubr.bf16.mxu0 0
    %2679 = vmatmul.mubr.bf16.gmra.mrb[0].mxu0 %v567
    %v2680 = vpop.f32.mrb[0].mxu0
    %v2681 = vadd.f32 %v2638, %v2680
    %v2682 = vpop.f32.mrb[0].mxu0
    %v2683 = vadd.f32 %v2640, %v2682
    %v2684 = vpop.f32.mrb[0].mxu0
    %v2685 = vadd.f32 %v2642, %v2684
    %v2686 = vpop.f32.mrb[0].mxu0
    %v2687 = vadd.f32 %v2644, %v2686
    %2688 = vdwg.mxu0
    %v2689 = vpack.c.bf16 %v2298, %v2294
    %v2690 = vpack.c.bf16 %v2300, %v2296
    %v2691 = vpack.c.bf16 %v2427, %v2423
    %v2692 = vpack.c.bf16 %v2429, %v2425
    %v2693 = vpack.c.bf16 %v2556, %v2552
    %v2694 = vpack.c.bf16 %v2558, %v2554
    %v2695 = vpack.c.bf16 %v2685, %v2681
    %v2696 = vpack.c.bf16 %v2687, %v2683
    %v2697 = vtanh.bf16.pop %v2689
    %v2698 = vtanh.bf16.pop %v2690
    %v2699 = vtanh.bf16.pop %v2691
    %v2700 = vtanh.bf16.pop %v2692
    %v2701 = vtanh.bf16.pop %v2693
    %v2702 = vtanh.bf16.pop %v2694
    %v2703 = vtanh.bf16.pop %v2695
    %v2704 = vtanh.bf16.pop %v2696
    %v2705 = vld [vmem:[#allocation8] sm:$0xff]
    %v2706 = vld [vmem:[#allocation8 + $0x8] sm:$0xff]
    %v2707 = vld [vmem:[#allocation8 + $0x10] sm:$0xff]
    %v2708 = vld [vmem:[#allocation8 + $0x18] sm:$0xff]
    %v2709 = vld [vmem:[#allocation8 + $0x20] sm:$0xff]
    %v2710 = vld [vmem:[#allocation8 + $0x28] sm:$0xff]
    %v2711 = vld [vmem:[#allocation8 + $0x30] sm:$0xff]
    %v2712 = vld [vmem:[#allocation8 + $0x38] sm:$0xff]
    %v2713 = vld [vmem:[#allocation8 + $0x40] sm:$0xff]
    %v2714 = vld [vmem:[#allocation8 + $0x48] sm:$0xff]
    %v2715 = vld [vmem:[#allocation8 + $0x50] sm:$0xff]
    %v2716 = vld [vmem:[#allocation8 + $0x58] sm:$0xff]
    %v2717 = vld [vmem:[#allocation8 + $0x60] sm:$0xff]
    %v2718 = vld [vmem:[#allocation8 + $0x68] sm:$0xff]
    %v2719 = vld [vmem:[#allocation8 + $0x70] sm:$0xff]
    %v2720 = vld [vmem:[#allocation8 + $0x78] sm:$0xff]
    %v2721 = vld [vmem:[#allocation8 + $0x80] sm:$0xff]
    %v2722 = vld [vmem:[#allocation8 + $0x88] sm:$0xff]
    %v2723 = vld [vmem:[#allocation8 + $0x90] sm:$0xff]
    %v2724 = vld [vmem:[#allocation8 + $0x98] sm:$0xff]
    %v2725 = vld [vmem:[#allocation8 + $0xa0] sm:$0xff]
    %v2726 = vld [vmem:[#allocation8 + $0xa8] sm:$0xff]
    %v2727 = vld [vmem:[#allocation8 + $0xb0] sm:$0xff]
    %v2728 = vld [vmem:[#allocation8 + $0xb8] sm:$0xff]
    %v2729 = vld [vmem:[#allocation8 + $0xc0] sm:$0xff]
    %v2730 = vld [vmem:[#allocation8 + $0xc8] sm:$0xff]
    %v2731 = vld [vmem:[#allocation8 + $0xd0] sm:$0xff]
    %v2732 = vld [vmem:[#allocation8 + $0xd8] sm:$0xff]
    %v2733 = vld [vmem:[#allocation8 + $0xe0] sm:$0xff]
    %v2734 = vld [vmem:[#allocation8 + $0xe8] sm:$0xff]
    %v2735 = vld [vmem:[#allocation8 + $0xf0] sm:$0xff]
    %v2736 = vld [vmem:[#allocation8 + $0xf8] sm:$0xff]
    %v2737 = vld [vmem:[#allocation8 + $0x100] sm:$0xff]
    %v2738 = vld [vmem:[#allocation8 + $0x108] sm:$0xff]
    %v2739 = vld [vmem:[#allocation8 + $0x110] sm:$0xff]
    %v2740 = vld [vmem:[#allocation8 + $0x118] sm:$0xff]
    %v2741 = vld [vmem:[#allocation8 + $0x120] sm:$0xff]
    %v2742 = vld [vmem:[#allocation8 + $0x128] sm:$0xff]
    %v2743 = vld [vmem:[#allocation8 + $0x130] sm:$0xff]
    %v2744 = vld [vmem:[#allocation8 + $0x138] sm:$0xff]
    %v2745 = vld [vmem:[#allocation8 + $0x140] sm:$0xff]
    %v2746 = vld [vmem:[#allocation8 + $0x148] sm:$0xff]
    %v2747 = vld [vmem:[#allocation8 + $0x150] sm:$0xff]
    %v2748 = vld [vmem:[#allocation8 + $0x158] sm:$0xff]
    %v2749 = vld [vmem:[#allocation8 + $0x160] sm:$0xff]
    %v2750 = vld [vmem:[#allocation8 + $0x168] sm:$0xff]
    %v2751 = vld [vmem:[#allocation8 + $0x170] sm:$0xff]
    %v2752 = vld [vmem:[#allocation8 + $0x178] sm:$0xff]
    %v2753 = vld [vmem:[#allocation8 + $0x180] sm:$0xff]
    %v2754 = vld [vmem:[#allocation8 + $0x188] sm:$0xff]
    %v2755 = vld [vmem:[#allocation8 + $0x190] sm:$0xff]
    %v2756 = vld [vmem:[#allocation8 + $0x198] sm:$0xff]
    %v2757 = vld [vmem:[#allocation8 + $0x1a0] sm:$0xff]
    %v2758 = vld [vmem:[#allocation8 + $0x1a8] sm:$0xff]
    %v2759 = vld [vmem:[#allocation8 + $0x1b0] sm:$0xff]
    %v2760 = vld [vmem:[#allocation8 + $0x1b8] sm:$0xff]
    %v2761 = vld [vmem:[#allocation8 + $0x1c0] sm:$0xff]
    %v2762 = vld [vmem:[#allocation8 + $0x1c8] sm:$0xff]
    %v2763 = vld [vmem:[#allocation8 + $0x1d0] sm:$0xff]
    %v2764 = vld [vmem:[#allocation8 + $0x1d8] sm:$0xff]
    %v2765 = vld [vmem:[#allocation8 + $0x1e0] sm:$0xff]
    %v2766 = vld [vmem:[#allocation8 + $0x1e8] sm:$0xff]
    %v2767 = vld [vmem:[#allocation8 + $0x1f0] sm:$0xff]
    %v2768 = vld [vmem:[#allocation8 + $0x1f8] sm:$0xff]
    %v2769 = vld [vmem:[#allocation8 + $0x200] sm:$0xff]
    %v2770 = vld [vmem:[#allocation8 + $0x208] sm:$0xff]
    %v2771 = vld [vmem:[#allocation8 + $0x210] sm:$0xff]
    %v2772 = vld [vmem:[#allocation8 + $0x218] sm:$0xff]
    %v2773 = vld [vmem:[#allocation8 + $0x220] sm:$0xff]
    %v2774 = vld [vmem:[#allocation8 + $0x228] sm:$0xff]
    %v2775 = vld [vmem:[#allocation8 + $0x230] sm:$0xff]
    %v2776 = vld [vmem:[#allocation8 + $0x238] sm:$0xff]
    %v2777 = vld [vmem:[#allocation8 + $0x240] sm:$0xff]
    %v2778 = vld [vmem:[#allocation8 + $0x248] sm:$0xff]
    %v2779 = vld [vmem:[#allocation8 + $0x250] sm:$0xff]
    %v2780 = vld [vmem:[#allocation8 + $0x258] sm:$0xff]
    %v2781 = vld [vmem:[#allocation8 + $0x260] sm:$0xff]
    %v2782 = vld [vmem:[#allocation8 + $0x268] sm:$0xff]
    %v2783 = vld [vmem:[#allocation8 + $0x270] sm:$0xff]
    %v2784 = vld [vmem:[#allocation8 + $0x278] sm:$0xff]
    %v2785 = vld [vmem:[#allocation8 + $0x280] sm:$0xff]
    %v2786 = vld [vmem:[#allocation8 + $0x288] sm:$0xff]
    %v2787 = vld [vmem:[#allocation8 + $0x290] sm:$0xff]
    %v2788 = vld [vmem:[#allocation8 + $0x298] sm:$0xff]
    %v2789 = vld [vmem:[#allocation8 + $0x2a0] sm:$0xff]
    %v2790 = vld [vmem:[#allocation8 + $0x2a8] sm:$0xff]
    %v2791 = vld [vmem:[#allocation8 + $0x2b0] sm:$0xff]
    %v2792 = vld [vmem:[#allocation8 + $0x2b8] sm:$0xff]
    %v2793 = vld [vmem:[#allocation8 + $0x2c0] sm:$0xff]
    %v2794 = vld [vmem:[#allocation8 + $0x2c8] sm:$0xff]
    %v2795 = vld [vmem:[#allocation8 + $0x2d0] sm:$0xff]
    %v2796 = vld [vmem:[#allocation8 + $0x2d8] sm:$0xff]
    %v2797 = vld [vmem:[#allocation8 + $0x2e0] sm:$0xff]
    %v2798 = vld [vmem:[#allocation8 + $0x2e8] sm:$0xff]
    %v2799 = vld [vmem:[#allocation8 + $0x2f0] sm:$0xff]
    %v2800 = vld [vmem:[#allocation8 + $0x2f8] sm:$0xff]
    %v2801 = vld [vmem:[#allocation8 + $0x300] sm:$0xff]
    %v2802 = vld [vmem:[#allocation8 + $0x308] sm:$0xff]
    %v2803 = vld [vmem:[#allocation8 + $0x310] sm:$0xff]
    %v2804 = vld [vmem:[#allocation8 + $0x318] sm:$0xff]
    %v2805 = vld [vmem:[#allocation8 + $0x320] sm:$0xff]
    %v2806 = vld [vmem:[#allocation8 + $0x328] sm:$0xff]
    %v2807 = vld [vmem:[#allocation8 + $0x330] sm:$0xff]
    %v2808 = vld [vmem:[#allocation8 + $0x338] sm:$0xff]
    %v2809 = vld [vmem:[#allocation8 + $0x340] sm:$0xff]
    %v2810 = vld [vmem:[#allocation8 + $0x348] sm:$0xff]
    %v2811 = vld [vmem:[#allocation8 + $0x350] sm:$0xff]
    %v2812 = vld [vmem:[#allocation8 + $0x358] sm:$0xff]
    %v2813 = vld [vmem:[#allocation8 + $0x360] sm:$0xff]
    %v2814 = vld [vmem:[#allocation8 + $0x368] sm:$0xff]
    %v2815 = vld [vmem:[#allocation8 + $0x370] sm:$0xff]
    %v2816 = vld [vmem:[#allocation8 + $0x378] sm:$0xff]
    %v2817 = vld [vmem:[#allocation8 + $0x380] sm:$0xff]
    %v2818 = vld [vmem:[#allocation8 + $0x388] sm:$0xff]
    %v2819 = vld [vmem:[#allocation8 + $0x390] sm:$0xff]
    %v2820 = vld [vmem:[#allocation8 + $0x398] sm:$0xff]
    %v2821 = vld [vmem:[#allocation8 + $0x3a0] sm:$0xff]
    %v2822 = vld [vmem:[#allocation8 + $0x3a8] sm:$0xff]
    %v2823 = vld [vmem:[#allocation8 + $0x3b0] sm:$0xff]
    %v2824 = vld [vmem:[#allocation8 + $0x3b8] sm:$0xff]
    %v2825 = vld [vmem:[#allocation8 + $0x3c0] sm:$0xff]
    %v2826 = vld [vmem:[#allocation8 + $0x3c8] sm:$0xff]
    %v2827 = vld [vmem:[#allocation8 + $0x3d0] sm:$0xff]
    %v2828 = vld [vmem:[#allocation8 + $0x3d8] sm:$0xff]
    %v2829 = vld [vmem:[#allocation8 + $0x3e0] sm:$0xff]
    %v2830 = vld [vmem:[#allocation8 + $0x3e8] sm:$0xff]
    %v2831 = vld [vmem:[#allocation8 + $0x3f0] sm:$0xff]
    %v2832 = vld [vmem:[#allocation8 + $0x3f8] sm:$0xff]
    %v2833 = vld [vmem:[#allocation8 + $0x400] sm:$0xff]
    %v2834 = vld [vmem:[#allocation8 + $0x408] sm:$0xff]
    %v2835 = vld [vmem:[#allocation8 + $0x410] sm:$0xff]
    %v2836 = vld [vmem:[#allocation8 + $0x418] sm:$0xff]
    %v2837 = vld [vmem:[#allocation8 + $0x420] sm:$0xff]
    %v2838 = vld [vmem:[#allocation8 + $0x428] sm:$0xff]
    %v2839 = vld [vmem:[#allocation8 + $0x430] sm:$0xff]
    %v2840 = vld [vmem:[#allocation8 + $0x438] sm:$0xff]
    %v2841 = vld [vmem:[#allocation8 + $0x440] sm:$0xff]
    %v2842 = vld [vmem:[#allocation8 + $0x448] sm:$0xff]
    %v2843 = vld [vmem:[#allocation8 + $0x450] sm:$0xff]
    %v2844 = vld [vmem:[#allocation8 + $0x458] sm:$0xff]
    %v2845 = vld [vmem:[#allocation8 + $0x460] sm:$0xff]
    %v2846 = vld [vmem:[#allocation8 + $0x468] sm:$0xff]
    %v2847 = vld [vmem:[#allocation8 + $0x470] sm:$0xff]
    %v2848 = vld [vmem:[#allocation8 + $0x478] sm:$0xff]
    %v2849 = vld [vmem:[#allocation8 + $0x480] sm:$0xff]
    %v2850 = vld [vmem:[#allocation8 + $0x488] sm:$0xff]
    %v2851 = vld [vmem:[#allocation8 + $0x490] sm:$0xff]
    %v2852 = vld [vmem:[#allocation8 + $0x498] sm:$0xff]
    %v2853 = vld [vmem:[#allocation8 + $0x4a0] sm:$0xff]
    %v2854 = vld [vmem:[#allocation8 + $0x4a8] sm:$0xff]
    %v2855 = vld [vmem:[#allocation8 + $0x4b0] sm:$0xff]
    %v2856 = vld [vmem:[#allocation8 + $0x4b8] sm:$0xff]
    %v2857 = vld [vmem:[#allocation8 + $0x4c0] sm:$0xff]
    %v2858 = vld [vmem:[#allocation8 + $0x4c8] sm:$0xff]
    %v2859 = vld [vmem:[#allocation8 + $0x4d0] sm:$0xff]
    %v2860 = vld [vmem:[#allocation8 + $0x4d8] sm:$0xff]
    %v2861 = vld [vmem:[#allocation8 + $0x4e0] sm:$0xff]
    %v2862 = vld [vmem:[#allocation8 + $0x4e8] sm:$0xff]
    %v2863 = vld [vmem:[#allocation8 + $0x4f0] sm:$0xff]
    %v2864 = vld [vmem:[#allocation8 + $0x4f8] sm:$0xff]
    %v2865 = vld [vmem:[#allocation8 + $0x500] sm:$0xff]
    %v2866 = vld [vmem:[#allocation8 + $0x508] sm:$0xff]
    %v2867 = vld [vmem:[#allocation8 + $0x510] sm:$0xff]
    %v2868 = vld [vmem:[#allocation8 + $0x518] sm:$0xff]
    %v2869 = vld [vmem:[#allocation8 + $0x520] sm:$0xff]
    %v2870 = vld [vmem:[#allocation8 + $0x528] sm:$0xff]
    %v2871 = vld [vmem:[#allocation8 + $0x530] sm:$0xff]
    %v2872 = vld [vmem:[#allocation8 + $0x538] sm:$0xff]
    %v2873 = vld [vmem:[#allocation8 + $0x540] sm:$0xff]
    %v2874 = vld [vmem:[#allocation8 + $0x548] sm:$0xff]
    %v2875 = vld [vmem:[#allocation8 + $0x550] sm:$0xff]
    %v2876 = vld [vmem:[#allocation8 + $0x558] sm:$0xff]
    %v2877 = vld [vmem:[#allocation8 + $0x560] sm:$0xff]
    %v2878 = vld [vmem:[#allocation8 + $0x568] sm:$0xff]
    %v2879 = vld [vmem:[#allocation8 + $0x570] sm:$0xff]
    %v2880 = vld [vmem:[#allocation8 + $0x578] sm:$0xff]
    %v2881 = vld [vmem:[#allocation8 + $0x580] sm:$0xff]
    %v2882 = vld [vmem:[#allocation8 + $0x588] sm:$0xff]
    %v2883 = vld [vmem:[#allocation8 + $0x590] sm:$0xff]
    %v2884 = vld [vmem:[#allocation8 + $0x598] sm:$0xff]
    %v2885 = vld [vmem:[#allocation8 + $0x5a0] sm:$0xff]
    %v2886 = vld [vmem:[#allocation8 + $0x5a8] sm:$0xff]
    %v2887 = vld [vmem:[#allocation8 + $0x5b0] sm:$0xff]
    %v2888 = vld [vmem:[#allocation8 + $0x5b8] sm:$0xff]
    %v2889 = vld [vmem:[#allocation8 + $0x5c0] sm:$0xff]
    %v2890 = vld [vmem:[#allocation8 + $0x5c8] sm:$0xff]
    %v2891 = vld [vmem:[#allocation8 + $0x5d0] sm:$0xff]
    %v2892 = vld [vmem:[#allocation8 + $0x5d8] sm:$0xff]
    %v2893 = vld [vmem:[#allocation8 + $0x5e0] sm:$0xff]
    %v2894 = vld [vmem:[#allocation8 + $0x5e8] sm:$0xff]
    %v2895 = vld [vmem:[#allocation8 + $0x5f0] sm:$0xff]
    %v2896 = vld [vmem:[#allocation8 + $0x5f8] sm:$0xff]
    %v2897 = vld [vmem:[#allocation8 + $0x600] sm:$0xff]
    %v2898 = vld [vmem:[#allocation8 + $0x608] sm:$0xff]
    %v2899 = vld [vmem:[#allocation8 + $0x610] sm:$0xff]
    %v2900 = vld [vmem:[#allocation8 + $0x618] sm:$0xff]
    %v2901 = vld [vmem:[#allocation8 + $0x620] sm:$0xff]
    %v2902 = vld [vmem:[#allocation8 + $0x628] sm:$0xff]
    %v2903 = vld [vmem:[#allocation8 + $0x630] sm:$0xff]
    %v2904 = vld [vmem:[#allocation8 + $0x638] sm:$0xff]
    %v2905 = vld [vmem:[#allocation8 + $0x640] sm:$0xff]
    %v2906 = vld [vmem:[#allocation8 + $0x648] sm:$0xff]
    %v2907 = vld [vmem:[#allocation8 + $0x650] sm:$0xff]
    %v2908 = vld [vmem:[#allocation8 + $0x658] sm:$0xff]
    %v2909 = vld [vmem:[#allocation8 + $0x660] sm:$0xff]
    %v2910 = vld [vmem:[#allocation8 + $0x668] sm:$0xff]
    %v2911 = vld [vmem:[#allocation8 + $0x670] sm:$0xff]
    %v2912 = vld [vmem:[#allocation8 + $0x678] sm:$0xff]
    %v2913 = vld [vmem:[#allocation8 + $0x680] sm:$0xff]
    %v2914 = vld [vmem:[#allocation8 + $0x688] sm:$0xff]
    %v2915 = vld [vmem:[#allocation8 + $0x690] sm:$0xff]
    %v2916 = vld [vmem:[#allocation8 + $0x698] sm:$0xff]
    %v2917 = vld [vmem:[#allocation8 + $0x6a0] sm:$0xff]
    %v2918 = vld [vmem:[#allocation8 + $0x6a8] sm:$0xff]
    %v2919 = vld [vmem:[#allocation8 + $0x6b0] sm:$0xff]
    %v2920 = vld [vmem:[#allocation8 + $0x6b8] sm:$0xff]
    %v2921 = vld [vmem:[#allocation8 + $0x6c0] sm:$0xff]
    %v2922 = vld [vmem:[#allocation8 + $0x6c8] sm:$0xff]
    %v2923 = vld [vmem:[#allocation8 + $0x6d0] sm:$0xff]
    %v2924 = vld [vmem:[#allocation8 + $0x6d8] sm:$0xff]
    %v2925 = vld [vmem:[#allocation8 + $0x6e0] sm:$0xff]
    %v2926 = vld [vmem:[#allocation8 + $0x6e8] sm:$0xff]
    %v2927 = vld [vmem:[#allocation8 + $0x6f0] sm:$0xff]
    %v2928 = vld [vmem:[#allocation8 + $0x6f8] sm:$0xff]
    %v2929 = vld [vmem:[#allocation8 + $0x700] sm:$0xff]
    %v2930 = vld [vmem:[#allocation8 + $0x708] sm:$0xff]
    %v2931 = vld [vmem:[#allocation8 + $0x710] sm:$0xff]
    %v2932 = vld [vmem:[#allocation8 + $0x718] sm:$0xff]
    %v2933 = vld [vmem:[#allocation8 + $0x720] sm:$0xff]
    %v2934 = vld [vmem:[#allocation8 + $0x728] sm:$0xff]
    %v2935 = vld [vmem:[#allocation8 + $0x730] sm:$0xff]
    %v2936 = vld [vmem:[#allocation8 + $0x738] sm:$0xff]
    %v2937 = vld [vmem:[#allocation8 + $0x740] sm:$0xff]
    %v2938 = vld [vmem:[#allocation8 + $0x748] sm:$0xff]
    %v2939 = vld [vmem:[#allocation8 + $0x750] sm:$0xff]
    %v2940 = vld [vmem:[#allocation8 + $0x758] sm:$0xff]
    %v2941 = vld [vmem:[#allocation8 + $0x760] sm:$0xff]
    %v2942 = vld [vmem:[#allocation8 + $0x768] sm:$0xff]
    %v2943 = vld [vmem:[#allocation8 + $0x770] sm:$0xff]
    %v2944 = vld [vmem:[#allocation8 + $0x778] sm:$0xff]
    %v2945 = vld [vmem:[#allocation8 + $0x780] sm:$0xff]
    %v2946 = vld [vmem:[#allocation8 + $0x788] sm:$0xff]
    %v2947 = vld [vmem:[#allocation8 + $0x790] sm:$0xff]
    %v2948 = vld [vmem:[#allocation8 + $0x798] sm:$0xff]
    %v2949 = vld [vmem:[#allocation8 + $0x7a0] sm:$0xff]
    %v2950 = vld [vmem:[#allocation8 + $0x7a8] sm:$0xff]
    %v2951 = vld [vmem:[#allocation8 + $0x7b0] sm:$0xff]
    %v2952 = vld [vmem:[#allocation8 + $0x7b8] sm:$0xff]
    %v2953 = vld [vmem:[#allocation8 + $0x7c0] sm:$0xff]
    %v2954 = vld [vmem:[#allocation8 + $0x7c8] sm:$0xff]
    %v2955 = vld [vmem:[#allocation8 + $0x7d0] sm:$0xff]
    %v2956 = vld [vmem:[#allocation8 + $0x7d8] sm:$0xff]
    %v2957 = vld [vmem:[#allocation8 + $0x7e0] sm:$0xff]
    %v2958 = vld [vmem:[#allocation8 + $0x7e8] sm:$0xff]
    %v2959 = vld [vmem:[#allocation8 + $0x7f0] sm:$0xff]
    %v2960 = vld [vmem:[#allocation8 + $0x7f8] sm:$0xff]
    %v2961 = vld [vmem:[#allocation10] sm:$0xf]
    %v2963 = vlaneseq
    %v2964 = vshrl.u32 %v2963, 7
    %v2965 = vsub.s32 0, %v2964
    %v2966 = vrot.slane %v2961, %v2965
    %v2967 = vlaneseq
    %v2968 = vshrl.u32 %v2967, 7
    %v2969 = vsub.s32 1, %v2968
    %v2970 = vrot.slane %v2961, %v2969
    %v2971 = vlaneseq
    %v2972 = vshrl.u32 %v2971, 7
    %v2973 = vsub.s32 2, %v2972
    %v2974 = vrot.slane %v2961, %v2973
    %v2975 = vlaneseq
    %v2976 = vshrl.u32 %v2975, 7
    %v2977 = vsub.s32 3, %v2976
    %v2978 = vrot.slane %v2961, %v2977
    %v3239 = vunpack.c.l.b16 %v2705
    %v3240 = vunpack.c.h.b16 %v2705
    %v3241 = vunpack.c.l.b16 %v2706
    %v3242 = vunpack.c.h.b16 %v2706
    %v3243 = vunpack.c.l.b16 %v2707
    %v3244 = vunpack.c.h.b16 %v2707
    %v3245 = vunpack.c.l.b16 %v2708
    %v3246 = vunpack.c.h.b16 %v2708
    %v3247 = vunpack.c.l.b16 %v2709
    %v3248 = vunpack.c.h.b16 %v2709
    %v3249 = vunpack.c.l.b16 %v2710
    %v3250 = vunpack.c.h.b16 %v2710
    %v3251 = vunpack.c.l.b16 %v2711
    %v3252 = vunpack.c.h.b16 %v2711
    %v3253 = vunpack.c.l.b16 %v2712
    %v3254 = vunpack.c.h.b16 %v2712
    %v3255 = vunpack.c.l.b16 %v2713
    %v3256 = vunpack.c.h.b16 %v2713
    %v3257 = vunpack.c.l.b16 %v2714
    %v3258 = vunpack.c.h.b16 %v2714
    %v3259 = vunpack.c.l.b16 %v2715
    %v3260 = vunpack.c.h.b16 %v2715
    %v3261 = vunpack.c.l.b16 %v2716
    %v3262 = vunpack.c.h.b16 %v2716
    %v3263 = vunpack.c.l.b16 %v2717
    %v3264 = vunpack.c.h.b16 %v2717
    %v3265 = vunpack.c.l.b16 %v2718
    %v3266 = vunpack.c.h.b16 %v2718
    %v3267 = vunpack.c.l.b16 %v2719
    %v3268 = vunpack.c.h.b16 %v2719
    %v3269 = vunpack.c.l.b16 %v2720
    %v3270 = vunpack.c.h.b16 %v2720
    %v3271 = vunpack.c.l.b16 %v2721
    %v3272 = vunpack.c.h.b16 %v2721
    %v3273 = vunpack.c.l.b16 %v2722
    %v3274 = vunpack.c.h.b16 %v2722
    %v3275 = vunpack.c.l.b16 %v2723
    %v3276 = vunpack.c.h.b16 %v2723
    %v3277 = vunpack.c.l.b16 %v2724
    %v3278 = vunpack.c.h.b16 %v2724
    %v3279 = vunpack.c.l.b16 %v2725
    %v3280 = vunpack.c.h.b16 %v2725
    %v3281 = vunpack.c.l.b16 %v2726
    %v3282 = vunpack.c.h.b16 %v2726
    %v3283 = vunpack.c.l.b16 %v2727
    %v3284 = vunpack.c.h.b16 %v2727
    %v3285 = vunpack.c.l.b16 %v2728
    %v3286 = vunpack.c.h.b16 %v2728
    %v3287 = vunpack.c.l.b16 %v2729
    %v3288 = vunpack.c.h.b16 %v2729
    %v3289 = vunpack.c.l.b16 %v2730
    %v3290 = vunpack.c.h.b16 %v2730
    %v3291 = vunpack.c.l.b16 %v2731
    %v3292 = vunpack.c.h.b16 %v2731
    %v3293 = vunpack.c.l.b16 %v2732
    %v3294 = vunpack.c.h.b16 %v2732
    %v3295 = vunpack.c.l.b16 %v2733
    %v3296 = vunpack.c.h.b16 %v2733
    %v3297 = vunpack.c.l.b16 %v2734
    %v3298 = vunpack.c.h.b16 %v2734
    %v3299 = vunpack.c.l.b16 %v2735
    %v3300 = vunpack.c.h.b16 %v2735
    %v3301 = vunpack.c.l.b16 %v2736
    %v3302 = vunpack.c.h.b16 %v2736
    %v3303 = vunpack.c.l.b16 %v2737
    %v3304 = vunpack.c.h.b16 %v2737
    %v3305 = vunpack.c.l.b16 %v2738
    %v3306 = vunpack.c.h.b16 %v2738
    %v3307 = vunpack.c.l.b16 %v2739
    %v3308 = vunpack.c.h.b16 %v2739
    %v3309 = vunpack.c.l.b16 %v2740
    %v3310 = vunpack.c.h.b16 %v2740
    %v3311 = vunpack.c.l.b16 %v2741
    %v3312 = vunpack.c.h.b16 %v2741
    %v3313 = vunpack.c.l.b16 %v2742
    %v3314 = vunpack.c.h.b16 %v2742
    %v3315 = vunpack.c.l.b16 %v2743
    %v3316 = vunpack.c.h.b16 %v2743
    %v3317 = vunpack.c.l.b16 %v2744
    %v3318 = vunpack.c.h.b16 %v2744
    %v3319 = vunpack.c.l.b16 %v2745
    %v3320 = vunpack.c.h.b16 %v2745
    %v3321 = vunpack.c.l.b16 %v2746
    %v3322 = vunpack.c.h.b16 %v2746
    %v3323 = vunpack.c.l.b16 %v2747
    %v3324 = vunpack.c.h.b16 %v2747
    %v3325 = vunpack.c.l.b16 %v2748
    %v3326 = vunpack.c.h.b16 %v2748
    %v3327 = vunpack.c.l.b16 %v2749
    %v3328 = vunpack.c.h.b16 %v2749
    %v3329 = vunpack.c.l.b16 %v2750
    %v3330 = vunpack.c.h.b16 %v2750
    %v3331 = vunpack.c.l.b16 %v2751
    %v3332 = vunpack.c.h.b16 %v2751
    %v3333 = vunpack.c.l.b16 %v2752
    %v3334 = vunpack.c.h.b16 %v2752
    %v3335 = vunpack.c.l.b16 %v2753
    %v3336 = vunpack.c.h.b16 %v2753
    %v3337 = vunpack.c.l.b16 %v2754
    %v3338 = vunpack.c.h.b16 %v2754
    %v3339 = vunpack.c.l.b16 %v2755
    %v3340 = vunpack.c.h.b16 %v2755
    %v3341 = vunpack.c.l.b16 %v2756
    %v3342 = vunpack.c.h.b16 %v2756
    %v3343 = vunpack.c.l.b16 %v2757
    %v3344 = vunpack.c.h.b16 %v2757
    %v3345 = vunpack.c.l.b16 %v2758
    %v3346 = vunpack.c.h.b16 %v2758
    %v3347 = vunpack.c.l.b16 %v2759
    %v3348 = vunpack.c.h.b16 %v2759
    %v3349 = vunpack.c.l.b16 %v2760
    %v3350 = vunpack.c.h.b16 %v2760
    %v3351 = vunpack.c.l.b16 %v2761
    %v3352 = vunpack.c.h.b16 %v2761
    %v3353 = vunpack.c.l.b16 %v2762
    %v3354 = vunpack.c.h.b16 %v2762
    %v3355 = vunpack.c.l.b16 %v2763
    %v3356 = vunpack.c.h.b16 %v2763
    %v3357 = vunpack.c.l.b16 %v2764
    %v3358 = vunpack.c.h.b16 %v2764
    %v3359 = vunpack.c.l.b16 %v2765
    %v3360 = vunpack.c.h.b16 %v2765
    %v3361 = vunpack.c.l.b16 %v2766
    %v3362 = vunpack.c.h.b16 %v2766
    %v3363 = vunpack.c.l.b16 %v2767
    %v3364 = vunpack.c.h.b16 %v2767
    %v3365 = vunpack.c.l.b16 %v2768
    %v3366 = vunpack.c.h.b16 %v2768
    %v3367 = vunpack.c.l.b16 %v2769
    %v3368 = vunpack.c.h.b16 %v2769
    %v3369 = vunpack.c.l.b16 %v2770
    %v3370 = vunpack.c.h.b16 %v2770
    %v3371 = vunpack.c.l.b16 %v2771
    %v3372 = vunpack.c.h.b16 %v2771
    %v3373 = vunpack.c.l.b16 %v2772
    %v3374 = vunpack.c.h.b16 %v2772
    %v3375 = vunpack.c.l.b16 %v2773
    %v3376 = vunpack.c.h.b16 %v2773
    %v3377 = vunpack.c.l.b16 %v2774
    %v3378 = vunpack.c.h.b16 %v2774
    %v3379 = vunpack.c.l.b16 %v2775
    %v3380 = vunpack.c.h.b16 %v2775
    %v3381 = vunpack.c.l.b16 %v2776
    %v3382 = vunpack.c.h.b16 %v2776
    %v3383 = vunpack.c.l.b16 %v2777
    %v3384 = vunpack.c.h.b16 %v2777
    %v3385 = vunpack.c.l.b16 %v2778
    %v3386 = vunpack.c.h.b16 %v2778
    %v3387 = vunpack.c.l.b16 %v2779
    %v3388 = vunpack.c.h.b16 %v2779
    %v3389 = vunpack.c.l.b16 %v2780
    %v3390 = vunpack.c.h.b16 %v2780
    %v3391 = vunpack.c.l.b16 %v2781
    %v3392 = vunpack.c.h.b16 %v2781
    %v3393 = vunpack.c.l.b16 %v2782
    %v3394 = vunpack.c.h.b16 %v2782
    %v3395 = vunpack.c.l.b16 %v2783
    %v3396 = vunpack.c.h.b16 %v2783
    %v3397 = vunpack.c.l.b16 %v2784
    %v3398 = vunpack.c.h.b16 %v2784
    %v3399 = vunpack.c.l.b16 %v2785
    %v3400 = vunpack.c.h.b16 %v2785
    %v3401 = vunpack.c.l.b16 %v2786
    %v3402 = vunpack.c.h.b16 %v2786
    %v3403 = vunpack.c.l.b16 %v2787
    %v3404 = vunpack.c.h.b16 %v2787
    %v3405 = vunpack.c.l.b16 %v2788
    %v3406 = vunpack.c.h.b16 %v2788
    %v3407 = vunpack.c.l.b16 %v2789
    %v3408 = vunpack.c.h.b16 %v2789
    %v3409 = vunpack.c.l.b16 %v2790
    %v3410 = vunpack.c.h.b16 %v2790
    %v3411 = vunpack.c.l.b16 %v2791
    %v3412 = vunpack.c.h.b16 %v2791
    %v3413 = vunpack.c.l.b16 %v2792
    %v3414 = vunpack.c.h.b16 %v2792
    %v3415 = vunpack.c.l.b16 %v2793
    %v3416 = vunpack.c.h.b16 %v2793
    %v3417 = vunpack.c.l.b16 %v2794
    %v3418 = vunpack.c.h.b16 %v2794
    %v3419 = vunpack.c.l.b16 %v2795
    %v3420 = vunpack.c.h.b16 %v2795
    %v3421 = vunpack.c.l.b16 %v2796
    %v3422 = vunpack.c.h.b16 %v2796
    %v3423 = vunpack.c.l.b16 %v2797
    %v3424 = vunpack.c.h.b16 %v2797
    %v3425 = vunpack.c.l.b16 %v2798
    %v3426 = vunpack.c.h.b16 %v2798
    %v3427 = vunpack.c.l.b16 %v2799
    %v3428 = vunpack.c.h.b16 %v2799
    %v3429 = vunpack.c.l.b16 %v2800
    %v3430 = vunpack.c.h.b16 %v2800
    %v3431 = vunpack.c.l.b16 %v2801
    %v3432 = vunpack.c.h.b16 %v2801
    %v3433 = vunpack.c.l.b16 %v2802
    %v3434 = vunpack.c.h.b16 %v2802
    %v3435 = vunpack.c.l.b16 %v2803
    %v3436 = vunpack.c.h.b16 %v2803
    %v3437 = vunpack.c.l.b16 %v2804
    %v3438 = vunpack.c.h.b16 %v2804
    %v3439 = vunpack.c.l.b16 %v2805
    %v3440 = vunpack.c.h.b16 %v2805
    %v3441 = vunpack.c.l.b16 %v2806
    %v3442 = vunpack.c.h.b16 %v2806
    %v3443 = vunpack.c.l.b16 %v2807
    %v3444 = vunpack.c.h.b16 %v2807
    %v3445 = vunpack.c.l.b16 %v2808
    %v3446 = vunpack.c.h.b16 %v2808
    %v3447 = vunpack.c.l.b16 %v2809
    %v3448 = vunpack.c.h.b16 %v2809
    %v3449 = vunpack.c.l.b16 %v2810
    %v3450 = vunpack.c.h.b16 %v2810
    %v3451 = vunpack.c.l.b16 %v2811
    %v3452 = vunpack.c.h.b16 %v2811
    %v3453 = vunpack.c.l.b16 %v2812
    %v3454 = vunpack.c.h.b16 %v2812
    %v3455 = vunpack.c.l.b16 %v2813
    %v3456 = vunpack.c.h.b16 %v2813
    %v3457 = vunpack.c.l.b16 %v2814
    %v3458 = vunpack.c.h.b16 %v2814
    %v3459 = vunpack.c.l.b16 %v2815
    %v3460 = vunpack.c.h.b16 %v2815
    %v3461 = vunpack.c.l.b16 %v2816
    %v3462 = vunpack.c.h.b16 %v2816
    %v3463 = vunpack.c.l.b16 %v2817
    %v3464 = vunpack.c.h.b16 %v2817
    %v3465 = vunpack.c.l.b16 %v2818
    %v3466 = vunpack.c.h.b16 %v2818
    %v3467 = vunpack.c.l.b16 %v2819
    %v3468 = vunpack.c.h.b16 %v2819
    %v3469 = vunpack.c.l.b16 %v2820
    %v3470 = vunpack.c.h.b16 %v2820
    %v3471 = vunpack.c.l.b16 %v2821
    %v3472 = vunpack.c.h.b16 %v2821
    %v3473 = vunpack.c.l.b16 %v2822
    %v3474 = vunpack.c.h.b16 %v2822
    %v3475 = vunpack.c.l.b16 %v2823
    %v3476 = vunpack.c.h.b16 %v2823
    %v3477 = vunpack.c.l.b16 %v2824
    %v3478 = vunpack.c.h.b16 %v2824
    %v3479 = vunpack.c.l.b16 %v2825
    %v3480 = vunpack.c.h.b16 %v2825
    %v3481 = vunpack.c.l.b16 %v2826
    %v3482 = vunpack.c.h.b16 %v2826
    %v3483 = vunpack.c.l.b16 %v2827
    %v3484 = vunpack.c.h.b16 %v2827
    %v3485 = vunpack.c.l.b16 %v2828
    %v3486 = vunpack.c.h.b16 %v2828
    %v3487 = vunpack.c.l.b16 %v2829
    %v3488 = vunpack.c.h.b16 %v2829
    %v3489 = vunpack.c.l.b16 %v2830
    %v3490 = vunpack.c.h.b16 %v2830
    %v3491 = vunpack.c.l.b16 %v2831
    %v3492 = vunpack.c.h.b16 %v2831
    %v3493 = vunpack.c.l.b16 %v2832
    %v3494 = vunpack.c.h.b16 %v2832
    %v3495 = vunpack.c.l.b16 %v2833
    %v3496 = vunpack.c.h.b16 %v2833
    %v3497 = vunpack.c.l.b16 %v2834
    %v3498 = vunpack.c.h.b16 %v2834
    %v3499 = vunpack.c.l.b16 %v2835
    %v3500 = vunpack.c.h.b16 %v2835
    %v3501 = vunpack.c.l.b16 %v2836
    %v3502 = vunpack.c.h.b16 %v2836
    %v3503 = vunpack.c.l.b16 %v2837
    %v3504 = vunpack.c.h.b16 %v2837
    %v3505 = vunpack.c.l.b16 %v2838
    %v3506 = vunpack.c.h.b16 %v2838
    %v3507 = vunpack.c.l.b16 %v2839
    %v3508 = vunpack.c.h.b16 %v2839
    %v3509 = vunpack.c.l.b16 %v2840
    %v3510 = vunpack.c.h.b16 %v2840
    %v3511 = vunpack.c.l.b16 %v2841
    %v3512 = vunpack.c.h.b16 %v2841
    %v3513 = vunpack.c.l.b16 %v2842
    %v3514 = vunpack.c.h.b16 %v2842
    %v3515 = vunpack.c.l.b16 %v2843
    %v3516 = vunpack.c.h.b16 %v2843
    %v3517 = vunpack.c.l.b16 %v2844
    %v3518 = vunpack.c.h.b16 %v2844
    %v3519 = vunpack.c.l.b16 %v2845
    %v3520 = vunpack.c.h.b16 %v2845
    %v3521 = vunpack.c.l.b16 %v2846
    %v3522 = vunpack.c.h.b16 %v2846
    %v3523 = vunpack.c.l.b16 %v2847
    %v3524 = vunpack.c.h.b16 %v2847
    %v3525 = vunpack.c.l.b16 %v2848
    %v3526 = vunpack.c.h.b16 %v2848
    %v3527 = vunpack.c.l.b16 %v2849
    %v3528 = vunpack.c.h.b16 %v2849
    %v3529 = vunpack.c.l.b16 %v2850
    %v3530 = vunpack.c.h.b16 %v2850
    %v3531 = vunpack.c.l.b16 %v2851
    %v3532 = vunpack.c.h.b16 %v2851
    %v3533 = vunpack.c.l.b16 %v2852
    %v3534 = vunpack.c.h.b16 %v2852
    %v3535 = vunpack.c.l.b16 %v2853
    %v3536 = vunpack.c.h.b16 %v2853
    %v3537 = vunpack.c.l.b16 %v2854
    %v3538 = vunpack.c.h.b16 %v2854
    %v3539 = vunpack.c.l.b16 %v2855
    %v3540 = vunpack.c.h.b16 %v2855
    %v3541 = vunpack.c.l.b16 %v2856
    %v3542 = vunpack.c.h.b16 %v2856
    %v3543 = vunpack.c.l.b16 %v2857
    %v3544 = vunpack.c.h.b16 %v2857
    %v3545 = vunpack.c.l.b16 %v2858
    %v3546 = vunpack.c.h.b16 %v2858
    %v3547 = vunpack.c.l.b16 %v2859
    %v3548 = vunpack.c.h.b16 %v2859
    %v3549 = vunpack.c.l.b16 %v2860
    %v3550 = vunpack.c.h.b16 %v2860
    %v3551 = vunpack.c.l.b16 %v2861
    %v3552 = vunpack.c.h.b16 %v2861
    %v3553 = vunpack.c.l.b16 %v2862
    %v3554 = vunpack.c.h.b16 %v2862
    %v3555 = vunpack.c.l.b16 %v2863
    %v3556 = vunpack.c.h.b16 %v2863
    %v3557 = vunpack.c.l.b16 %v2864
    %v3558 = vunpack.c.h.b16 %v2864
    %v3559 = vunpack.c.l.b16 %v2865
    %v3560 = vunpack.c.h.b16 %v2865
    %v3561 = vunpack.c.l.b16 %v2866
    %v3562 = vunpack.c.h.b16 %v2866
    %v3563 = vunpack.c.l.b16 %v2867
    %v3564 = vunpack.c.h.b16 %v2867
    %v3565 = vunpack.c.l.b16 %v2868
    %v3566 = vunpack.c.h.b16 %v2868
    %v3567 = vunpack.c.l.b16 %v2869
    %v3568 = vunpack.c.h.b16 %v2869
    %v3569 = vunpack.c.l.b16 %v2870
    %v3570 = vunpack.c.h.b16 %v2870
    %v3571 = vunpack.c.l.b16 %v2871
    %v3572 = vunpack.c.h.b16 %v2871
    %v3573 = vunpack.c.l.b16 %v2872
    %v3574 = vunpack.c.h.b16 %v2872
    %v3575 = vunpack.c.l.b16 %v2873
    %v3576 = vunpack.c.h.b16 %v2873
    %v3577 = vunpack.c.l.b16 %v2874
    %v3578 = vunpack.c.h.b16 %v2874
    %v3579 = vunpack.c.l.b16 %v2875
    %v3580 = vunpack.c.h.b16 %v2875
    %v3581 = vunpack.c.l.b16 %v2876
    %v3582 = vunpack.c.h.b16 %v2876
    %v3583 = vunpack.c.l.b16 %v2877
    %v3584 = vunpack.c.h.b16 %v2877
    %v3585 = vunpack.c.l.b16 %v2878
    %v3586 = vunpack.c.h.b16 %v2878
    %v3587 = vunpack.c.l.b16 %v2879
    %v3588 = vunpack.c.h.b16 %v2879
    %v3589 = vunpack.c.l.b16 %v2880
    %v3590 = vunpack.c.h.b16 %v2880
    %v3591 = vunpack.c.l.b16 %v2881
    %v3592 = vunpack.c.h.b16 %v2881
    %v3593 = vunpack.c.l.b16 %v2882
    %v3594 = vunpack.c.h.b16 %v2882
    %v3595 = vunpack.c.l.b16 %v2883
    %v3596 = vunpack.c.h.b16 %v2883
    %v3597 = vunpack.c.l.b16 %v2884
    %v3598 = vunpack.c.h.b16 %v2884
    %v3599 = vunpack.c.l.b16 %v2885
    %v3600 = vunpack.c.h.b16 %v2885
    %v3601 = vunpack.c.l.b16 %v2886
    %v3602 = vunpack.c.h.b16 %v2886
    %v3603 = vunpack.c.l.b16 %v2887
    %v3604 = vunpack.c.h.b16 %v2887
    %v3605 = vunpack.c.l.b16 %v2888
    %v3606 = vunpack.c.h.b16 %v2888
    %v3607 = vunpack.c.l.b16 %v2889
    %v3608 = vunpack.c.h.b16 %v2889
    %v3609 = vunpack.c.l.b16 %v2890
    %v3610 = vunpack.c.h.b16 %v2890
    %v3611 = vunpack.c.l.b16 %v2891
    %v3612 = vunpack.c.h.b16 %v2891
    %v3613 = vunpack.c.l.b16 %v2892
    %v3614 = vunpack.c.h.b16 %v2892
    %v3615 = vunpack.c.l.b16 %v2893
    %v3616 = vunpack.c.h.b16 %v2893
    %v3617 = vunpack.c.l.b16 %v2894
    %v3618 = vunpack.c.h.b16 %v2894
    %v3619 = vunpack.c.l.b16 %v2895
    %v3620 = vunpack.c.h.b16 %v2895
    %v3621 = vunpack.c.l.b16 %v2896
    %v3622 = vunpack.c.h.b16 %v2896
    %v3623 = vunpack.c.l.b16 %v2897
    %v3624 = vunpack.c.h.b16 %v2897
    %v3625 = vunpack.c.l.b16 %v2898
    %v3626 = vunpack.c.h.b16 %v2898
    %v3627 = vunpack.c.l.b16 %v2899
    %v3628 = vunpack.c.h.b16 %v2899
    %v3629 = vunpack.c.l.b16 %v2900
    %v3630 = vunpack.c.h.b16 %v2900
    %v3631 = vunpack.c.l.b16 %v2901
    %v3632 = vunpack.c.h.b16 %v2901
    %v3633 = vunpack.c.l.b16 %v2902
    %v3634 = vunpack.c.h.b16 %v2902
    %v3635 = vunpack.c.l.b16 %v2903
    %v3636 = vunpack.c.h.b16 %v2903
    %v3637 = vunpack.c.l.b16 %v2904
    %v3638 = vunpack.c.h.b16 %v2904
    %v3639 = vunpack.c.l.b16 %v2905
    %v3640 = vunpack.c.h.b16 %v2905
    %v3641 = vunpack.c.l.b16 %v2906
    %v3642 = vunpack.c.h.b16 %v2906
    %v3643 = vunpack.c.l.b16 %v2907
    %v3644 = vunpack.c.h.b16 %v2907
    %v3645 = vunpack.c.l.b16 %v2908
    %v3646 = vunpack.c.h.b16 %v2908
    %v3647 = vunpack.c.l.b16 %v2909
    %v3648 = vunpack.c.h.b16 %v2909
    %v3649 = vunpack.c.l.b16 %v2910
    %v3650 = vunpack.c.h.b16 %v2910
    %v3651 = vunpack.c.l.b16 %v2911
    %v3652 = vunpack.c.h.b16 %v2911
    %v3653 = vunpack.c.l.b16 %v2912
    %v3654 = vunpack.c.h.b16 %v2912
    %v3655 = vunpack.c.l.b16 %v2913
    %v3656 = vunpack.c.h.b16 %v2913
    %v3657 = vunpack.c.l.b16 %v2914
    %v3658 = vunpack.c.h.b16 %v2914
    %v3659 = vunpack.c.l.b16 %v2915
    %v3660 = vunpack.c.h.b16 %v2915
    %v3661 = vunpack.c.l.b16 %v2916
    %v3662 = vunpack.c.h.b16 %v2916
    %v3663 = vunpack.c.l.b16 %v2917
    %v3664 = vunpack.c.h.b16 %v2917
    %v3665 = vunpack.c.l.b16 %v2918
    %v3666 = vunpack.c.h.b16 %v2918
    %v3667 = vunpack.c.l.b16 %v2919
    %v3668 = vunpack.c.h.b16 %v2919
    %v3669 = vunpack.c.l.b16 %v2920
    %v3670 = vunpack.c.h.b16 %v2920
    %v3671 = vunpack.c.l.b16 %v2921
    %v3672 = vunpack.c.h.b16 %v2921
    %v3673 = vunpack.c.l.b16 %v2922
    %v3674 = vunpack.c.h.b16 %v2922
    %v3675 = vunpack.c.l.b16 %v2923
    %v3676 = vunpack.c.h.b16 %v2923
    %v3677 = vunpack.c.l.b16 %v2924
    %v3678 = vunpack.c.h.b16 %v2924
    %v3679 = vunpack.c.l.b16 %v2925
    %v3680 = vunpack.c.h.b16 %v2925
    %v3681 = vunpack.c.l.b16 %v2926
    %v3682 = vunpack.c.h.b16 %v2926
    %v3683 = vunpack.c.l.b16 %v2927
    %v3684 = vunpack.c.h.b16 %v2927
    %v3685 = vunpack.c.l.b16 %v2928
    %v3686 = vunpack.c.h.b16 %v2928
    %v3687 = vunpack.c.l.b16 %v2929
    %v3688 = vunpack.c.h.b16 %v2929
    %v3689 = vunpack.c.l.b16 %v2930
    %v3690 = vunpack.c.h.b16 %v2930
    %v3691 = vunpack.c.l.b16 %v2931
    %v3692 = vunpack.c.h.b16 %v2931
    %v3693 = vunpack.c.l.b16 %v2932
    %v3694 = vunpack.c.h.b16 %v2932
    %v3695 = vunpack.c.l.b16 %v2933
    %v3696 = vunpack.c.h.b16 %v2933
    %v3697 = vunpack.c.l.b16 %v2934
    %v3698 = vunpack.c.h.b16 %v2934
    %v3699 = vunpack.c.l.b16 %v2935
    %v3700 = vunpack.c.h.b16 %v2935
    %v3701 = vunpack.c.l.b16 %v2936
    %v3702 = vunpack.c.h.b16 %v2936
    %v3703 = vunpack.c.l.b16 %v2937
    %v3704 = vunpack.c.h.b16 %v2937
    %v3705 = vunpack.c.l.b16 %v2938
    %v3706 = vunpack.c.h.b16 %v2938
    %v3707 = vunpack.c.l.b16 %v2939
    %v3708 = vunpack.c.h.b16 %v2939
    %v3709 = vunpack.c.l.b16 %v2940
    %v3710 = vunpack.c.h.b16 %v2940
    %v3711 = vunpack.c.l.b16 %v2941
    %v3712 = vunpack.c.h.b16 %v2941
    %v3713 = vunpack.c.l.b16 %v2942
    %v3714 = vunpack.c.h.b16 %v2942
    %v3715 = vunpack.c.l.b16 %v2943
    %v3716 = vunpack.c.h.b16 %v2943
    %v3717 = vunpack.c.l.b16 %v2944
    %v3718 = vunpack.c.h.b16 %v2944
    %v3719 = vunpack.c.l.b16 %v2945
    %v3720 = vunpack.c.h.b16 %v2945
    %v3721 = vunpack.c.l.b16 %v2946
    %v3722 = vunpack.c.h.b16 %v2946
    %v3723 = vunpack.c.l.b16 %v2947
    %v3724 = vunpack.c.h.b16 %v2947
    %v3725 = vunpack.c.l.b16 %v2948
    %v3726 = vunpack.c.h.b16 %v2948
    %v3727 = vunpack.c.l.b16 %v2949
    %v3728 = vunpack.c.h.b16 %v2949
    %v3729 = vunpack.c.l.b16 %v2950
    %v3730 = vunpack.c.h.b16 %v2950
    %v3731 = vunpack.c.l.b16 %v2951
    %v3732 = vunpack.c.h.b16 %v2951
    %v3733 = vunpack.c.l.b16 %v2952
    %v3734 = vunpack.c.h.b16 %v2952
    %v3735 = vunpack.c.l.b16 %v2953
    %v3736 = vunpack.c.h.b16 %v2953
    %v3737 = vunpack.c.l.b16 %v2954
    %v3738 = vunpack.c.h.b16 %v2954
    %v3739 = vunpack.c.l.b16 %v2955
    %v3740 = vunpack.c.h.b16 %v2955
    %v3741 = vunpack.c.l.b16 %v2956
    %v3742 = vunpack.c.h.b16 %v2956
    %v3743 = vunpack.c.l.b16 %v2957
    %v3744 = vunpack.c.h.b16 %v2957
    %v3745 = vunpack.c.l.b16 %v2958
    %v3746 = vunpack.c.h.b16 %v2958
    %v3747 = vunpack.c.l.b16 %v2959
    %v3748 = vunpack.c.h.b16 %v2959
    %v3749 = vunpack.c.l.b16 %v2960
    %v3750 = vunpack.c.h.b16 %v2960
    %v3751 = vpack.c.b16 %v3243, %v3239
    %v3752 = vpack.c.b16 %v3244, %v3240
    %v3753 = vpack.c.b16 %v3245, %v3241
    %v3754 = vpack.c.b16 %v3246, %v3242
    %v3755 = vpack.c.b16 %v3251, %v3247
    %v3756 = vpack.c.b16 %v3252, %v3248
    %v3757 = vpack.c.b16 %v3253, %v3249
    %v3758 = vpack.c.b16 %v3254, %v3250
    %v3759 = vpack.c.b16 %v3259, %v3255
    %v3760 = vpack.c.b16 %v3260, %v3256
    %v3761 = vpack.c.b16 %v3261, %v3257
    %v3762 = vpack.c.b16 %v3262, %v3258
    %v3763 = vpack.c.b16 %v3267, %v3263
    %v3764 = vpack.c.b16 %v3268, %v3264
    %v3765 = vpack.c.b16 %v3269, %v3265
    %v3766 = vpack.c.b16 %v3270, %v3266
    %v3767 = vpack.c.b16 %v3275, %v3271
    %v3768 = vpack.c.b16 %v3276, %v3272
    %v3769 = vpack.c.b16 %v3277, %v3273
    %v3770 = vpack.c.b16 %v3278, %v3274
    %v3771 = vpack.c.b16 %v3283, %v3279
    %v3772 = vpack.c.b16 %v3284, %v3280
    %v3773 = vpack.c.b16 %v3285, %v3281
    %v3774 = vpack.c.b16 %v3286, %v3282
    %v3775 = vpack.c.b16 %v3291, %v3287
    %v3776 = vpack.c.b16 %v3292, %v3288
    %v3777 = vpack.c.b16 %v3293, %v3289
    %v3778 = vpack.c.b16 %v3294, %v3290
    %v3779 = vpack.c.b16 %v3299, %v3295
    %v3780 = vpack.c.b16 %v3300, %v3296
    %v3781 = vpack.c.b16 %v3301, %v3297
    %v3782 = vpack.c.b16 %v3302, %v3298
    %v3783 = vpack.c.b16 %v3307, %v3303
    %v3784 = vpack.c.b16 %v3308, %v3304
    %v3785 = vpack.c.b16 %v3309, %v3305
    %v3786 = vpack.c.b16 %v3310, %v3306
    %v3787 = vpack.c.b16 %v3315, %v3311
    %v3788 = vpack.c.b16 %v3316, %v3312
    %v3789 = vpack.c.b16 %v3317, %v3313
    %v3790 = vpack.c.b16 %v3318, %v3314
    %v3791 = vpack.c.b16 %v3323, %v3319
    %v3792 = vpack.c.b16 %v3324, %v3320
    %v3793 = vpack.c.b16 %v3325, %v3321
    %v3794 = vpack.c.b16 %v3326, %v3322
    %v3795 = vpack.c.b16 %v3331, %v3327
    %v3796 = vpack.c.b16 %v3332, %v3328
    %v3797 = vpack.c.b16 %v3333, %v3329
    %v3798 = vpack.c.b16 %v3334, %v3330
    %v3799 = vpack.c.b16 %v3339, %v3335
    %v3800 = vpack.c.b16 %v3340, %v3336
    %v3801 = vpack.c.b16 %v3341, %v3337
    %v3802 = vpack.c.b16 %v3342, %v3338
    %v3803 = vpack.c.b16 %v3347, %v3343
    %v3804 = vpack.c.b16 %v3348, %v3344
    %v3805 = vpack.c.b16 %v3349, %v3345
    %v3806 = vpack.c.b16 %v3350, %v3346
    %v3807 = vpack.c.b16 %v3355, %v3351
    %v3808 = vpack.c.b16 %v3356, %v3352
    %v3809 = vpack.c.b16 %v3357, %v3353
    %v3810 = vpack.c.b16 %v3358, %v3354
    %v3811 = vpack.c.b16 %v3363, %v3359
    %v3812 = vpack.c.b16 %v3364, %v3360
    %v3813 = vpack.c.b16 %v3365, %v3361
    %v3814 = vpack.c.b16 %v3366, %v3362
    %v3815 = vpack.c.b16 %v3371, %v3367
    %v3816 = vpack.c.b16 %v3372, %v3368
    %v3817 = vpack.c.b16 %v3373, %v3369
    %v3818 = vpack.c.b16 %v3374, %v3370
    %v3819 = vpack.c.b16 %v3379, %v3375
    %v3820 = vpack.c.b16 %v3380, %v3376
    %v3821 = vpack.c.b16 %v3381, %v3377
    %v3822 = vpack.c.b16 %v3382, %v3378
    %v3823 = vpack.c.b16 %v3387, %v3383
    %v3824 = vpack.c.b16 %v3388, %v3384
    %v3825 = vpack.c.b16 %v3389, %v3385
    %v3826 = vpack.c.b16 %v3390, %v3386
    %v3827 = vpack.c.b16 %v3395, %v3391
    %v3828 = vpack.c.b16 %v3396, %v3392
    %v3829 = vpack.c.b16 %v3397, %v3393
    %v3830 = vpack.c.b16 %v3398, %v3394
    %v3831 = vpack.c.b16 %v3403, %v3399
    %v3832 = vpack.c.b16 %v3404, %v3400
    %v3833 = vpack.c.b16 %v3405, %v3401
    %v3834 = vpack.c.b16 %v3406, %v3402
    %v3835 = vpack.c.b16 %v3411, %v3407
    %v3836 = vpack.c.b16 %v3412, %v3408
    %v3837 = vpack.c.b16 %v3413, %v3409
    %v3838 = vpack.c.b16 %v3414, %v3410
    %v3839 = vpack.c.b16 %v3419, %v3415
    %v3840 = vpack.c.b16 %v3420, %v3416
    %v3841 = vpack.c.b16 %v3421, %v3417
    %v3842 = vpack.c.b16 %v3422, %v3418
    %v3843 = vpack.c.b16 %v3427, %v3423
    %v3844 = vpack.c.b16 %v3428, %v3424
    %v3845 = vpack.c.b16 %v3429, %v3425
    %v3846 = vpack.c.b16 %v3430, %v3426
    %v3847 = vpack.c.b16 %v3435, %v3431
    %v3848 = vpack.c.b16 %v3436, %v3432
    %v3849 = vpack.c.b16 %v3437, %v3433
    %v3850 = vpack.c.b16 %v3438, %v3434
    %v3851 = vpack.c.b16 %v3443, %v3439
    %v3852 = vpack.c.b16 %v3444, %v3440
    %v3853 = vpack.c.b16 %v3445, %v3441
    %v3854 = vpack.c.b16 %v3446, %v3442
    %v3855 = vpack.c.b16 %v3451, %v3447
    %v3856 = vpack.c.b16 %v3452, %v3448
    %v3857 = vpack.c.b16 %v3453, %v3449
    %v3858 = vpack.c.b16 %v3454, %v3450
    %v3859 = vpack.c.b16 %v3459, %v3455
    %v3860 = vpack.c.b16 %v3460, %v3456
    %v3861 = vpack.c.b16 %v3461, %v3457
    %v3862 = vpack.c.b16 %v3462, %v3458
    %v3863 = vpack.c.b16 %v3467, %v3463
    %v3864 = vpack.c.b16 %v3468, %v3464
    %v3865 = vpack.c.b16 %v3469, %v3465
    %v3866 = vpack.c.b16 %v3470, %v3466
    %v3867 = vpack.c.b16 %v3475, %v3471
    %v3868 = vpack.c.b16 %v3476, %v3472
    %v3869 = vpack.c.b16 %v3477, %v3473
    %v3870 = vpack.c.b16 %v3478, %v3474
    %v3871 = vpack.c.b16 %v3483, %v3479
    %v3872 = vpack.c.b16 %v3484, %v3480
    %v3873 = vpack.c.b16 %v3485, %v3481
    %v3874 = vpack.c.b16 %v3486, %v3482
    %v3875 = vpack.c.b16 %v3491, %v3487
    %v3876 = vpack.c.b16 %v3492, %v3488
    %v3877 = vpack.c.b16 %v3493, %v3489
    %v3878 = vpack.c.b16 %v3494, %v3490
    %v3879 = vpack.c.b16 %v3499, %v3495
    %v3880 = vpack.c.b16 %v3500, %v3496
    %v3881 = vpack.c.b16 %v3501, %v3497
    %v3882 = vpack.c.b16 %v3502, %v3498
    %v3883 = vpack.c.b16 %v3507, %v3503
    %v3884 = vpack.c.b16 %v3508, %v3504
    %v3885 = vpack.c.b16 %v3509, %v3505
    %v3886 = vpack.c.b16 %v3510, %v3506
    %v3887 = vpack.c.b16 %v3515, %v3511
    %v3888 = vpack.c.b16 %v3516, %v3512
    %v3889 = vpack.c.b16 %v3517, %v3513
    %v3890 = vpack.c.b16 %v3518, %v3514
    %v3891 = vpack.c.b16 %v3523, %v3519
    %v3892 = vpack.c.b16 %v3524, %v3520
    %v3893 = vpack.c.b16 %v3525, %v3521
    %v3894 = vpack.c.b16 %v3526, %v3522
    %v3895 = vpack.c.b16 %v3531, %v3527
    %v3896 = vpack.c.b16 %v3532, %v3528
    %v3897 = vpack.c.b16 %v3533, %v3529
    %v3898 = vpack.c.b16 %v3534, %v3530
    %v3899 = vpack.c.b16 %v3539, %v3535
    %v3900 = vpack.c.b16 %v3540, %v3536
    %v3901 = vpack.c.b16 %v3541, %v3537
    %v3902 = vpack.c.b16 %v3542, %v3538
    %v3903 = vpack.c.b16 %v3547, %v3543
    %v3904 = vpack.c.b16 %v3548, %v3544
    %v3905 = vpack.c.b16 %v3549, %v3545
    %v3906 = vpack.c.b16 %v3550, %v3546
    %v3907 = vpack.c.b16 %v3555, %v3551
    %v3908 = vpack.c.b16 %v3556, %v3552
    %v3909 = vpack.c.b16 %v3557, %v3553
    %v3910 = vpack.c.b16 %v3558, %v3554
    %v3911 = vpack.c.b16 %v3563, %v3559
    %v3912 = vpack.c.b16 %v3564, %v3560
    %v3913 = vpack.c.b16 %v3565, %v3561
    %v3914 = vpack.c.b16 %v3566, %v3562
    %v3915 = vpack.c.b16 %v3571, %v3567
    %v3916 = vpack.c.b16 %v3572, %v3568
    %v3917 = vpack.c.b16 %v3573, %v3569
    %v3918 = vpack.c.b16 %v3574, %v3570
    %v3919 = vpack.c.b16 %v3579, %v3575
    %v3920 = vpack.c.b16 %v3580, %v3576
    %v3921 = vpack.c.b16 %v3581, %v3577
    %v3922 = vpack.c.b16 %v3582, %v3578
    %v3923 = vpack.c.b16 %v3587, %v3583
    %v3924 = vpack.c.b16 %v3588, %v3584
    %v3925 = vpack.c.b16 %v3589, %v3585
    %v3926 = vpack.c.b16 %v3590, %v3586
    %v3927 = vpack.c.b16 %v3595, %v3591
    %v3928 = vpack.c.b16 %v3596, %v3592
    %v3929 = vpack.c.b16 %v3597, %v3593
    %v3930 = vpack.c.b16 %v3598, %v3594
    %v3931 = vpack.c.b16 %v3603, %v3599
    %v3932 = vpack.c.b16 %v3604, %v3600
    %v3933 = vpack.c.b16 %v3605, %v3601
    %v3934 = vpack.c.b16 %v3606, %v3602
    %v3935 = vpack.c.b16 %v3611, %v3607
    %v3936 = vpack.c.b16 %v3612, %v3608
    %v3937 = vpack.c.b16 %v3613, %v3609
    %v3938 = vpack.c.b16 %v3614, %v3610
    %v3939 = vpack.c.b16 %v3619, %v3615
    %v3940 = vpack.c.b16 %v3620, %v3616
    %v3941 = vpack.c.b16 %v3621, %v3617
    %v3942 = vpack.c.b16 %v3622, %v3618
    %v3943 = vpack.c.b16 %v3627, %v3623
    %v3944 = vpack.c.b16 %v3628, %v3624
    %v3945 = vpack.c.b16 %v3629, %v3625
    %v3946 = vpack.c.b16 %v3630, %v3626
    %v3947 = vpack.c.b16 %v3635, %v3631
    %v3948 = vpack.c.b16 %v3636, %v3632
    %v3949 = vpack.c.b16 %v3637, %v3633
    %v3950 = vpack.c.b16 %v3638, %v3634
    %v3951 = vpack.c.b16 %v3643, %v3639
    %v3952 = vpack.c.b16 %v3644, %v3640
    %v3953 = vpack.c.b16 %v3645, %v3641
    %v3954 = vpack.c.b16 %v3646, %v3642
    %v3955 = vpack.c.b16 %v3651, %v3647
    %v3956 = vpack.c.b16 %v3652, %v3648
    %v3957 = vpack.c.b16 %v3653, %v3649
    %v3958 = vpack.c.b16 %v3654, %v3650
    %v3959 = vpack.c.b16 %v3659, %v3655
    %v3960 = vpack.c.b16 %v3660, %v3656
    %v3961 = vpack.c.b16 %v3661, %v3657
    %v3962 = vpack.c.b16 %v3662, %v3658
    %v3963 = vpack.c.b16 %v3667, %v3663
    %v3964 = vpack.c.b16 %v3668, %v3664
    %v3965 = vpack.c.b16 %v3669, %v3665
    %v3966 = vpack.c.b16 %v3670, %v3666
    %v3967 = vpack.c.b16 %v3675, %v3671
    %v3968 = vpack.c.b16 %v3676, %v3672
    %v3969 = vpack.c.b16 %v3677, %v3673
    %v3970 = vpack.c.b16 %v3678, %v3674
    %v3971 = vpack.c.b16 %v3683, %v3679
    %v3972 = vpack.c.b16 %v3684, %v3680
    %v3973 = vpack.c.b16 %v3685, %v3681
    %v3974 = vpack.c.b16 %v3686, %v3682
    %v3975 = vpack.c.b16 %v3691, %v3687
    %v3976 = vpack.c.b16 %v3692, %v3688
    %v3977 = vpack.c.b16 %v3693, %v3689
    %v3978 = vpack.c.b16 %v3694, %v3690
    %v3979 = vpack.c.b16 %v3699, %v3695
    %v3980 = vpack.c.b16 %v3700, %v3696
    %v3981 = vpack.c.b16 %v3701, %v3697
    %v3982 = vpack.c.b16 %v3702, %v3698
    %v3983 = vpack.c.b16 %v3707, %v3703
    %v3984 = vpack.c.b16 %v3708, %v3704
    %v3985 = vpack.c.b16 %v3709, %v3705
    %v3986 = vpack.c.b16 %v3710, %v3706
    %v3987 = vpack.c.b16 %v3715, %v3711
    %v3988 = vpack.c.b16 %v3716, %v3712
    %v3989 = vpack.c.b16 %v3717, %v3713
    %v3990 = vpack.c.b16 %v3718, %v3714
    %v3991 = vpack.c.b16 %v3723, %v3719
    %v3992 = vpack.c.b16 %v3724, %v3720
    %v3993 = vpack.c.b16 %v3725, %v3721
    %v3994 = vpack.c.b16 %v3726, %v3722
    %v3995 = vpack.c.b16 %v3731, %v3727
    %v3996 = vpack.c.b16 %v3732, %v3728
    %v3997 = vpack.c.b16 %v3733, %v3729
    %v3998 = vpack.c.b16 %v3734, %v3730
    %v3999 = vpack.c.b16 %v3739, %v3735
    %v4000 = vpack.c.b16 %v3740, %v3736
    %v4001 = vpack.c.b16 %v3741, %v3737
    %v4002 = vpack.c.b16 %v3742, %v3738
    %v4003 = vpack.c.b16 %v3747, %v3743
    %v4004 = vpack.c.b16 %v3748, %v3744
    %v4005 = vpack.c.b16 %v3749, %v3745
    %v4006 = vpack.c.b16 %v3750, %v3746
    %4263 = vmatprep.subr.bf16.mxu0 %v3752
    %4264 = vmatpush1.bf16.msra.mxu0 %v3751
    %4265 = vmatprep.subr.bf16.mxu0 %v3756
    %4266 = vmatpush1.bf16.msra.mxu0 %v3755
    %4267 = vmatprep.subr.bf16.mxu0 %v3760
    %4268 = vmatpush1.bf16.msra.mxu0 %v3759
    %4269 = vmatprep.subr.bf16.mxu0 %v3764
    %4270 = vmatpush1.bf16.msra.mxu0 %v3763
    %4271 = vmatprep.subr.bf16.mxu0 %v3768
    %4272 = vmatpush1.bf16.msra.mxu0 %v3767
    %4273 = vmatprep.subr.bf16.mxu0 %v3772
    %4274 = vmatpush1.bf16.msra.mxu0 %v3771
    %4275 = vmatprep.subr.bf16.mxu0 %v3776
    %4276 = vmatpush1.bf16.msra.mxu0 %v3775
    %4277 = vmatprep.subr.bf16.mxu0 %v3780
    %4278 = vmatpush1.bf16.msra.mxu0 %v3779
    %4279 = vmatprep.subr.bf16.mxu0 %v3784
    %4280 = vmatpush1.bf16.msra.mxu0 %v3783
    %4281 = vmatprep.subr.bf16.mxu0 %v3788
    %4282 = vmatpush1.bf16.msra.mxu0 %v3787
    %4283 = vmatprep.subr.bf16.mxu0 %v3792
    %4284 = vmatpush1.bf16.msra.mxu0 %v3791
    %4285 = vmatprep.subr.bf16.mxu0 %v3796
    %4286 = vmatpush1.bf16.msra.mxu0 %v3795
    %4287 = vmatprep.subr.bf16.mxu0 %v3800
    %4288 = vmatpush1.bf16.msra.mxu0 %v3799
    %4289 = vmatprep.subr.bf16.mxu0 %v3804
    %4290 = vmatpush1.bf16.msra.mxu0 %v3803
    %4291 = vmatprep.subr.bf16.mxu0 %v3808
    %4292 = vmatpush1.bf16.msra.mxu0 %v3807
    %4293 = vmatprep.subr.bf16.mxu0 %v3812
    %4294 = vmatpush1.bf16.msra.mxu0 %v3811
    %4295 = vmatprep.mubr.bf16.mxu0 %v2698
    %4296 = vmatmul.mubr.bf16.gmra.mrb[0].mxu0 %v2697
    %v4297 = vpop.f32.mrb[0].mxu0
    %v4298 = vadd.f32 %v2966, %v4297
    %v4299 = vpop.f32.mrb[0].mxu0
    %v4300 = vadd.f32 %v2970, %v4299
    %v4301 = vpop.f32.mrb[0].mxu0
    %v4302 = vadd.f32 %v2966, %v4301
    %v4303 = vpop.f32.mrb[0].mxu0
    %v4304 = vadd.f32 %v2970, %v4303
    %4305 = vdwg.mxu0
    %4306 = vmatprep.subr.bf16.mxu0 %v3816
    %4307 = vmatpush1.bf16.msra.mxu0 %v3815
    %4308 = vmatprep.subr.bf16.mxu0 %v3820
    %4309 = vmatpush1.bf16.msra.mxu0 %v3819
    %4310 = vmatprep.subr.bf16.mxu0 %v3824
    %4311 = vmatpush1.bf16.msra.mxu0 %v3823
    %4312 = vmatprep.subr.bf16.mxu0 %v3828
    %4313 = vmatpush1.bf16.msra.mxu0 %v3827
    %4314 = vmatprep.subr.bf16.mxu0 %v3832
    %4315 = vmatpush1.bf16.msra.mxu0 %v3831
    %4316 = vmatprep.subr.bf16.mxu0 %v3836
    %4317 = vmatpush1.bf16.msra.mxu0 %v3835
    %4318 = vmatprep.subr.bf16.mxu0 %v3840
    %4319 = vmatpush1.bf16.msra.mxu0 %v3839
    %4320 = vmatprep.subr.bf16.mxu0 %v3844
    %4321 = vmatpush1.bf16.msra.mxu0 %v3843
    %4322 = vmatprep.subr.bf16.mxu0 %v3848
    %4323 = vmatpush1.bf16.msra.mxu0 %v3847
    %4324 = vmatprep.subr.bf16.mxu0 %v3852
    %4325 = vmatpush1.bf16.msra.mxu0 %v3851
    %4326 = vmatprep.subr.bf16.mxu0 %v3856
    %4327 = vmatpush1.bf16.msra.mxu0 %v3855
    %4328 = vmatprep.subr.bf16.mxu0 %v3860
    %4329 = vmatpush1.bf16.msra.mxu0 %v3859
    %4330 = vmatprep.subr.bf16.mxu0 %v3864
    %4331 = vmatpush1.bf16.msra.mxu0 %v3863
    %4332 = vmatprep.subr.bf16.mxu0 %v3868
    %4333 = vmatpush1.bf16.msra.mxu0 %v3867
    %4334 = vmatprep.subr.bf16.mxu0 %v3872
    %4335 = vmatpush1.bf16.msra.mxu0 %v3871
    %4336 = vmatprep.subr.bf16.mxu0 %v3876
    %4337 = vmatpush1.bf16.msra.mxu0 %v3875
    %4338 = vmatprep.mubr.bf16.mxu0 %v2700
    %4339 = vmatmul.mubr.bf16.gmra.mrb[0].mxu0 %v2699
    %v4340 = vpop.f32.mrb[0].mxu0
    %v4341 = vadd.f32 %v4298, %v4340
    %v4342 = vpop.f32.mrb[0].mxu0
    %v4343 = vadd.f32 %v4300, %v4342
    %v4344 = vpop.f32.mrb[0].mxu0
    %v4345 = vadd.f32 %v4302, %v4344
    %v4346 = vpop.f32.mrb[0].mxu0
    %v4347 = vadd.f32 %v4304, %v4346
    %4348 = vdwg.mxu0
    %4349 = vmatprep.subr.bf16.mxu0 %v3880
    %4350 = vmatpush1.bf16.msra.mxu0 %v3879
    %4351 = vmatprep.subr.bf16.mxu0 %v3884
    %4352 = vmatpush1.bf16.msra.mxu0 %v3883
    %4353 = vmatprep.subr.bf16.mxu0 %v3888
    %4354 = vmatpush1.bf16.msra.mxu0 %v3887
    %4355 = vmatprep.subr.bf16.mxu0 %v3892
    %4356 = vmatpush1.bf16.msra.mxu0 %v3891
    %4357 = vmatprep.subr.bf16.mxu0 %v3896
    %4358 = vmatpush1.bf16.msra.mxu0 %v3895
    %4359 = vmatprep.subr.bf16.mxu0 %v3900
    %4360 = vmatpush1.bf16.msra.mxu0 %v3899
    %4361 = vmatprep.subr.bf16.mxu0 %v3904
    %4362 = vmatpush1.bf16.msra.mxu0 %v3903
    %4363 = vmatprep.subr.bf16.mxu0 %v3908
    %4364 = vmatpush1.bf16.msra.mxu0 %v3907
    %4365 = vmatprep.subr.bf16.mxu0 %v3912
    %4366 = vmatpush1.bf16.msra.mxu0 %v3911
    %4367 = vmatprep.subr.bf16.mxu0 %v3916
    %4368 = vmatpush1.bf16.msra.mxu0 %v3915
    %4369 = vmatprep.subr.bf16.mxu0 %v3920
    %4370 = vmatpush1.bf16.msra.mxu0 %v3919
    %4371 = vmatprep.subr.bf16.mxu0 %v3924
    %4372 = vmatpush1.bf16.msra.mxu0 %v3923
    %4373 = vmatprep.subr.bf16.mxu0 %v3928
    %4374 = vmatpush1.bf16.msra.mxu0 %v3927
    %4375 = vmatprep.subr.bf16.mxu0 %v3932
    %4376 = vmatpush1.bf16.msra.mxu0 %v3931
    %4377 = vmatprep.subr.bf16.mxu0 %v3936
    %4378 = vmatpush1.bf16.msra.mxu0 %v3935
    %4379 = vmatprep.subr.bf16.mxu0 %v3940
    %4380 = vmatpush1.bf16.msra.mxu0 %v3939
    %4381 = vmatprep.mubr.bf16.mxu0 %v2702
    %4382 = vmatmul.mubr.bf16.gmra.mrb[0].mxu0 %v2701
    %v4383 = vpop.f32.mrb[0].mxu0
    %v4384 = vadd.f32 %v4341, %v4383
    %v4385 = vpop.f32.mrb[0].mxu0
    %v4386 = vadd.f32 %v4343, %v4385
    %v4387 = vpop.f32.mrb[0].mxu0
    %v4388 = vadd.f32 %v4345, %v4387
    %v4389 = vpop.f32.mrb[0].mxu0
    %v4390 = vadd.f32 %v4347, %v4389
    %4391 = vdwg.mxu0
    %4392 = vmatprep.subr.bf16.mxu0 %v3944
    %4393 = vmatpush1.bf16.msra.mxu0 %v3943
    %4394 = vmatprep.subr.bf16.mxu0 %v3948
    %4395 = vmatpush1.bf16.msra.mxu0 %v3947
    %4396 = vmatprep.subr.bf16.mxu0 %v3952
    %4397 = vmatpush1.bf16.msra.mxu0 %v3951
    %4398 = vmatprep.subr.bf16.mxu0 %v3956
    %4399 = vmatpush1.bf16.msra.mxu0 %v3955
    %4400 = vmatprep.subr.bf16.mxu0 %v3960
    %4401 = vmatpush1.bf16.msra.mxu0 %v3959
    %4402 = vmatprep.subr.bf16.mxu0 %v3964
    %4403 = vmatpush1.bf16.msra.mxu0 %v3963
    %4404 = vmatprep.subr.bf16.mxu0 %v3968
    %4405 = vmatpush1.bf16.msra.mxu0 %v3967
    %4406 = vmatprep.subr.bf16.mxu0 %v3972
    %4407 = vmatpush1.bf16.msra.mxu0 %v3971
    %4408 = vmatprep.subr.bf16.mxu0 %v3976
    %4409 = vmatpush1.bf16.msra.mxu0 %v3975
    %4410 = vmatprep.subr.bf16.mxu0 %v3980
    %4411 = vmatpush1.bf16.msra.mxu0 %v3979
    %4412 = vmatprep.subr.bf16.mxu0 %v3984
    %4413 = vmatpush1.bf16.msra.mxu0 %v3983
    %4414 = vmatprep.subr.bf16.mxu0 %v3988
    %4415 = vmatpush1.bf16.msra.mxu0 %v3987
    %4416 = vmatprep.subr.bf16.mxu0 %v3992
    %4417 = vmatpush1.bf16.msra.mxu0 %v3991
    %4418 = vmatprep.subr.bf16.mxu0 %v3996
    %4419 = vmatpush1.bf16.msra.mxu0 %v3995
    %4420 = vmatprep.subr.bf16.mxu0 %v4000
    %4421 = vmatpush1.bf16.msra.mxu0 %v3999
    %4422 = vmatprep.subr.bf16.mxu0 %v4004
    %4423 = vmatpush1.bf16.msra.mxu0 %v4003
    %4424 = vmatprep.mubr.bf16.mxu0 %v2704
    %4425 = vmatmul.mubr.bf16.gmra.mrb[0].mxu0 %v2703
    %v4426 = vpop.f32.mrb[0].mxu0
    %v4427 = vadd.f32 %v4384, %v4426
    %v4428 = vpop.f32.mrb[0].mxu0
    %v4429 = vadd.f32 %v4386, %v4428
    %v4430 = vpop.f32.mrb[0].mxu0
    %v4431 = vadd.f32 %v4388, %v4430
    %v4432 = vpop.f32.mrb[0].mxu0
    %v4433 = vadd.f32 %v4390, %v4432
    %4434 = vdwg.mxu0
    %4435 = vmatprep.subr.bf16.mxu0 %v3754
    %4436 = vmatpush1.bf16.msra.mxu0 %v3753
    %4437 = vmatprep.subr.bf16.mxu0 %v3758
    %4438 = vmatpush1.bf16.msra.mxu0 %v3757
    %4439 = vmatprep.subr.bf16.mxu0 %v3762
    %4440 = vmatpush1.bf16.msra.mxu0 %v3761
    %4441 = vmatprep.subr.bf16.mxu0 %v3766
    %4442 = vmatpush1.bf16.msra.mxu0 %v3765
    %4443 = vmatprep.subr.bf16.mxu0 %v3770
    %4444 = vmatpush1.bf16.msra.mxu0 %v3769
    %4445 = vmatprep.subr.bf16.mxu0 %v3774
    %4446 = vmatpush1.bf16.msra.mxu0 %v3773
    %4447 = vmatprep.subr.bf16.mxu0 %v3778
    %4448 = vmatpush1.bf16.msra.mxu0 %v3777
    %4449 = vmatprep.subr.bf16.mxu0 %v3782
    %4450 = vmatpush1.bf16.msra.mxu0 %v3781
    %4451 = vmatprep.subr.bf16.mxu0 %v3786
    %4452 = vmatpush1.bf16.msra.mxu0 %v3785
    %4453 = vmatprep.subr.bf16.mxu0 %v3790
    %4454 = vmatpush1.bf16.msra.mxu0 %v3789
    %4455 = vmatprep.subr.bf16.mxu0 %v3794
    %4456 = vmatpush1.bf16.msra.mxu0 %v3793
    %4457 = vmatprep.subr.bf16.mxu0 %v3798
    %4458 = vmatpush1.bf16.msra.mxu0 %v3797
    %4459 = vmatprep.subr.bf16.mxu0 %v3802
    %4460 = vmatpush1.bf16.msra.mxu0 %v3801
    %4461 = vmatprep.subr.bf16.mxu0 %v3806
    %4462 = vmatpush1.bf16.msra.mxu0 %v3805
    %4463 = vmatprep.subr.bf16.mxu0 %v3810
    %4464 = vmatpush1.bf16.msra.mxu0 %v3809
    %4465 = vmatprep.subr.bf16.mxu0 %v3814
    %4466 = vmatpush1.bf16.msra.mxu0 %v3813
    %4467 = vmatprep.mubr.bf16.mxu0 %v2698
    %4468 = vmatmul.mubr.bf16.gmra.mrb[0].mxu0 %v2697
    %v4469 = vpop.f32.mrb[0].mxu0
    %v4470 = vadd.f32 %v2974, %v4469
    %v4471 = vpop.f32.mrb[0].mxu0
    %v4472 = vadd.f32 %v2978, %v4471
    %v4473 = vpop.f32.mrb[0].mxu0
    %v4474 = vadd.f32 %v2974, %v4473
    %v4475 = vpop.f32.mrb[0].mxu0
    %v4476 = vadd.f32 %v2978, %v4475
    %4477 = vdwg.mxu0
    %4478 = vmatprep.subr.bf16.mxu0 %v3818
    %4479 = vmatpush1.bf16.msra.mxu0 %v3817
    %4480 = vmatprep.subr.bf16.mxu0 %v3822
    %4481 = vmatpush1.bf16.msra.mxu0 %v3821
    %4482 = vmatprep.subr.bf16.mxu0 %v3826
    %4483 = vmatpush1.bf16.msra.mxu0 %v3825
    %4484 = vmatprep.subr.bf16.mxu0 %v3830
    %4485 = vmatpush1.bf16.msra.mxu0 %v3829
    %4486 = vmatprep.subr.bf16.mxu0 %v3834
    %4487 = vmatpush1.bf16.msra.mxu0 %v3833
    %4488 = vmatprep.subr.bf16.mxu0 %v3838
    %4489 = vmatpush1.bf16.msra.mxu0 %v3837
    %4490 = vmatprep.subr.bf16.mxu0 %v3842
    %4491 = vmatpush1.bf16.msra.mxu0 %v3841
    %4492 = vmatprep.subr.bf16.mxu0 %v3846
    %4493 = vmatpush1.bf16.msra.mxu0 %v3845
    %4494 = vmatprep.subr.bf16.mxu0 %v3850
    %4495 = vmatpush1.bf16.msra.mxu0 %v3849
    %4496 = vmatprep.subr.bf16.mxu0 %v3854
    %4497 = vmatpush1.bf16.msra.mxu0 %v3853
    %4498 = vmatprep.subr.bf16.mxu0 %v3858
    %4499 = vmatpush1.bf16.msra.mxu0 %v3857
    %4500 = vmatprep.subr.bf16.mxu0 %v3862
    %4501 = vmatpush1.bf16.msra.mxu0 %v3861
    %4502 = vmatprep.subr.bf16.mxu0 %v3866
    %4503 = vmatpush1.bf16.msra.mxu0 %v3865
    %4504 = vmatprep.subr.bf16.mxu0 %v3870
    %4505 = vmatpush1.bf16.msra.mxu0 %v3869
    %4506 = vmatprep.subr.bf16.mxu0 %v3874
    %4507 = vmatpush1.bf16.msra.mxu0 %v3873
    %4508 = vmatprep.subr.bf16.mxu0 %v3878
    %4509 = vmatpush1.bf16.msra.mxu0 %v3877
    %4510 = vmatprep.mubr.bf16.mxu0 %v2700
    %4511 = vmatmul.mubr.bf16.gmra.mrb[0].mxu0 %v2699
    %v4512 = vpop.f32.mrb[0].mxu0
    %v4513 = vadd.f32 %v4470, %v4512
    %v4514 = vpop.f32.mrb[0].mxu0
    %v4515 = vadd.f32 %v4472, %v4514
    %v4516 = vpop.f32.mrb[0].mxu0
    %v4517 = vadd.f32 %v4474, %v4516
    %v4518 = vpop.f32.mrb[0].mxu0
    %v4519 = vadd.f32 %v4476, %v4518
    %4520 = vdwg.mxu0
    %4521 = vmatprep.subr.bf16.mxu0 %v3882
    %4522 = vmatpush1.bf16.msra.mxu0 %v3881
    %4523 = vmatprep.subr.bf16.mxu0 %v3886
    %4524 = vmatpush1.bf16.msra.mxu0 %v3885
    %4525 = vmatprep.subr.bf16.mxu0 %v3890
    %4526 = vmatpush1.bf16.msra.mxu0 %v3889
    %4527 = vmatprep.subr.bf16.mxu0 %v3894
    %4528 = vmatpush1.bf16.msra.mxu0 %v3893
    %4529 = vmatprep.subr.bf16.mxu0 %v3898
    %4530 = vmatpush1.bf16.msra.mxu0 %v3897
    %4531 = vmatprep.subr.bf16.mxu0 %v3902
    %4532 = vmatpush1.bf16.msra.mxu0 %v3901
    %4533 = vmatprep.subr.bf16.mxu0 %v3906
    %4534 = vmatpush1.bf16.msra.mxu0 %v3905
    %4535 = vmatprep.subr.bf16.mxu0 %v3910
    %4536 = vmatpush1.bf16.msra.mxu0 %v3909
    %4537 = vmatprep.subr.bf16.mxu0 %v3914
    %4538 = vmatpush1.bf16.msra.mxu0 %v3913
    %4539 = vmatprep.subr.bf16.mxu0 %v3918
    %4540 = vmatpush1.bf16.msra.mxu0 %v3917
    %4541 = vmatprep.subr.bf16.mxu0 %v3922
    %4542 = vmatpush1.bf16.msra.mxu0 %v3921
    %4543 = vmatprep.subr.bf16.mxu0 %v3926
    %4544 = vmatpush1.bf16.msra.mxu0 %v3925
    %4545 = vmatprep.subr.bf16.mxu0 %v3930
    %4546 = vmatpush1.bf16.msra.mxu0 %v3929
    %4547 = vmatprep.subr.bf16.mxu0 %v3934
    %4548 = vmatpush1.bf16.msra.mxu0 %v3933
    %4549 = vmatprep.subr.bf16.mxu0 %v3938
    %4550 = vmatpush1.bf16.msra.mxu0 %v3937
    %4551 = vmatprep.subr.bf16.mxu0 %v3942
    %4552 = vmatpush1.bf16.msra.mxu0 %v3941
    %4553 = vmatprep.mubr.bf16.mxu0 %v2702
    %4554 = vmatmul.mubr.bf16.gmra.mrb[0].mxu0 %v2701
    %v4555 = vpop.f32.mrb[0].mxu0
    %v4556 = vadd.f32 %v4513, %v4555
    %v4557 = vpop.f32.mrb[0].mxu0
    %v4558 = vadd.f32 %v4515, %v4557
    %v4559 = vpop.f32.mrb[0].mxu0
    %v4560 = vadd.f32 %v4517, %v4559
    %v4561 = vpop.f32.mrb[0].mxu0
    %v4562 = vadd.f32 %v4519, %v4561
    %4563 = vdwg.mxu0
    %4564 = vmatprep.subr.bf16.mxu0 %v3946
    %4565 = vmatpush1.bf16.msra.mxu0 %v3945
    %4566 = vmatprep.subr.bf16.mxu0 %v3950
    %4567 = vmatpush1.bf16.msra.mxu0 %v3949
    %4568 = vmatprep.subr.bf16.mxu0 %v3954
    %4569 = vmatpush1.bf16.msra.mxu0 %v3953
    %4570 = vmatprep.subr.bf16.mxu0 %v3958
    %4571 = vmatpush1.bf16.msra.mxu0 %v3957
    %4572 = vmatprep.subr.bf16.mxu0 %v3962
    %4573 = vmatpush1.bf16.msra.mxu0 %v3961
    %4574 = vmatprep.subr.bf16.mxu0 %v3966
    %4575 = vmatpush1.bf16.msra.mxu0 %v3965
    %4576 = vmatprep.subr.bf16.mxu0 %v3970
    %4577 = vmatpush1.bf16.msra.mxu0 %v3969
    %4578 = vmatprep.subr.bf16.mxu0 %v3974
    %4579 = vmatpush1.bf16.msra.mxu0 %v3973
    %4580 = vmatprep.subr.bf16.mxu0 %v3978
    %4581 = vmatpush1.bf16.msra.mxu0 %v3977
    %4582 = vmatprep.subr.bf16.mxu0 %v3982
    %4583 = vmatpush1.bf16.msra.mxu0 %v3981
    %4584 = vmatprep.subr.bf16.mxu0 %v3986
    %4585 = vmatpush1.bf16.msra.mxu0 %v3985
    %4586 = vmatprep.subr.bf16.mxu0 %v3990
    %4587 = vmatpush1.bf16.msra.mxu0 %v3989
    %4588 = vmatprep.subr.bf16.mxu0 %v3994
    %4589 = vmatpush1.bf16.msra.mxu0 %v3993
    %4590 = vmatprep.subr.bf16.mxu0 %v3998
    %4591 = vmatpush1.bf16.msra.mxu0 %v3997
    %4592 = vmatprep.subr.bf16.mxu0 %v4002
    %4593 = vmatpush1.bf16.msra.mxu0 %v4001
    %4594 = vmatprep.subr.bf16.mxu0 %v4006
    %4595 = vmatpush1.bf16.msra.mxu0 %v4005
    %4596 = vmatprep.mubr.bf16.mxu0 %v2704
    %4597 = vmatmul.mubr.bf16.gmra.mrb[0].mxu0 %v2703
    %v4598 = vpop.f32.mrb[0].mxu0
    %v4599 = vadd.f32 %v4556, %v4598
    %v4600 = vpop.f32.mrb[0].mxu0
    %v4601 = vadd.f32 %v4558, %v4600
    %v4602 = vpop.f32.mrb[0].mxu0
    %v4603 = vadd.f32 %v4560, %v4602
    %v4604 = vpop.f32.mrb[0].mxu0
    %v4605 = vadd.f32 %v4562, %v4604
    %4606 = vdwg.mxu0
    %v4607 = vpack.c.bf16 %v4431, %v4427
    %v4608 = vpack.c.bf16 %v4433, %v4429
    %v4609 = vpack.c.bf16 %v4603, %v4599
    %v4610 = vpack.c.bf16 %v4605, %v4601
    %v4611 = vtanh.bf16.pop %v4607
    %v4612 = vtanh.bf16.pop %v4608
    %v4613 = vtanh.bf16.pop %v4609
    %v4614 = vtanh.bf16.pop %v4610
    %v4615 = vld [vmem:[#allocation11] sm:$0xff]
    %v4616 = vld [vmem:[#allocation11 + $0x8] sm:$0xff]
    %v4617 = vld [vmem:[#allocation11 + $0x10] sm:$0xff]
    %v4618 = vld [vmem:[#allocation11 + $0x18] sm:$0xff]
    %v4619 = vld [vmem:[#allocation11 + $0x20] sm:$0xff]
    %v4620 = vld [vmem:[#allocation11 + $0x28] sm:$0xff]
    %v4621 = vld [vmem:[#allocation11 + $0x30] sm:$0xff]
    %v4622 = vld [vmem:[#allocation11 + $0x38] sm:$0xff]
    %v4623 = vld [vmem:[#allocation11 + $0x40] sm:$0xff]
    %v4624 = vld [vmem:[#allocation11 + $0x48] sm:$0xff]
    %v4625 = vld [vmem:[#allocation11 + $0x50] sm:$0xff]
    %v4626 = vld [vmem:[#allocation11 + $0x58] sm:$0xff]
    %v4627 = vld [vmem:[#allocation11 + $0x60] sm:$0xff]
    %v4628 = vld [vmem:[#allocation11 + $0x68] sm:$0xff]
    %v4629 = vld [vmem:[#allocation11 + $0x70] sm:$0xff]
    %v4630 = vld [vmem:[#allocation11 + $0x78] sm:$0xff]
    %v4631 = vld [vmem:[#allocation11 + $0x80] sm:$0xff]
    %v4632 = vld [vmem:[#allocation11 + $0x88] sm:$0xff]
    %v4633 = vld [vmem:[#allocation11 + $0x90] sm:$0xff]
    %v4634 = vld [vmem:[#allocation11 + $0x98] sm:$0xff]
    %v4635 = vld [vmem:[#allocation11 + $0xa0] sm:$0xff]
    %v4636 = vld [vmem:[#allocation11 + $0xa8] sm:$0xff]
    %v4637 = vld [vmem:[#allocation11 + $0xb0] sm:$0xff]
    %v4638 = vld [vmem:[#allocation11 + $0xb8] sm:$0xff]
    %v4639 = vld [vmem:[#allocation11 + $0xc0] sm:$0xff]
    %v4640 = vld [vmem:[#allocation11 + $0xc8] sm:$0xff]
    %v4641 = vld [vmem:[#allocation11 + $0xd0] sm:$0xff]
    %v4642 = vld [vmem:[#allocation11 + $0xd8] sm:$0xff]
    %v4643 = vld [vmem:[#allocation11 + $0xe0] sm:$0xff]
    %v4644 = vld [vmem:[#allocation11 + $0xe8] sm:$0xff]
    %v4645 = vld [vmem:[#allocation11 + $0xf0] sm:$0xff]
    %v4646 = vld [vmem:[#allocation11 + $0xf8] sm:$0xff]
    %v4647 = vld [vmem:[#allocation11 + $0x100] sm:$0xff]
    %v4648 = vld [vmem:[#allocation11 + $0x108] sm:$0xff]
    %v4649 = vld [vmem:[#allocation11 + $0x110] sm:$0xff]
    %v4650 = vld [vmem:[#allocation11 + $0x118] sm:$0xff]
    %v4651 = vld [vmem:[#allocation11 + $0x120] sm:$0xff]
    %v4652 = vld [vmem:[#allocation11 + $0x128] sm:$0xff]
    %v4653 = vld [vmem:[#allocation11 + $0x130] sm:$0xff]
    %v4654 = vld [vmem:[#allocation11 + $0x138] sm:$0xff]
    %v4655 = vld [vmem:[#allocation11 + $0x140] sm:$0xff]
    %v4656 = vld [vmem:[#allocation11 + $0x148] sm:$0xff]
    %v4657 = vld [vmem:[#allocation11 + $0x150] sm:$0xff]
    %v4658 = vld [vmem:[#allocation11 + $0x158] sm:$0xff]
    %v4659 = vld [vmem:[#allocation11 + $0x160] sm:$0xff]
    %v4660 = vld [vmem:[#allocation11 + $0x168] sm:$0xff]
    %v4661 = vld [vmem:[#allocation11 + $0x170] sm:$0xff]
    %v4662 = vld [vmem:[#allocation11 + $0x178] sm:$0xff]
    %v4663 = vld [vmem:[#allocation11 + $0x180] sm:$0xff]
    %v4664 = vld [vmem:[#allocation11 + $0x188] sm:$0xff]
    %v4665 = vld [vmem:[#allocation11 + $0x190] sm:$0xff]
    %v4666 = vld [vmem:[#allocation11 + $0x198] sm:$0xff]
    %v4667 = vld [vmem:[#allocation11 + $0x1a0] sm:$0xff]
    %v4668 = vld [vmem:[#allocation11 + $0x1a8] sm:$0xff]
    %v4669 = vld [vmem:[#allocation11 + $0x1b0] sm:$0xff]
    %v4670 = vld [vmem:[#allocation11 + $0x1b8] sm:$0xff]
    %v4671 = vld [vmem:[#allocation11 + $0x1c0] sm:$0xff]
    %v4672 = vld [vmem:[#allocation11 + $0x1c8] sm:$0xff]
    %v4673 = vld [vmem:[#allocation11 + $0x1d0] sm:$0xff]
    %v4674 = vld [vmem:[#allocation11 + $0x1d8] sm:$0xff]
    %v4675 = vld [vmem:[#allocation11 + $0x1e0] sm:$0xff]
    %v4676 = vld [vmem:[#allocation11 + $0x1e8] sm:$0xff]
    %v4677 = vld [vmem:[#allocation11 + $0x1f0] sm:$0xff]
    %v4678 = vld [vmem:[#allocation11 + $0x1f8] sm:$0xff]
    %v4679 = vld [vmem:[#allocation13] sm:$0x3]
    %v4681 = vlaneseq
    %v4682 = vshrl.u32 %v4681, 7
    %v4683 = vsub.s32 0, %v4682
    %v4684 = vrot.slane %v4679, %v4683
    %v4685 = vlaneseq
    %v4686 = vshrl.u32 %v4685, 7
    %v4687 = vsub.s32 1, %v4686
    %v4688 = vrot.slane %v4679, %v4687
    %v4755 = vunpack.c.l.b16 %v4615
    %v4756 = vunpack.c.h.b16 %v4615
    %v4757 = vunpack.c.l.b16 %v4616
    %v4758 = vunpack.c.h.b16 %v4616
    %v4759 = vunpack.c.l.b16 %v4617
    %v4760 = vunpack.c.h.b16 %v4617
    %v4761 = vunpack.c.l.b16 %v4618
    %v4762 = vunpack.c.h.b16 %v4618
    %v4763 = vunpack.c.l.b16 %v4619
    %v4764 = vunpack.c.h.b16 %v4619
    %v4765 = vunpack.c.l.b16 %v4620
    %v4766 = vunpack.c.h.b16 %v4620
    %v4767 = vunpack.c.l.b16 %v4621
    %v4768 = vunpack.c.h.b16 %v4621
    %v4769 = vunpack.c.l.b16 %v4622
    %v4770 = vunpack.c.h.b16 %v4622
    %v4771 = vunpack.c.l.b16 %v4623
    %v4772 = vunpack.c.h.b16 %v4623
    %v4773 = vunpack.c.l.b16 %v4624
    %v4774 = vunpack.c.h.b16 %v4624
    %v4775 = vunpack.c.l.b16 %v4625
    %v4776 = vunpack.c.h.b16 %v4625
    %v4777 = vunpack.c.l.b16 %v4626
    %v4778 = vunpack.c.h.b16 %v4626
    %v4779 = vunpack.c.l.b16 %v4627
    %v4780 = vunpack.c.h.b16 %v4627
    %v4781 = vunpack.c.l.b16 %v4628
    %v4782 = vunpack.c.h.b16 %v4628
    %v4783 = vunpack.c.l.b16 %v4629
    %v4784 = vunpack.c.h.b16 %v4629
    %v4785 = vunpack.c.l.b16 %v4630
    %v4786 = vunpack.c.h.b16 %v4630
    %v4787 = vunpack.c.l.b16 %v4631
    %v4788 = vunpack.c.h.b16 %v4631
    %v4789 = vunpack.c.l.b16 %v4632
    %v4790 = vunpack.c.h.b16 %v4632
    %v4791 = vunpack.c.l.b16 %v4633
    %v4792 = vunpack.c.h.b16 %v4633
    %v4793 = vunpack.c.l.b16 %v4634
    %v4794 = vunpack.c.h.b16 %v4634
    %v4795 = vunpack.c.l.b16 %v4635
    %v4796 = vunpack.c.h.b16 %v4635
    %v4797 = vunpack.c.l.b16 %v4636
    %v4798 = vunpack.c.h.b16 %v4636
    %v4799 = vunpack.c.l.b16 %v4637
    %v4800 = vunpack.c.h.b16 %v4637
    %v4801 = vunpack.c.l.b16 %v4638
    %v4802 = vunpack.c.h.b16 %v4638
    %v4803 = vunpack.c.l.b16 %v4639
    %v4804 = vunpack.c.h.b16 %v4639
    %v4805 = vunpack.c.l.b16 %v4640
    %v4806 = vunpack.c.h.b16 %v4640
    %v4807 = vunpack.c.l.b16 %v4641
    %v4808 = vunpack.c.h.b16 %v4641
    %v4809 = vunpack.c.l.b16 %v4642
    %v4810 = vunpack.c.h.b16 %v4642
    %v4811 = vunpack.c.l.b16 %v4643
    %v4812 = vunpack.c.h.b16 %v4643
    %v4813 = vunpack.c.l.b16 %v4644
    %v4814 = vunpack.c.h.b16 %v4644
    %v4815 = vunpack.c.l.b16 %v4645
    %v4816 = vunpack.c.h.b16 %v4645
    %v4817 = vunpack.c.l.b16 %v4646
    %v4818 = vunpack.c.h.b16 %v4646
    %v4819 = vunpack.c.l.b16 %v4647
    %v4820 = vunpack.c.h.b16 %v4647
    %v4821 = vunpack.c.l.b16 %v4648
    %v4822 = vunpack.c.h.b16 %v4648
    %v4823 = vunpack.c.l.b16 %v4649
    %v4824 = vunpack.c.h.b16 %v4649
    %v4825 = vunpack.c.l.b16 %v4650
    %v4826 = vunpack.c.h.b16 %v4650
    %v4827 = vunpack.c.l.b16 %v4651
    %v4828 = vunpack.c.h.b16 %v4651
    %v4829 = vunpack.c.l.b16 %v4652
    %v4830 = vunpack.c.h.b16 %v4652
    %v4831 = vunpack.c.l.b16 %v4653
    %v4832 = vunpack.c.h.b16 %v4653
    %v4833 = vunpack.c.l.b16 %v4654
    %v4834 = vunpack.c.h.b16 %v4654
    %v4835 = vunpack.c.l.b16 %v4655
    %v4836 = vunpack.c.h.b16 %v4655
    %v4837 = vunpack.c.l.b16 %v4656
    %v4838 = vunpack.c.h.b16 %v4656
    %v4839 = vunpack.c.l.b16 %v4657
    %v4840 = vunpack.c.h.b16 %v4657
    %v4841 = vunpack.c.l.b16 %v4658
    %v4842 = vunpack.c.h.b16 %v4658
    %v4843 = vunpack.c.l.b16 %v4659
    %v4844 = vunpack.c.h.b16 %v4659
    %v4845 = vunpack.c.l.b16 %v4660
    %v4846 = vunpack.c.h.b16 %v4660
    %v4847 = vunpack.c.l.b16 %v4661
    %v4848 = vunpack.c.h.b16 %v4661
    %v4849 = vunpack.c.l.b16 %v4662
    %v4850 = vunpack.c.h.b16 %v4662
    %v4851 = vunpack.c.l.b16 %v4663
    %v4852 = vunpack.c.h.b16 %v4663
    %v4853 = vunpack.c.l.b16 %v4664
    %v4854 = vunpack.c.h.b16 %v4664
    %v4855 = vunpack.c.l.b16 %v4665
    %v4856 = vunpack.c.h.b16 %v4665
    %v4857 = vunpack.c.l.b16 %v4666
    %v4858 = vunpack.c.h.b16 %v4666
    %v4859 = vunpack.c.l.b16 %v4667
    %v4860 = vunpack.c.h.b16 %v4667
    %v4861 = vunpack.c.l.b16 %v4668
    %v4862 = vunpack.c.h.b16 %v4668
    %v4863 = vunpack.c.l.b16 %v4669
    %v4864 = vunpack.c.h.b16 %v4669
    %v4865 = vunpack.c.l.b16 %v4670
    %v4866 = vunpack.c.h.b16 %v4670
    %v4867 = vunpack.c.l.b16 %v4671
    %v4868 = vunpack.c.h.b16 %v4671
    %v4869 = vunpack.c.l.b16 %v4672
    %v4870 = vunpack.c.h.b16 %v4672
    %v4871 = vunpack.c.l.b16 %v4673
    %v4872 = vunpack.c.h.b16 %v4673
    %v4873 = vunpack.c.l.b16 %v4674
    %v4874 = vunpack.c.h.b16 %v4674
    %v4875 = vunpack.c.l.b16 %v4675
    %v4876 = vunpack.c.h.b16 %v4675
    %v4877 = vunpack.c.l.b16 %v4676
    %v4878 = vunpack.c.h.b16 %v4676
    %v4879 = vunpack.c.l.b16 %v4677
    %v4880 = vunpack.c.h.b16 %v4677
    %v4881 = vunpack.c.l.b16 %v4678
    %v4882 = vunpack.c.h.b16 %v4678
    %v4883 = vpack.c.b16 %v4757, %v4755
    %v4884 = vpack.c.b16 %v4758, %v4756
    %v4885 = vpack.c.b16 %v4761, %v4759
    %v4886 = vpack.c.b16 %v4762, %v4760
    %v4887 = vpack.c.b16 %v4765, %v4763
    %v4888 = vpack.c.b16 %v4766, %v4764
    %v4889 = vpack.c.b16 %v4769, %v4767
    %v4890 = vpack.c.b16 %v4770, %v4768
    %v4891 = vpack.c.b16 %v4773, %v4771
    %v4892 = vpack.c.b16 %v4774, %v4772
    %v4893 = vpack.c.b16 %v4777, %v4775
    %v4894 = vpack.c.b16 %v4778, %v4776
    %v4895 = vpack.c.b16 %v4781, %v4779
    %v4896 = vpack.c.b16 %v4782, %v4780
    %v4897 = vpack.c.b16 %v4785, %v4783
    %v4898 = vpack.c.b16 %v4786, %v4784
    %v4899 = vpack.c.b16 %v4789, %v4787
    %v4900 = vpack.c.b16 %v4790, %v4788
    %v4901 = vpack.c.b16 %v4793, %v4791
    %v4902 = vpack.c.b16 %v4794, %v4792
    %v4903 = vpack.c.b16 %v4797, %v4795
    %v4904 = vpack.c.b16 %v4798, %v4796
    %v4905 = vpack.c.b16 %v4801, %v4799
    %v4906 = vpack.c.b16 %v4802, %v4800
    %v4907 = vpack.c.b16 %v4805, %v4803
    %v4908 = vpack.c.b16 %v4806, %v4804
    %v4909 = vpack.c.b16 %v4809, %v4807
    %v4910 = vpack.c.b16 %v4810, %v4808
    %v4911 = vpack.c.b16 %v4813, %v4811
    %v4912 = vpack.c.b16 %v4814, %v4812
    %v4913 = vpack.c.b16 %v4817, %v4815
    %v4914 = vpack.c.b16 %v4818, %v4816
    %v4915 = vpack.c.b16 %v4821, %v4819
    %v4916 = vpack.c.b16 %v4822, %v4820
    %v4917 = vpack.c.b16 %v4825, %v4823
    %v4918 = vpack.c.b16 %v4826, %v4824
    %v4919 = vpack.c.b16 %v4829, %v4827
    %v4920 = vpack.c.b16 %v4830, %v4828
    %v4921 = vpack.c.b16 %v4833, %v4831
    %v4922 = vpack.c.b16 %v4834, %v4832
    %v4923 = vpack.c.b16 %v4837, %v4835
    %v4924 = vpack.c.b16 %v4838, %v4836
    %v4925 = vpack.c.b16 %v4841, %v4839
    %v4926 = vpack.c.b16 %v4842, %v4840
    %v4927 = vpack.c.b16 %v4845, %v4843
    %v4928 = vpack.c.b16 %v4846, %v4844
    %v4929 = vpack.c.b16 %v4849, %v4847
    %v4930 = vpack.c.b16 %v4850, %v4848
    %v4931 = vpack.c.b16 %v4853, %v4851
    %v4932 = vpack.c.b16 %v4854, %v4852
    %v4933 = vpack.c.b16 %v4857, %v4855
    %v4934 = vpack.c.b16 %v4858, %v4856
    %v4935 = vpack.c.b16 %v4861, %v4859
    %v4936 = vpack.c.b16 %v4862, %v4860
    %v4937 = vpack.c.b16 %v4865, %v4863
    %v4938 = vpack.c.b16 %v4866, %v4864
    %v4939 = vpack.c.b16 %v4869, %v4867
    %v4940 = vpack.c.b16 %v4870, %v4868
    %v4941 = vpack.c.b16 %v4873, %v4871
    %v4942 = vpack.c.b16 %v4874, %v4872
    %v4943 = vpack.c.b16 %v4877, %v4875
    %v4944 = vpack.c.b16 %v4878, %v4876
    %v4945 = vpack.c.b16 %v4881, %v4879
    %v4946 = vpack.c.b16 %v4882, %v4880
    %5011 = vmatprep.subr.bf16.mxu0 %v4884
    %5012 = vmatpush1.bf16.msra.mxu0 %v4883
    %5013 = vmatprep.subr.bf16.mxu0 %v4886
    %5014 = vmatpush1.bf16.msra.mxu0 %v4885
    %5015 = vmatprep.subr.bf16.mxu0 %v4888
    %5016 = vmatpush1.bf16.msra.mxu0 %v4887
    %5017 = vmatprep.subr.bf16.mxu0 %v4890
    %5018 = vmatpush1.bf16.msra.mxu0 %v4889
    %5019 = vmatprep.subr.bf16.mxu0 %v4892
    %5020 = vmatpush1.bf16.msra.mxu0 %v4891
    %5021 = vmatprep.subr.bf16.mxu0 %v4894
    %5022 = vmatpush1.bf16.msra.mxu0 %v4893
    %5023 = vmatprep.subr.bf16.mxu0 %v4896
    %5024 = vmatpush1.bf16.msra.mxu0 %v4895
    %5025 = vmatprep.subr.bf16.mxu0 %v4898
    %5026 = vmatpush1.bf16.msra.mxu0 %v4897
    %5027 = vmatprep.subr.bf16.mxu0 %v4900
    %5028 = vmatpush1.bf16.msra.mxu0 %v4899
    %5029 = vmatprep.subr.bf16.mxu0 %v4902
    %5030 = vmatpush1.bf16.msra.mxu0 %v4901
    %5031 = vmatprep.subr.bf16.mxu0 %v4904
    %5032 = vmatpush1.bf16.msra.mxu0 %v4903
    %5033 = vmatprep.subr.bf16.mxu0 %v4906
    %5034 = vmatpush1.bf16.msra.mxu0 %v4905
    %5035 = vmatprep.subr.bf16.mxu0 %v4908
    %5036 = vmatpush1.bf16.msra.mxu0 %v4907
    %5037 = vmatprep.subr.bf16.mxu0 %v4910
    %5038 = vmatpush1.bf16.msra.mxu0 %v4909
    %5039 = vmatprep.subr.bf16.mxu0 %v4912
    %5040 = vmatpush1.bf16.msra.mxu0 %v4911
    %5041 = vmatprep.subr.bf16.mxu0 %v4914
    %5042 = vmatpush1.bf16.msra.mxu0 %v4913
    %5043 = vmatprep.mubr.bf16.mxu0 %v4612
    %5044 = vmatmul.mubr.bf16.gmra.mrb[0].mxu0 %v4611
    %v5045 = vpop.f32.mrb[0].mxu0
    %v5046 = vadd.f32 %v4684, %v5045
    %v5047 = vpop.f32.mrb[0].mxu0
    %v5048 = vadd.f32 %v4688, %v5047
    %v5049 = vpop.f32.mrb[0].mxu0
    %v5050 = vadd.f32 %v4684, %v5049
    %v5051 = vpop.f32.mrb[0].mxu0
    %v5052 = vadd.f32 %v4688, %v5051
    %5053 = vdwg.mxu0
    %5054 = vmatprep.subr.bf16.mxu0 %v4916
    %5055 = vmatpush1.bf16.msra.mxu0 %v4915
    %5056 = vmatprep.subr.bf16.mxu0 %v4918
    %5057 = vmatpush1.bf16.msra.mxu0 %v4917
    %5058 = vmatprep.subr.bf16.mxu0 %v4920
    %5059 = vmatpush1.bf16.msra.mxu0 %v4919
    %5060 = vmatprep.subr.bf16.mxu0 %v4922
    %5061 = vmatpush1.bf16.msra.mxu0 %v4921
    %5062 = vmatprep.subr.bf16.mxu0 %v4924
    %5063 = vmatpush1.bf16.msra.mxu0 %v4923
    %5064 = vmatprep.subr.bf16.mxu0 %v4926
    %5065 = vmatpush1.bf16.msra.mxu0 %v4925
    %5066 = vmatprep.subr.bf16.mxu0 %v4928
    %5067 = vmatpush1.bf16.msra.mxu0 %v4927
    %5068 = vmatprep.subr.bf16.mxu0 %v4930
    %5069 = vmatpush1.bf16.msra.mxu0 %v4929
    %5070 = vmatprep.subr.bf16.mxu0 %v4932
    %5071 = vmatpush1.bf16.msra.mxu0 %v4931
    %5072 = vmatprep.subr.bf16.mxu0 %v4934
    %5073 = vmatpush1.bf16.msra.mxu0 %v4933
    %5074 = vmatprep.subr.bf16.mxu0 %v4936
    %5075 = vmatpush1.bf16.msra.mxu0 %v4935
    %5076 = vmatprep.subr.bf16.mxu0 %v4938
    %5077 = vmatpush1.bf16.msra.mxu0 %v4937
    %5078 = vmatprep.subr.bf16.mxu0 %v4940
    %5079 = vmatpush1.bf16.msra.mxu0 %v4939
    %5080 = vmatprep.subr.bf16.mxu0 %v4942
    %5081 = vmatpush1.bf16.msra.mxu0 %v4941
    %5082 = vmatprep.subr.bf16.mxu0 %v4944
    %5083 = vmatpush1.bf16.msra.mxu0 %v4943
    %5084 = vmatprep.subr.bf16.mxu0 %v4946
    %5085 = vmatpush1.bf16.msra.mxu0 %v4945
    %5086 = vmatprep.mubr.bf16.mxu0 %v4614
    %5087 = vmatmul.mubr.bf16.gmra.mrb[0].mxu0 %v4613
    %v5088 = vpop.f32.mrb[0].mxu0
    %v5089 = vadd.f32 %v5046, %v5088
    %v5090 = vpop.f32.mrb[0].mxu0
    %v5091 = vadd.f32 %v5048, %v5090
    %v5092 = vpop.f32.mrb[0].mxu0
    %v5093 = vadd.f32 %v5050, %v5092
    %v5094 = vpop.f32.mrb[0].mxu0
    %v5095 = vadd.f32 %v5052, %v5094
    %5096 = vdwg.mxu0
    %v5097 = vpack.c.bf16 %v5093, %v5089
    %v5098 = vpack.c.bf16 %v5095, %v5091
    %v5099 = vtanh.bf16.pop %v5097
    %v5100 = vtanh.bf16.pop %v5098
    %v5101 = vld [vmem:[#allocation14] sm:$0xf]
    %v5102 = vld [vmem:[#allocation14 + $0x4] sm:$0xf]
    %v5103 = vld [vmem:[#allocation14 + $0x8] sm:$0xf]
    %v5104 = vld [vmem:[#allocation14 + $0xc] sm:$0xf]
    %v5105 = vld [vmem:[#allocation14 + $0x10] sm:$0xf]
    %v5106 = vld [vmem:[#allocation14 + $0x14] sm:$0xf]
    %v5107 = vld [vmem:[#allocation14 + $0x18] sm:$0xf]
    %v5108 = vld [vmem:[#allocation14 + $0x1c] sm:$0xf]
    %v5109 = vld [vmem:[#allocation14 + $0x20] sm:$0xf]
    %v5110 = vld [vmem:[#allocation14 + $0x24] sm:$0xf]
    %v5111 = vld [vmem:[#allocation14 + $0x28] sm:$0xf]
    %v5112 = vld [vmem:[#allocation14 + $0x2c] sm:$0xf]
    %v5113 = vld [vmem:[#allocation14 + $0x30] sm:$0xf]
    %v5114 = vld [vmem:[#allocation14 + $0x34] sm:$0xf]
    %v5115 = vld [vmem:[#allocation14 + $0x38] sm:$0xf]
    %v5116 = vld [vmem:[#allocation14 + $0x3c] sm:$0xf]
    %v5117 = vld [vmem:[#allocation14 + $0x40] sm:$0xf]
    %v5118 = vld [vmem:[#allocation14 + $0x44] sm:$0xf]
    %v5119 = vld [vmem:[#allocation14 + $0x48] sm:$0xf]
    %v5120 = vld [vmem:[#allocation14 + $0x4c] sm:$0xf]
    %v5121 = vld [vmem:[#allocation14 + $0x50] sm:$0xf]
    %v5122 = vld [vmem:[#allocation14 + $0x54] sm:$0xf]
    %v5123 = vld [vmem:[#allocation14 + $0x58] sm:$0xf]
    %v5124 = vld [vmem:[#allocation14 + $0x5c] sm:$0xf]
    %v5125 = vld [vmem:[#allocation14 + $0x60] sm:$0xf]
    %v5126 = vld [vmem:[#allocation14 + $0x64] sm:$0xf]
    %v5127 = vld [vmem:[#allocation14 + $0x68] sm:$0xf]
    %v5128 = vld [vmem:[#allocation14 + $0x6c] sm:$0xf]
    %v5129 = vld [vmem:[#allocation14 + $0x70] sm:$0xf]
    %v5130 = vld [vmem:[#allocation14 + $0x74] sm:$0xf]
    %v5131 = vld [vmem:[#allocation14 + $0x78] sm:$0xf]
    %v5132 = vld [vmem:[#allocation14 + $0x7c] sm:$0xf]
    %v5133 = vld [vmem:[#allocation16] sm:$0x1]
    %v5135 = vlaneseq
    %v5136 = vshrl.u32 %v5135, 7
    %v5137 = vsub.s32 0, %v5136
    %v5138 = vrot.slane %v5133, %v5137
    %v5172 = vunpack.c.l.b16 %v5101
    %v5173 = vunpack.c.l.b16 %v5102
    %v5174 = vunpack.c.l.b16 %v5103
    %v5175 = vunpack.c.l.b16 %v5104
    %v5176 = vunpack.c.l.b16 %v5105
    %v5177 = vunpack.c.l.b16 %v5106
    %v5178 = vunpack.c.l.b16 %v5107
    %v5179 = vunpack.c.l.b16 %v5108
    %v5180 = vunpack.c.l.b16 %v5109
    %v5181 = vunpack.c.l.b16 %v5110
    %v5182 = vunpack.c.l.b16 %v5111
    %v5183 = vunpack.c.l.b16 %v5112
    %v5184 = vunpack.c.l.b16 %v5113
    %v5185 = vunpack.c.l.b16 %v5114
    %v5186 = vunpack.c.l.b16 %v5115
    %v5187 = vunpack.c.l.b16 %v5116
    %v5188 = vunpack.c.l.b16 %v5117
    %v5189 = vunpack.c.l.b16 %v5118
    %v5190 = vunpack.c.l.b16 %v5119
    %v5191 = vunpack.c.l.b16 %v5120
    %v5192 = vunpack.c.l.b16 %v5121
    %v5193 = vunpack.c.l.b16 %v5122
    %v5194 = vunpack.c.l.b16 %v5123
    %v5195 = vunpack.c.l.b16 %v5124
    %v5196 = vunpack.c.l.b16 %v5125
    %v5197 = vunpack.c.l.b16 %v5126
    %v5198 = vunpack.c.l.b16 %v5127
    %v5199 = vunpack.c.l.b16 %v5128
    %v5200 = vunpack.c.l.b16 %v5129
    %v5201 = vunpack.c.l.b16 %v5130
    %v5202 = vunpack.c.l.b16 %v5131
    %v5203 = vunpack.c.l.b16 %v5132
    %v5204 = vpack.c.b16 %v5173, %v5172
    %v5205 = vpack.c.b16 %v5175, %v5174
    %v5206 = vpack.c.b16 %v5177, %v5176
    %v5207 = vpack.c.b16 %v5179, %v5178
    %v5208 = vpack.c.b16 %v5181, %v5180
    %v5209 = vpack.c.b16 %v5183, %v5182
    %v5210 = vpack.c.b16 %v5185, %v5184
    %v5211 = vpack.c.b16 %v5187, %v5186
    %v5212 = vpack.c.b16 %v5189, %v5188
    %v5213 = vpack.c.b16 %v5191, %v5190
    %v5214 = vpack.c.b16 %v5193, %v5192
    %v5215 = vpack.c.b16 %v5195, %v5194
    %v5216 = vpack.c.b16 %v5197, %v5196
    %v5217 = vpack.c.b16 %v5199, %v5198
    %v5218 = vpack.c.b16 %v5201, %v5200
    %v5219 = vpack.c.b16 %v5203, %v5202
    %5236 = vmatprep.subr.bf16.mxu0 0
    %5237 = vmatpush1.bf16.msra.mxu0 %v5204
    %5238 = vmatprep.subr.bf16.mxu0 0
    %5239 = vmatpush1.bf16.msra.mxu0 %v5205
    %5240 = vmatprep.subr.bf16.mxu0 0
    %5241 = vmatpush1.bf16.msra.mxu0 %v5206
    %5242 = vmatprep.subr.bf16.mxu0 0
    %5243 = vmatpush1.bf16.msra.mxu0 %v5207
    %5244 = vmatprep.subr.bf16.mxu0 0
    %5245 = vmatpush1.bf16.msra.mxu0 %v5208
    %5246 = vmatprep.subr.bf16.mxu0 0
    %5247 = vmatpush1.bf16.msra.mxu0 %v5209
    %5248 = vmatprep.subr.bf16.mxu0 0
    %5249 = vmatpush1.bf16.msra.mxu0 %v5210
    %5250 = vmatprep.subr.bf16.mxu0 0
    %5251 = vmatpush1.bf16.msra.mxu0 %v5211
    %5252 = vmatprep.subr.bf16.mxu0 0
    %5253 = vmatpush1.bf16.msra.mxu0 %v5212
    %5254 = vmatprep.subr.bf16.mxu0 0
    %5255 = vmatpush1.bf16.msra.mxu0 %v5213
    %5256 = vmatprep.subr.bf16.mxu0 0
    %5257 = vmatpush1.bf16.msra.mxu0 %v5214
    %5258 = vmatprep.subr.bf16.mxu0 0
    %5259 = vmatpush1.bf16.msra.mxu0 %v5215
    %5260 = vmatprep.subr.bf16.mxu0 0
    %5261 = vmatpush1.bf16.msra.mxu0 %v5216
    %5262 = vmatprep.subr.bf16.mxu0 0
    %5263 = vmatpush1.bf16.msra.mxu0 %v5217
    %5264 = vmatprep.subr.bf16.mxu0 0
    %5265 = vmatpush1.bf16.msra.mxu0 %v5218
    %5266 = vmatprep.subr.bf16.mxu0 0
    %5267 = vmatpush1.bf16.msra.mxu0 %v5219
    %5268 = vmatprep.mubr.bf16.mxu0 %v5100
    %5269 = vmatmul.mubr.bf16.gmra.mrb[0].mxu0 %v5099
    %v5270 = vpop.f32.mrb[0].mxu0
    %v5271 = vadd.f32 %v5138, %v5270
    %v5272 = vpop.f32.mrb[0].mxu0
    %v5273 = vpop.f32.mrb[0].mxu0
    %v5274 = vadd.f32 %v5138, %v5273
    %v5275 = vpop.f32.mrb[0].mxu0
    %5276 = vdwg.mxu0
    %v5277 = vpack.c.bf16 %v5274, %v5271
    %v5278 = vtanh.bf16.pop %v5277
    %v5279 = vld [vmem:[#allocation17] sm:$0xf]
    %v5280 = vld [vmem:[#allocation17 + $0x4] sm:$0xf]
    %v5281 = vld [vmem:[#allocation17 + $0x8] sm:$0xf]
    %v5282 = vld [vmem:[#allocation17 + $0xc] sm:$0xf]
    %v5283 = vld [vmem:[#allocation17 + $0x10] sm:$0xf]
    %v5284 = vld [vmem:[#allocation17 + $0x14] sm:$0xf]
    %v5285 = vld [vmem:[#allocation17 + $0x18] sm:$0xf]
    %v5286 = vld [vmem:[#allocation17 + $0x1c] sm:$0xf]
    %v5287 = vld [vmem:[#allocation17 + $0x20] sm:$0xf]
    %v5288 = vld [vmem:[#allocation17 + $0x24] sm:$0xf]
    %v5289 = vld [vmem:[#allocation17 + $0x28] sm:$0xf]
    %v5290 = vld [vmem:[#allocation17 + $0x2c] sm:$0xf]
    %v5291 = vld [vmem:[#allocation17 + $0x30] sm:$0xf]
    %v5292 = vld [vmem:[#allocation17 + $0x34] sm:$0xf]
    %v5293 = vld [vmem:[#allocation17 + $0x38] sm:$0xf]
    %v5294 = vld [vmem:[#allocation17 + $0x3c] sm:$0xf]
    %v5295 = vld [vmem:[#allocation19] sm:$0x1]
    %v5297 = vlaneseq
    %v5298 = vshrl.u32 %v5297, 7
    %v5299 = vsub.s32 0, %v5298
    %v5300 = vrot.slane %v5295, %v5299
    %v5318 = vunpack.c.l.b16 %v5279
    %v5319 = vunpack.c.l.b16 %v5280
    %v5320 = vunpack.c.l.b16 %v5281
    %v5321 = vunpack.c.l.b16 %v5282
    %v5322 = vunpack.c.l.b16 %v5283
    %v5323 = vunpack.c.l.b16 %v5284
    %v5324 = vunpack.c.l.b16 %v5285
    %v5325 = vunpack.c.l.b16 %v5286
    %v5326 = vunpack.c.l.b16 %v5287
    %v5327 = vunpack.c.l.b16 %v5288
    %v5328 = vunpack.c.l.b16 %v5289
    %v5329 = vunpack.c.l.b16 %v5290
    %v5330 = vunpack.c.l.b16 %v5291
    %v5331 = vunpack.c.l.b16 %v5292
    %v5332 = vunpack.c.l.b16 %v5293
    %v5333 = vunpack.c.l.b16 %v5294
    %v5334 = vpack.c.b16 %v5319, %v5318
    %v5335 = vpack.c.b16 %v5321, %v5320
    %v5336 = vpack.c.b16 %v5323, %v5322
    %v5337 = vpack.c.b16 %v5325, %v5324
    %v5338 = vpack.c.b16 %v5327, %v5326
    %v5339 = vpack.c.b16 %v5329, %v5328
    %v5340 = vpack.c.b16 %v5331, %v5330
    %v5341 = vpack.c.b16 %v5333, %v5332
    %5350 = vmatprep.subr.bf16.mxu0 0
    %5351 = vmatpush1.bf16.msra.mxu0 %v5334
    %5352 = vmatprep.subr.bf16.mxu0 0
    %5353 = vmatpush1.bf16.msra.mxu0 %v5335
    %5354 = vmatprep.subr.bf16.mxu0 0
    %5355 = vmatpush1.bf16.msra.mxu0 %v5336
    %5356 = vmatprep.subr.bf16.mxu0 0
    %5357 = vmatpush1.bf16.msra.mxu0 %v5337
    %5358 = vmatprep.subr.bf16.mxu0 0
    %5359 = vmatpush1.bf16.msra.mxu0 %v5338
    %5360 = vmatprep.subr.bf16.mxu0 0
    %5361 = vmatpush1.bf16.msra.mxu0 %v5339
    %5362 = vmatprep.subr.bf16.mxu0 0
    %5363 = vmatpush1.bf16.msra.mxu0 %v5340
    %5364 = vmatprep.subr.bf16.mxu0 0
    %5365 = vmatpush1.bf16.msra.mxu0 %v5341
    %5366 = vmatprep.subr.bf16.mxu0 0
    %5367 = vmatpush1.bf16.msra.mxu0 0
    %5368 = vmatprep.subr.bf16.mxu0 0
    %5369 = vmatpush1.bf16.msra.mxu0 0
    %5370 = vmatprep.subr.bf16.mxu0 0
    %5371 = vmatpush1.bf16.msra.mxu0 0
    %5372 = vmatprep.subr.bf16.mxu0 0
    %5373 = vmatpush1.bf16.msra.mxu0 0
    %5374 = vmatprep.subr.bf16.mxu0 0
    %5375 = vmatpush1.bf16.msra.mxu0 0
    %5376 = vmatprep.subr.bf16.mxu0 0
    %5377 = vmatpush1.bf16.msra.mxu0 0
    %5378 = vmatprep.subr.bf16.mxu0 0
    %5379 = vmatpush1.bf16.msra.mxu0 0
    %5380 = vmatprep.subr.bf16.mxu0 0
    %5381 = vmatpush1.bf16.msra.mxu0 0
    %5382 = vmatprep.mubr.bf16.mxu0 0
    %5383 = vmatmul.mubr.bf16.gmra.mrb[0].mxu0 %v5278
    %v5384 = vpop.f32.mrb[0].mxu0
    %v5385 = vadd.f32 %v5300, %v5384
    %v5386 = vpop.f32.mrb[0].mxu0
    %v5387 = vpop.f32.mrb[0].mxu0
    %v5388 = vadd.f32 %v5300, %v5387
    %v5389 = vpop.f32.mrb[0].mxu0
    %5390 = vdwg.mxu0
    %5391 = vst [vmem:[#allocation20] sm:$0xff] %v5385
    %5392 = vst [vmem:[#allocation20 + $0x8] sm:$0xff] %v5388
    // Predicated region
    $region90: #{tpu_custom_call.1} parent=1 // pred_check
      _
    $region91: #{tpu_custom_call.1} parent=1 // pred_check_branch
      %5394 = sbr.rel (0) target = $region93
    $region92: #{tpu_custom_call.1} parent=1 // pred_region
      %s5396 = ssub.s32 256, 256
      %5397 = vsyncadd [#allocation4], %s5396
      %s5398 = sshll.u32 [#allocation20], 4
      %s5399 = int_to_ptr.vmem [resolvable:$true] %s5398
      %5404 = dma.vmem_to_hbm [thread:$0]  %s5399, 256, %s11, [#allocation4], 128, 128, 8
    $region93: #{tpu_custom_call.1} parent=1 // pred_fallthru
      _
    // Predicated region
    $region94: #{tpu_custom_call.1} parent=1 // pred_check
      _
    $region95: #{tpu_custom_call.1} parent=1 // pred_check_branch
      %5406 = sbr.rel (0) target = $region97
    $region96: #{tpu_custom_call.1} parent=1 // pred_region
      %5407 = dma.done [#allocation4], 256
    $region97: #{tpu_custom_call.1} parent=1 // pred_fallthru
      _
    %5408 = vsyncpa [#allocation3], 1
    %5409 = vsyncpa [#allocation6], 1
    %5410 = vsyncpa [#allocation9], 1
    %5411 = vsyncpa [#allocation12], 1
    %5412 = vsyncpa [#allocation15], 1
    %5413 = vsyncpa [#allocation18], 1
    %5414 = vsyncpa [#allocation4], 1

</llo_original>
